<compile_context>
chip_gen: v6e
topology: v6e:2x2x1
jax: 0.10.0
libtpu: 0.0.40
codegen_flags: <defaults>
</compile_context>

<pallas_src>
import jax
import jax.numpy as jnp
import numpy as np
from jax import lax
from jax.experimental import pallas as pl
from jax.experimental.pallas import tpu as pltpu

# ---------------- model hyperparameters (small, consistent with the module) ----------
EMBED_DIM = 50        # embedding_dim = 50 (glove.6B.50d)
HIDDEN_DIM = 32       # hidden_dim (scaled down from 128 for the smoke test)
NUM_LAYERS = 2
OUTPUT_DIM = 2
VOCAB_SIZE = 20
BATCH = 2
SEQ_LEN = 8

# TODO(synk): dropout (between LSTM layers and before fc) is a no-op in eval mode;
# training-mode stochastic dropout is not implemented here.


# ------------------------------- fused Pallas kernel ---------------------------------
def fused_bilstm_kernel(q_ids_ref, s_ids_ref, emb_ref,
                        wih0_ref, whh0_ref, b0_ref,
                        wih1_ref, whh1_ref, b1_ref,
                        wfc_ref, bfc_ref, out_ref):
    """Whole forward pass in one kernel.

    q_ids_ref, s_ids_ref: (T, B) int32 token ids (time-major)
    emb_ref:              (V, E) embedding table
    wih{l}_ref:           (Din, 8H) = [W_ih_fwd^T | W_ih_bwd^T]
    whh{l}_ref:           (2H, 4H)  = [W_hh_fwd^T ; W_hh_bwd^T]  (block-diag operand)
    b{l}_ref:             (1, 8H)   = [b_ih_f+b_hh_f | b_ih_b+b_hh_b]
    wfc_ref:              (4H, O), bfc_ref: (1, O)
    out_ref:              (B, O)
    """
    T, B = q_ids_ref.shape
    NB = 2 * B                       # question and sentence streams stacked on batch
    V = emb_ref.shape[0]
    H = HIDDEN_DIM

    # ---- embedding lookup: one-hot matmul keeps the gather on the MXU ----------
    # time-major rows: row = t*NB + stream  (stream 0:B = question, B:2B = sentence)
    ids = jnp.concatenate([q_ids_ref[...], s_ids_ref[...]], axis=1)          # (T, NB)
    eq = lax.broadcasted_iota(jnp.int32, (T, NB, V), 2) == ids[:, :, None]   # (T, NB, V)
    onehot = jnp.where(eq, 1.0, 0.0).reshape(T * NB, V)
    x = jnp.dot(onehot, emb_ref[...],
                preferred_element_type=jnp.float32)                          # (T*NB, E)

    # Constant mask: fwd rows keep lanes 0:H, bwd rows keep lanes H:2H (block layout).
    row = lax.broadcasted_iota(jnp.int32, (2 * NB, 2 * H), 0)
    lane = lax.broadcasted_iota(jnp.int32, (2 * NB, 2 * H), 1)
    pad_mask = jnp.where((row < NB) == (lane < H), 1.0, 0.0)                 # (2NB, 2H)

    def bilstm_layer(x_flat, wih, whh_bd, bias):
        # x_flat: (T*NB, Din), time-major.  Hoisted input projection + bias: one wide
        # matmul for the whole sequence; fwd gates in lanes 0:4H, bwd gates in 4H:8H.
        gx = jnp.dot(x_flat, wih, preferred_element_type=jnp.float32) + bias  # (T*NB, 8H)
        gx = gx.reshape(T, NB, 8 * H)

        # Stacked state: rows 0:NB are forward, rows NB:2NB are backward.
        # hpad is the zero-padded block layout feeding the block-diag W_hh.
        hpad = jnp.zeros((2 * NB, 2 * H), jnp.float32)
        c = jnp.zeros((2 * NB, H), jnp.float32)
        outs_f = [None] * T
        outs_b = [None] * T
        for s in range(T):                       # fully unrolled (T is static)
            tb = T - 1 - s                       # backward time index (no array reversal)
            # Gate inputs for this step: static leading-axis indices of gx, off the
            # recurrent dependency chain (depend only on gx).
            g_in = jnp.concatenate([gx[s, :, 0:4 * H], gx[tb, :, 4 * H:8 * H]], axis=0)
            # Block-diagonal recurrent matmul: (2NB,2H)@(2H,4H) -> exactly the (8,128)
            # vreg of gates needed (fwd rows see W_hh_fwd, bwd rows see W_hh_bwd).
            g = g_in + jnp.dot(hpad, whh_bd, preferred_element_type=jnp.float32)
            # Full-vreg EUP passes, then slice (PyTorch gate order i, f, g, o).
            sg = jax.nn.sigmoid(g)
            tg = jnp.tanh(g)
            c = sg[:, H:2 * H] * c + sg[:, 0:H] * tg[:, 2 * H:3 * H]
            h = sg[:, 3 * H:4 * H] * jnp.tanh(c)                     # (2NB, H)
            hpad = jnp.concatenate([h, h], axis=1) * pad_mask        # re-embed block layout
            outs_f[s] = h[0:NB]
            outs_b[tb] = h[NB:]
        # Per-time combined (fwd | bwd) hidden state, lanes 0:H and H:2H.
        return [jnp.concatenate([outs_f[t], outs_b[t]], axis=1) for t in range(T)]

    # layer 0
    h0 = bilstm_layer(x, wih0_ref[...], whh0_ref[...], b0_ref[...])
    # inter-layer dropout is identity in eval mode
    x1 = jnp.concatenate(h0, axis=0)                      # (T*NB, 2H), time-major
    # layer 1
    h1 = bilstm_layer(x1, wih1_ref[...], whh1_ref[...], b1_ref[...])

    # ---- head: mean over time, concat(question, sentence), fc ------------------
    mean_h = sum(h1) * (1.0 / T)                                              # (NB, 2H)
    combined = jnp.concatenate([mean_h[:B], mean_h[B:]], axis=1)              # (B, 4H)
    out_ref[...] = (jnp.dot(combined, wfc_ref[...],
                            preferred_element_type=jnp.float32) + bfc_ref[...])


# ------------------------------- wrappers ---------------------------------------------
_VMEM = pl.BlockSpec(memory_space=pltpu.MemorySpace.VMEM)


def pack_params(params):
    """Pre-transpose / concatenate weights into the layouts the fused kernel expects."""
    def pack_layer(fwd, bwd):
        w_ih_f, w_hh_f, b_ih_f, b_hh_f = fwd
        w_ih_b, w_hh_b, b_ih_b, b_hh_b = bwd
        wih = jnp.concatenate([w_ih_f.T, w_ih_b.T], axis=1)      # (Din, 8H)
        whh = jnp.concatenate([w_hh_f.T, w_hh_b.T], axis=0)      # (2H, 4H) block-diag operand
        b = jnp.concatenate([b_ih_f + b_hh_f, b_ih_b + b_hh_b]).reshape(1, -1)
        return wih, whh, b

    (fwd0, bwd0), (fwd1, bwd1) = params["lstm"]
    wih0, whh0, bias0 = pack_layer(fwd0, bwd0)
    wih1, whh1, bias1 = pack_layer(fwd1, bwd1)
    return {
        "emb": params["embedding"],
        "wih0": wih0, "whh0": whh0, "b0": bias0,
        "wih1": wih1, "whh1": whh1, "b1": bias1,
        "wfc": params["fc_w"].T, "bfc": params["fc_b"].reshape(1, -1),
    }


@jax.jit
def bilstm_model_forward(question_ids, sentence_ids, packed):
    B = question_ids.shape[0]
    return pl.pallas_call(
        fused_bilstm_kernel,
        out_shape=jax.ShapeDtypeStruct((B, OUTPUT_DIM), jnp.float32),
        in_specs=[_VMEM] * 11,
        out_specs=_VMEM,
    )(question_ids.T, sentence_ids.T, packed["emb"],   # time-major ids (layout plumbing)
      packed["wih0"], packed["whh0"], packed["b0"],
      packed["wih1"], packed["whh1"], packed["b1"],
      packed["wfc"], packed["bfc"])


# ------------------------------- pure-JAX reference ------------------------------------
def _ref_lstm_dir(x_tm, w_ih, w_hh, b_ih, b_hh, H):
    _, B, _ = x_tm.shape

    def step(carry, x_t):
        h, c = carry
        gates = x_t @ w_ih.T + h @ w_hh.T + b_ih + b_hh
        i = jax.nn.sigmoid(gates[:, :H])
        f = jax.nn.sigmoid(gates[:, H:2 * H])
        g = jnp.tanh(gates[:, 2 * H:3 * H])
        o = jax.nn.sigmoid(gates[:, 3 * H:])
        c = f * c + i * g
        h = o * jnp.tanh(c)
        return (h, c), h

    init = (jnp.zeros((B, H), jnp.float32), jnp.zeros((B, H), jnp.float32))
    _, ys = lax.scan(step, init, x_tm)
    return ys


def _ref_forward(question_ids, sentence_ids, params):
    emb = params["embedding"]

    def stack(x_tm):
        h = x_tm
        for (fwd, bwd) in params["lstm"]:
            of = _ref_lstm_dir(h, *fwd, HIDDEN_DIM)
            ob = _ref_lstm_dir(h[::-1], *bwd, HIDDEN_DIM)[::-1]
            h = jnp.concatenate([of, ob], axis=-1)
        return h

    q = jnp.transpose(jnp.take(emb, question_ids, axis=0), (1, 0, 2))
    s = jnp.transpose(jnp.take(emb, sentence_ids, axis=0), (1, 0, 2))
    q_out = jnp.mean(stack(q), axis=0)
    s_out = jnp.mean(stack(s), axis=0)
    combined = jnp.concatenate([q_out, s_out], axis=1)
    return combined @ params["fc_w"].T + params["fc_b"]


# ------------------------------- parameter init -----------------------------------------
def init_params(key):
    keys = jax.random.split(key, 32)
    kidx = iter(range(32))

    def nxt():
        return keys[next(kidx)]

    # embedding matrix: row 0 is the padding row (zeros), like create_embedding_matrix
    emb = jax.random.normal(nxt(), (VOCAB_SIZE, EMBED_DIM), jnp.float32) * 0.1
    emb = emb.at[0].set(0.0)

    scale = 1.0 / np.sqrt(HIDDEN_DIM)
    lstm_params = []
    for layer in range(NUM_LAYERS):
        in_dim = EMBED_DIM if layer == 0 else 2 * HIDDEN_DIM
        dir_params = []
        for _direction in range(2):
            w_ih = jax.random.uniform(nxt(), (4 * HIDDEN_DIM, in_dim), jnp.float32,
                                      -scale, scale)
            w_hh = jax.random.uniform(nxt(), (4 * HIDDEN_DIM, HIDDEN_DIM), jnp.float32,
                                      -scale, scale)
            b_ih = jax.random.uniform(nxt(), (4 * HIDDEN_DIM,), jnp.float32, -scale, scale)
            b_hh = jax.random.uniform(nxt(), (4 * HIDDEN_DIM,), jnp.float32, -scale, scale)
            dir_params.append((w_ih, w_hh, b_ih, b_hh))
        lstm_params.append(tuple(dir_params))

    fc_scale = 1.0 / np.sqrt(4 * HIDDEN_DIM)
    fc_w = jax.random.uniform(nxt(), (OUTPUT_DIM, 4 * HIDDEN_DIM), jnp.float32,
                              -fc_scale, fc_scale)
    fc_b = jax.random.uniform(nxt(), (OUTPUT_DIM,), jnp.float32, -fc_scale, fc_scale)

    return {"embedding": emb, "lstm": lstm_params, "fc_w": fc_w, "fc_b": fc_b}


# ------------------------------------ main ----------------------------------------------
if __name__ == "__main__":
    key = jax.random.PRNGKey(0)
    k_param, k_q, k_s = jax.random.split(key, 3)

    params = init_params(k_param)
    question_ids = jax.random.randint(k_q, (BATCH, SEQ_LEN), 0, VOCAB_SIZE, jnp.int32)
    sentence_ids = jax.random.randint(k_s, (BATCH, SEQ_LEN), 0, VOCAB_SIZE, jnp.int32)

    packed = pack_params(params)                    # one-time weight repacking
    out = bilstm_model_forward(question_ids, sentence_ids, packed)
    out = jax.block_until_ready(out)

    ref = _ref_forward(question_ids, sentence_ids, params)
    np.testing.assert_allclose(np.asarray(out), np.asarray(ref), rtol=2e-4, atol=2e-4)
    assert out.shape == (BATCH, OUTPUT_DIM)

    print("KERNEL_OK")
</pallas_src>

<mosaic_0001>
module attributes {stable_mosaic.version = 11 : i64} {
  func.func @fused_bilstm_kernel(%arg0: memref<8x2xi32, #tpu.memory_space<vmem>>, %arg1: memref<8x2xi32, #tpu.memory_space<vmem>>, %arg2: memref<20x50xf32, #tpu.memory_space<vmem>>, %arg3: memref<50x256xf32, #tpu.memory_space<vmem>>, %arg4: memref<64x128xf32, #tpu.memory_space<vmem>>, %arg5: memref<1x256xf32, #tpu.memory_space<vmem>>, %arg6: memref<64x256xf32, #tpu.memory_space<vmem>>, %arg7: memref<64x128xf32, #tpu.memory_space<vmem>>, %arg8: memref<1x256xf32, #tpu.memory_space<vmem>>, %arg9: memref<128x2xf32, #tpu.memory_space<vmem>>, %arg10: memref<1x2xf32, #tpu.memory_space<vmem>>, %arg11: memref<2x2xf32, #tpu.memory_space<vmem>>) attributes {dimension_semantics = [], scalar_prefetch = 0 : i64, scratch_operands = 0 : i64, tpu.core_type = #tpu.core_type<tc>} {
    %c0 = arith.constant 0 : index
    %c0_0 = arith.constant 0 : index
    %0 = vector.load %arg0[%c0, %c0_0] : memref<8x2xi32, #tpu.memory_space<vmem>>, vector<8x2xi32>
    %c0_1 = arith.constant 0 : index
    %c0_2 = arith.constant 0 : index
    %1 = vector.load %arg1[%c0_1, %c0_2] : memref<8x2xi32, #tpu.memory_space<vmem>>, vector<8x2xi32>
    %2 = tpu.concatenate %0, %1 in 1 : vector<8x2xi32>, vector<8x2xi32> -> vector<8x4xi32>
    %3 = tpu.iota {dimensions = array<i32: 2>} : vector<8x4x20xi32>
    %4 = vector.shape_cast %2 : vector<8x4xi32> to vector<8x4x1xi32>
    %5 = vector.broadcast %4 : vector<8x4x1xi32> to vector<8x4x20xi32>
    %6 = arith.cmpi eq, %3, %5 : vector<8x4x20xi32>
    %cst = arith.constant 1.000000e+00 : f32
    %cst_3 = arith.constant 0.000000e+00 : f32
    %7 = vector.broadcast %cst : f32 to vector<8x4x20xf32>
    %8 = vector.broadcast %cst_3 : f32 to vector<8x4x20xf32>
    %9 = arith.select %6, %7, %8 : vector<8x4x20xi1>, vector<8x4x20xf32>
    %10 = vector.shape_cast %9 : vector<8x4x20xf32> to vector<32x20xf32>
    %c0_4 = arith.constant 0 : index
    %c0_5 = arith.constant 0 : index
    %11 = vector.load %arg2[%c0_4, %c0_5] : memref<20x50xf32, #tpu.memory_space<vmem>>, vector<20x50xf32>
    %cst_6 = arith.constant dense<0.000000e+00> : vector<32x50xf32>
    %12 = tpu.matmul %10, %11, %cst_6 {dimension_numbers = #tpu.dot_dimension_numbers<[1], [0], [0], [1], [0, 0, 1, 1], [], []>} : vector<32x20xf32>, vector<20x50xf32>, vector<32x50xf32> -> vector<32x50xf32>
    %13 = tpu.iota {dimensions = array<i32: 0>} : vector<8x64xi32>
    %14 = tpu.iota {dimensions = array<i32: 1>} : vector<8x64xi32>
    %c4_i32 = arith.constant 4 : i32
    %15 = vector.broadcast %c4_i32 : i32 to vector<8x64xi32>
    %16 = arith.cmpi slt, %13, %15 : vector<8x64xi32>
    %c32_i32 = arith.constant 32 : i32
    %17 = vector.broadcast %c32_i32 : i32 to vector<8x64xi32>
    %18 = arith.cmpi slt, %14, %17 : vector<8x64xi32>
    %19 = arith.xori %16, %18 : vector<8x64xi1>
    %cst_7 = arith.constant dense<true> : vector<8x64xi1>
    %20 = arith.xori %19, %cst_7 : vector<8x64xi1>
    %cst_8 = arith.constant 1.000000e+00 : f32
    %cst_9 = arith.constant 0.000000e+00 : f32
    %21 = vector.broadcast %cst_8 : f32 to vector<8x64xf32>
    %22 = vector.broadcast %cst_9 : f32 to vector<8x64xf32>
    %23 = arith.select %20, %21, %22 : vector<8x64xi1>, vector<8x64xf32>
    %c0_10 = arith.constant 0 : index
    %c0_11 = arith.constant 0 : index
    %24 = vector.load %arg3[%c0_10, %c0_11] : memref<50x256xf32, #tpu.memory_space<vmem>>, vector<50x256xf32>
    %c0_12 = arith.constant 0 : index
    %c0_13 = arith.constant 0 : index
    %25 = vector.load %arg4[%c0_12, %c0_13] : memref<64x128xf32, #tpu.memory_space<vmem>>, vector<64x128xf32>
    %c0_14 = arith.constant 0 : index
    %c0_15 = arith.constant 0 : index
    %26 = vector.load %arg5[%c0_14, %c0_15] : memref<1x256xf32, #tpu.memory_space<vmem>>, vector<1x256xf32>
    %cst_16 = arith.constant dense<0.000000e+00> : vector<32x256xf32>
    %27 = tpu.matmul %12, %24, %cst_16 {dimension_numbers = #tpu.dot_dimension_numbers<[1], [0], [0], [1], [0, 0, 1, 1], [], []>} : vector<32x50xf32>, vector<50x256xf32>, vector<32x256xf32> -> vector<32x256xf32>
    %28 = vector.broadcast %26 : vector<1x256xf32> to vector<32x256xf32>
    %29 = arith.addf %27, %28 : vector<32x256xf32>
    %30 = vector.shape_cast %29 : vector<32x256xf32> to vector<8x4x256xf32>
    %cst_17 = arith.constant 0.000000e+00 : f32
    %31 = vector.broadcast %cst_17 : f32 to vector<8x64xf32>
    %cst_18 = arith.constant 0.000000e+00 : f32
    %32 = vector.broadcast %cst_18 : f32 to vector<8x32xf32>
    %33 = vector.extract_strided_slice %30 {offsets = [0, 0, 0], sizes = [1, 4, 128], strides = [1, 1, 1]} : vector<8x4x256xf32> to vector<1x4x128xf32>
    %34 = vector.shape_cast %33 : vector<1x4x128xf32> to vector<4x128xf32>
    %35 = vector.extract_strided_slice %30 {offsets = [7, 0, 128], sizes = [1, 4, 128], strides = [1, 1, 1]} : vector<8x4x256xf32> to vector<1x4x128xf32>
    %36 = vector.shape_cast %35 : vector<1x4x128xf32> to vector<4x128xf32>
    %37 = tpu.concatenate %34, %36 in 0 : vector<4x128xf32>, vector<4x128xf32> -> vector<8x128xf32>
    %cst_19 = arith.constant dense<0.000000e+00> : vector<8x128xf32>
    %38 = tpu.matmul %31, %25, %cst_19 {dimension_numbers = #tpu.dot_dimension_numbers<[1], [0], [0], [1], [0, 0, 1, 1], [], []>} : vector<8x64xf32>, vector<64x128xf32>, vector<8x128xf32> -> vector<8x128xf32>
    %39 = arith.addf %37, %38 : vector<8x128xf32>
    %40 = arith.negf %39 : vector<8x128xf32>
    %41 = math.exp %40 : vector<8x128xf32>
    %cst_20 = arith.constant 1.000000e+00 : f32
    %42 = vector.broadcast %cst_20 : f32 to vector<8x128xf32>
    %43 = arith.addf %42, %41 : vector<8x128xf32>
    %44 = arith.divf %42, %43 : vector<8x128xf32>
    %45 = math.tanh %39 : vector<8x128xf32>
    %46 = vector.extract_strided_slice %44 {offsets = [0, 32], sizes = [8, 32], strides = [1, 1]} : vector<8x128xf32> to vector<8x32xf32>
    %47 = arith.mulf %46, %32 : vector<8x32xf32>
    %48 = vector.extract_strided_slice %44 {offsets = [0, 0], sizes = [8, 32], strides = [1, 1]} : vector<8x128xf32> to vector<8x32xf32>
    %49 = vector.extract_strided_slice %45 {offsets = [0, 64], sizes = [8, 32], strides = [1, 1]} : vector<8x128xf32> to vector<8x32xf32>
    %50 = arith.mulf %48, %49 : vector<8x32xf32>
    %51 = arith.addf %47, %50 : vector<8x32xf32>
    %52 = vector.extract_strided_slice %44 {offsets = [0, 96], sizes = [8, 32], strides = [1, 1]} : vector<8x128xf32> to vector<8x32xf32>
    %53 = math.tanh %51 : vector<8x32xf32>
    %54 = arith.mulf %52, %53 : vector<8x32xf32>
    %55 = tpu.concatenate %54, %54 in 1 : vector<8x32xf32>, vector<8x32xf32> -> vector<8x64xf32>
    %56 = arith.mulf %55, %23 : vector<8x64xf32>
    %57 = vector.extract_strided_slice %54 {offsets = [0, 0], sizes = [4, 32], strides = [1, 1]} : vector<8x32xf32> to vector<4x32xf32>
    %58 = vector.extract_strided_slice %54 {offsets = [4, 0], sizes = [4, 32], strides = [1, 1]} : vector<8x32xf32> to vector<4x32xf32>
    %59 = vector.extract_strided_slice %30 {offsets = [1, 0, 0], sizes = [1, 4, 128], strides = [1, 1, 1]} : vector<8x4x256xf32> to vector<1x4x128xf32>
    %60 = vector.shape_cast %59 : vector<1x4x128xf32> to vector<4x128xf32>
    %61 = vector.extract_strided_slice %30 {offsets = [6, 0, 128], sizes = [1, 4, 128], strides = [1, 1, 1]} : vector<8x4x256xf32> to vector<1x4x128xf32>
    %62 = vector.shape_cast %61 : vector<1x4x128xf32> to vector<4x128xf32>
    %63 = tpu.concatenate %60, %62 in 0 : vector<4x128xf32>, vector<4x128xf32> -> vector<8x128xf32>
    %cst_21 = arith.constant dense<0.000000e+00> : vector<8x128xf32>
    %64 = tpu.matmul %56, %25, %cst_21 {dimension_numbers = #tpu.dot_dimension_numbers<[1], [0], [0], [1], [0, 0, 1, 1], [], []>} : vector<8x64xf32>, vector<64x128xf32>, vector<8x128xf32> -> vector<8x128xf32>
    %65 = arith.addf %63, %64 : vector<8x128xf32>
    %66 = arith.negf %65 : vector<8x128xf32>
    %67 = math.exp %66 : vector<8x128xf32>
    %cst_22 = arith.constant 1.000000e+00 : f32
    %68 = vector.broadcast %cst_22 : f32 to vector<8x128xf32>
    %69 = arith.addf %68, %67 : vector<8x128xf32>
    %70 = arith.divf %68, %69 : vector<8x128xf32>
    %71 = math.tanh %65 : vector<8x128xf32>
    %72 = vector.extract_strided_slice %70 {offsets = [0, 32], sizes = [8, 32], strides = [1, 1]} : vector<8x128xf32> to vector<8x32xf32>
    %73 = arith.mulf %72, %51 : vector<8x32xf32>
    %74 = vector.extract_strided_slice %70 {offsets = [0, 0], sizes = [8, 32], strides = [1, 1]} : vector<8x128xf32> to vector<8x32xf32>
    %75 = vector.extract_strided_slice %71 {offsets = [0, 64], sizes = [8, 32], strides = [1, 1]} : vector<8x128xf32> to vector<8x32xf32>
    %76 = arith.mulf %74, %75 : vector<8x32xf32>
    %77 = arith.addf %73, %76 : vector<8x32xf32>
    %78 = vector.extract_strided_slice %70 {offsets = [0, 96], sizes = [8, 32], strides = [1, 1]} : vector<8x128xf32> to vector<8x32xf32>
    %79 = math.tanh %77 : vector<8x32xf32>
    %80 = arith.mulf %78, %79 : vector<8x32xf32>
    %81 = tpu.concatenate %80, %80 in 1 : vector<8x32xf32>, vector<8x32xf32> -> vector<8x64xf32>
    %82 = arith.mulf %81, %23 : vector<8x64xf32>
    %83 = vector.extract_strided_slice %80 {offsets = [0, 0], sizes = [4, 32], strides = [1, 1]} : vector<8x32xf32> to vector<4x32xf32>
    %84 = vector.extract_strided_slice %80 {offsets = [4, 0], sizes = [4, 32], strides = [1, 1]} : vector<8x32xf32> to vector<4x32xf32>
    %85 = vector.extract_strided_slice %30 {offsets = [2, 0, 0], sizes = [1, 4, 128], strides = [1, 1, 1]} : vector<8x4x256xf32> to vector<1x4x128xf32>
    %86 = vector.shape_cast %85 : vector<1x4x128xf32> to vector<4x128xf32>
    %87 = vector.extract_strided_slice %30 {offsets = [5, 0, 128], sizes = [1, 4, 128], strides = [1, 1, 1]} : vector<8x4x256xf32> to vector<1x4x128xf32>
    %88 = vector.shape_cast %87 : vector<1x4x128xf32> to vector<4x128xf32>
    %89 = tpu.concatenate %86, %88 in 0 : vector<4x128xf32>, vector<4x128xf32> -> vector<8x128xf32>
    %cst_23 = arith.constant dense<0.000000e+00> : vector<8x128xf32>
    %90 = tpu.matmul %82, %25, %cst_23 {dimension_numbers = #tpu.dot_dimension_numbers<[1], [0], [0], [1], [0, 0, 1, 1], [], []>} : vector<8x64xf32>, vector<64x128xf32>, vector<8x128xf32> -> vector<8x128xf32>
    %91 = arith.addf %89, %90 : vector<8x128xf32>
    %92 = arith.negf %91 : vector<8x128xf32>
    %93 = math.exp %92 : vector<8x128xf32>
    %cst_24 = arith.constant 1.000000e+00 : f32
    %94 = vector.broadcast %cst_24 : f32 to vector<8x128xf32>
    %95 = arith.addf %94, %93 : vector<8x128xf32>
    %96 = arith.divf %94, %95 : vector<8x128xf32>
    %97 = math.tanh %91 : vector<8x128xf32>
    %98 = vector.extract_strided_slice %96 {offsets = [0, 32], sizes = [8, 32], strides = [1, 1]} : vector<8x128xf32> to vector<8x32xf32>
    %99 = arith.mulf %98, %77 : vector<8x32xf32>
    %100 = vector.extract_strided_slice %96 {offsets = [0, 0], sizes = [8, 32], strides = [1, 1]} : vector<8x128xf32> to vector<8x32xf32>
    %101 = vector.extract_strided_slice %97 {offsets = [0, 64], sizes = [8, 32], strides = [1, 1]} : vector<8x128xf32> to vector<8x32xf32>
    %102 = arith.mulf %100, %101 : vector<8x32xf32>
    %103 = arith.addf %99, %102 : vector<8x32xf32>
    %104 = vector.extract_strided_slice %96 {offsets = [0, 96], sizes = [8, 32], strides = [1, 1]} : vector<8x128xf32> to vector<8x32xf32>
    %105 = math.tanh %103 : vector<8x32xf32>
    %106 = arith.mulf %104, %105 : vector<8x32xf32>
    %107 = tpu.concatenate %106, %106 in 1 : vector<8x32xf32>, vector<8x32xf32> -> vector<8x64xf32>
    %108 = arith.mulf %107, %23 : vector<8x64xf32>
    %109 = vector.extract_strided_slice %106 {offsets = [0, 0], sizes = [4, 32], strides = [1, 1]} : vector<8x32xf32> to vector<4x32xf32>
    %110 = vector.extract_strided_slice %106 {offsets = [4, 0], sizes = [4, 32], strides = [1, 1]} : vector<8x32xf32> to vector<4x32xf32>
    %111 = vector.extract_strided_slice %30 {offsets = [3, 0, 0], sizes = [1, 4, 128], strides = [1, 1, 1]} : vector<8x4x256xf32> to vector<1x4x128xf32>
    %112 = vector.shape_cast %111 : vector<1x4x128xf32> to vector<4x128xf32>
    %113 = vector.extract_strided_slice %30 {offsets = [4, 0, 128], sizes = [1, 4, 128], strides = [1, 1, 1]} : vector<8x4x256xf32> to vector<1x4x128xf32>
    %114 = vector.shape_cast %113 : vector<1x4x128xf32> to vector<4x128xf32>
    %115 = tpu.concatenate %112, %114 in 0 : vector<4x128xf32>, vector<4x128xf32> -> vector<8x128xf32>
    %cst_25 = arith.constant dense<0.000000e+00> : vector<8x128xf32>
    %116 = tpu.matmul %108, %25, %cst_25 {dimension_numbers = #tpu.dot_dimension_numbers<[1], [0], [0], [1], [0, 0, 1, 1], [], []>} : vector<8x64xf32>, vector<64x128xf32>, vector<8x128xf32> -> vector<8x128xf32>
    %117 = arith.addf %115, %116 : vector<8x128xf32>
    %118 = arith.negf %117 : vector<8x128xf32>
    %119 = math.exp %118 : vector<8x128xf32>
    %cst_26 = arith.constant 1.000000e+00 : f32
    %120 = vector.broadcast %cst_26 : f32 to vector<8x128xf32>
    %121 = arith.addf %120, %119 : vector<8x128xf32>
    %122 = arith.divf %120, %121 : vector<8x128xf32>
    %123 = math.tanh %117 : vector<8x128xf32>
    %124 = vector.extract_strided_slice %122 {offsets = [0, 32], sizes = [8, 32], strides = [1, 1]} : vector<8x128xf32> to vector<8x32xf32>
    %125 = arith.mulf %124, %103 : vector<8x32xf32>
    %126 = vector.extract_strided_slice %122 {offsets = [0, 0], sizes = [8, 32], strides = [1, 1]} : vector<8x128xf32> to vector<8x32xf32>
    %127 = vector.extract_strided_slice %123 {offsets = [0, 64], sizes = [8, 32], strides = [1, 1]} : vector<8x128xf32> to vector<8x32xf32>
    %128 = arith.mulf %126, %127 : vector<8x32xf32>
    %129 = arith.addf %125, %128 : vector<8x32xf32>
    %130 = vector.extract_strided_slice %122 {offsets = [0, 96], sizes = [8, 32], strides = [1, 1]} : vector<8x128xf32> to vector<8x32xf32>
    %131 = math.tanh %129 : vector<8x32xf32>
    %132 = arith.mulf %130, %131 : vector<8x32xf32>
    %133 = tpu.concatenate %132, %132 in 1 : vector<8x32xf32>, vector<8x32xf32> -> vector<8x64xf32>
    %134 = arith.mulf %133, %23 : vector<8x64xf32>
    %135 = vector.extract_strided_slice %132 {offsets = [0, 0], sizes = [4, 32], strides = [1, 1]} : vector<8x32xf32> to vector<4x32xf32>
    %136 = vector.extract_strided_slice %132 {offsets = [4, 0], sizes = [4, 32], strides = [1, 1]} : vector<8x32xf32> to vector<4x32xf32>
    %137 = vector.extract_strided_slice %30 {offsets = [4, 0, 0], sizes = [1, 4, 128], strides = [1, 1, 1]} : vector<8x4x256xf32> to vector<1x4x128xf32>
    %138 = vector.shape_cast %137 : vector<1x4x128xf32> to vector<4x128xf32>
    %139 = vector.extract_strided_slice %30 {offsets = [3, 0, 128], sizes = [1, 4, 128], strides = [1, 1, 1]} : vector<8x4x256xf32> to vector<1x4x128xf32>
    %140 = vector.shape_cast %139 : vector<1x4x128xf32> to vector<4x128xf32>
    %141 = tpu.concatenate %138, %140 in 0 : vector<4x128xf32>, vector<4x128xf32> -> vector<8x128xf32>
    %cst_27 = arith.constant dense<0.000000e+00> : vector<8x128xf32>
    %142 = tpu.matmul %134, %25, %cst_27 {dimension_numbers = #tpu.dot_dimension_numbers<[1], [0], [0], [1], [0, 0, 1, 1], [], []>} : vector<8x64xf32>, vector<64x128xf32>, vector<8x128xf32> -> vector<8x128xf32>
    %143 = arith.addf %141, %142 : vector<8x128xf32>
    %144 = arith.negf %143 : vector<8x128xf32>
    %145 = math.exp %144 : vector<8x128xf32>
    %cst_28 = arith.constant 1.000000e+00 : f32
    %146 = vector.broadcast %cst_28 : f32 to vector<8x128xf32>
    %147 = arith.addf %146, %145 : vector<8x128xf32>
    %148 = arith.divf %146, %147 : vector<8x128xf32>
    %149 = math.tanh %143 : vector<8x128xf32>
    %150 = vector.extract_strided_slice %148 {offsets = [0, 32], sizes = [8, 32], strides = [1, 1]} : vector<8x128xf32> to vector<8x32xf32>
    %151 = arith.mulf %150, %129 : vector<8x32xf32>
    %152 = vector.extract_strided_slice %148 {offsets = [0, 0], sizes = [8, 32], strides = [1, 1]} : vector<8x128xf32> to vector<8x32xf32>
    %153 = vector.extract_strided_slice %149 {offsets = [0, 64], sizes = [8, 32], strides = [1, 1]} : vector<8x128xf32> to vector<8x32xf32>
    %154 = arith.mulf %152, %153 : vector<8x32xf32>
    %155 = arith.addf %151, %154 : vector<8x32xf32>
    %156 = vector.extract_strided_slice %148 {offsets = [0, 96], sizes = [8, 32], strides = [1, 1]} : vector<8x128xf32> to vector<8x32xf32>
    %157 = math.tanh %155 : vector<8x32xf32>
    %158 = arith.mulf %156, %157 : vector<8x32xf32>
    %159 = tpu.concatenate %158, %158 in 1 : vector<8x32xf32>, vector<8x32xf32> -> vector<8x64xf32>
    %160 = arith.mulf %159, %23 : vector<8x64xf32>
    %161 = vector.extract_strided_slice %158 {offsets = [0, 0], sizes = [4, 32], strides = [1, 1]} : vector<8x32xf32> to vector<4x32xf32>
    %162 = vector.extract_strided_slice %158 {offsets = [4, 0], sizes = [4, 32], strides = [1, 1]} : vector<8x32xf32> to vector<4x32xf32>
    %163 = vector.extract_strided_slice %30 {offsets = [5, 0, 0], sizes = [1, 4, 128], strides = [1, 1, 1]} : vector<8x4x256xf32> to vector<1x4x128xf32>
    %164 = vector.shape_cast %163 : vector<1x4x128xf32> to vector<4x128xf32>
    %165 = vector.extract_strided_slice %30 {offsets = [2, 0, 128], sizes = [1, 4, 128], strides = [1, 1, 1]} : vector<8x4x256xf32> to vector<1x4x128xf32>
    %166 = vector.shape_cast %165 : vector<1x4x128xf32> to vector<4x128xf32>
    %167 = tpu.concatenate %164, %166 in 0 : vector<4x128xf32>, vector<4x128xf32> -> vector<8x128xf32>
    %cst_29 = arith.constant dense<0.000000e+00> : vector<8x128xf32>
    %168 = tpu.matmul %160, %25, %cst_29 {dimension_numbers = #tpu.dot_dimension_numbers<[1], [0], [0], [1], [0, 0, 1, 1], [], []>} : vector<8x64xf32>, vector<64x128xf32>, vector<8x128xf32> -> vector<8x128xf32>
    %169 = arith.addf %167, %168 : vector<8x128xf32>
    %170 = arith.negf %169 : vector<8x128xf32>
    %171 = math.exp %170 : vector<8x128xf32>
    %cst_30 = arith.constant 1.000000e+00 : f32
    %172 = vector.broadcast %cst_30 : f32 to vector<8x128xf32>
    %173 = arith.addf %172, %171 : vector<8x128xf32>
    %174 = arith.divf %172, %173 : vector<8x128xf32>
    %175 = math.tanh %169 : vector<8x128xf32>
    %176 = vector.extract_strided_slice %174 {offsets = [0, 32], sizes = [8, 32], strides = [1, 1]} : vector<8x128xf32> to vector<8x32xf32>
    %177 = arith.mulf %176, %155 : vector<8x32xf32>
    %178 = vector.extract_strided_slice %174 {offsets = [0, 0], sizes = [8, 32], strides = [1, 1]} : vector<8x128xf32> to vector<8x32xf32>
    %179 = vector.extract_strided_slice %175 {offsets = [0, 64], sizes = [8, 32], strides = [1, 1]} : vector<8x128xf32> to vector<8x32xf32>
    %180 = arith.mulf %178, %179 : vector<8x32xf32>
    %181 = arith.addf %177, %180 : vector<8x32xf32>
    %182 = vector.extract_strided_slice %174 {offsets = [0, 96], sizes = [8, 32], strides = [1, 1]} : vector<8x128xf32> to vector<8x32xf32>
    %183 = math.tanh %181 : vector<8x32xf32>
    %184 = arith.mulf %182, %183 : vector<8x32xf32>
    %185 = tpu.concatenate %184, %184 in 1 : vector<8x32xf32>, vector<8x32xf32> -> vector<8x64xf32>
    %186 = arith.mulf %185, %23 : vector<8x64xf32>
    %187 = vector.extract_strided_slice %184 {offsets = [0, 0], sizes = [4, 32], strides = [1, 1]} : vector<8x32xf32> to vector<4x32xf32>
    %188 = vector.extract_strided_slice %184 {offsets = [4, 0], sizes = [4, 32], strides = [1, 1]} : vector<8x32xf32> to vector<4x32xf32>
    %189 = vector.extract_strided_slice %30 {offsets = [6, 0, 0], sizes = [1, 4, 128], strides = [1, 1, 1]} : vector<8x4x256xf32> to vector<1x4x128xf32>
    %190 = vector.shape_cast %189 : vector<1x4x128xf32> to vector<4x128xf32>
    %191 = vector.extract_strided_slice %30 {offsets = [1, 0, 128], sizes = [1, 4, 128], strides = [1, 1, 1]} : vector<8x4x256xf32> to vector<1x4x128xf32>
    %192 = vector.shape_cast %191 : vector<1x4x128xf32> to vector<4x128xf32>
    %193 = tpu.concatenate %190, %192 in 0 : vector<4x128xf32>, vector<4x128xf32> -> vector<8x128xf32>
    %cst_31 = arith.constant dense<0.000000e+00> : vector<8x128xf32>
    %194 = tpu.matmul %186, %25, %cst_31 {dimension_numbers = #tpu.dot_dimension_numbers<[1], [0], [0], [1], [0, 0, 1, 1], [], []>} : vector<8x64xf32>, vector<64x128xf32>, vector<8x128xf32> -> vector<8x128xf32>
    %195 = arith.addf %193, %194 : vector<8x128xf32>
    %196 = arith.negf %195 : vector<8x128xf32>
    %197 = math.exp %196 : vector<8x128xf32>
    %cst_32 = arith.constant 1.000000e+00 : f32
    %198 = vector.broadcast %cst_32 : f32 to vector<8x128xf32>
    %199 = arith.addf %198, %197 : vector<8x128xf32>
    %200 = arith.divf %198, %199 : vector<8x128xf32>
    %201 = math.tanh %195 : vector<8x128xf32>
    %202 = vector.extract_strided_slice %200 {offsets = [0, 32], sizes = [8, 32], strides = [1, 1]} : vector<8x128xf32> to vector<8x32xf32>
    %203 = arith.mulf %202, %181 : vector<8x32xf32>
    %204 = vector.extract_strided_slice %200 {offsets = [0, 0], sizes = [8, 32], strides = [1, 1]} : vector<8x128xf32> to vector<8x32xf32>
    %205 = vector.extract_strided_slice %201 {offsets = [0, 64], sizes = [8, 32], strides = [1, 1]} : vector<8x128xf32> to vector<8x32xf32>
    %206 = arith.mulf %204, %205 : vector<8x32xf32>
    %207 = arith.addf %203, %206 : vector<8x32xf32>
    %208 = vector.extract_strided_slice %200 {offsets = [0, 96], sizes = [8, 32], strides = [1, 1]} : vector<8x128xf32> to vector<8x32xf32>
    %209 = math.tanh %207 : vector<8x32xf32>
    %210 = arith.mulf %208, %209 : vector<8x32xf32>
    %211 = tpu.concatenate %210, %210 in 1 : vector<8x32xf32>, vector<8x32xf32> -> vector<8x64xf32>
    %212 = arith.mulf %211, %23 : vector<8x64xf32>
    %213 = vector.extract_strided_slice %210 {offsets = [0, 0], sizes = [4, 32], strides = [1, 1]} : vector<8x32xf32> to vector<4x32xf32>
    %214 = vector.extract_strided_slice %210 {offsets = [4, 0], sizes = [4, 32], strides = [1, 1]} : vector<8x32xf32> to vector<4x32xf32>
    %215 = vector.extract_strided_slice %30 {offsets = [7, 0, 0], sizes = [1, 4, 128], strides = [1, 1, 1]} : vector<8x4x256xf32> to vector<1x4x128xf32>
    %216 = vector.shape_cast %215 : vector<1x4x128xf32> to vector<4x128xf32>
    %217 = vector.extract_strided_slice %30 {offsets = [0, 0, 128], sizes = [1, 4, 128], strides = [1, 1, 1]} : vector<8x4x256xf32> to vector<1x4x128xf32>
    %218 = vector.shape_cast %217 : vector<1x4x128xf32> to vector<4x128xf32>
    %219 = tpu.concatenate %216, %218 in 0 : vector<4x128xf32>, vector<4x128xf32> -> vector<8x128xf32>
    %cst_33 = arith.constant dense<0.000000e+00> : vector<8x128xf32>
    %220 = tpu.matmul %212, %25, %cst_33 {dimension_numbers = #tpu.dot_dimension_numbers<[1], [0], [0], [1], [0, 0, 1, 1], [], []>} : vector<8x64xf32>, vector<64x128xf32>, vector<8x128xf32> -> vector<8x128xf32>
    %221 = arith.addf %219, %220 : vector<8x128xf32>
    %222 = arith.negf %221 : vector<8x128xf32>
    %223 = math.exp %222 : vector<8x128xf32>
    %cst_34 = arith.constant 1.000000e+00 : f32
    %224 = vector.broadcast %cst_34 : f32 to vector<8x128xf32>
    %225 = arith.addf %224, %223 : vector<8x128xf32>
    %226 = arith.divf %224, %225 : vector<8x128xf32>
    %227 = math.tanh %221 : vector<8x128xf32>
    %228 = vector.extract_strided_slice %226 {offsets = [0, 32], sizes = [8, 32], strides = [1, 1]} : vector<8x128xf32> to vector<8x32xf32>
    %229 = arith.mulf %228, %207 : vector<8x32xf32>
    %230 = vector.extract_strided_slice %226 {offsets = [0, 0], sizes = [8, 32], strides = [1, 1]} : vector<8x128xf32> to vector<8x32xf32>
    %231 = vector.extract_strided_slice %227 {offsets = [0, 64], sizes = [8, 32], strides = [1, 1]} : vector<8x128xf32> to vector<8x32xf32>
    %232 = arith.mulf %230, %231 : vector<8x32xf32>
    %233 = arith.addf %229, %232 : vector<8x32xf32>
    %234 = vector.extract_strided_slice %226 {offsets = [0, 96], sizes = [8, 32], strides = [1, 1]} : vector<8x128xf32> to vector<8x32xf32>
    %235 = math.tanh %233 : vector<8x32xf32>
    %236 = arith.mulf %234, %235 : vector<8x32xf32>
    %237 = vector.extract_strided_slice %236 {offsets = [0, 0], sizes = [4, 32], strides = [1, 1]} : vector<8x32xf32> to vector<4x32xf32>
    %238 = vector.extract_strided_slice %236 {offsets = [4, 0], sizes = [4, 32], strides = [1, 1]} : vector<8x32xf32> to vector<4x32xf32>
    %239 = tpu.concatenate %57, %238 in 1 : vector<4x32xf32>, vector<4x32xf32> -> vector<4x64xf32>
    %240 = tpu.concatenate %83, %214 in 1 : vector<4x32xf32>, vector<4x32xf32> -> vector<4x64xf32>
    %241 = tpu.concatenate %109, %188 in 1 : vector<4x32xf32>, vector<4x32xf32> -> vector<4x64xf32>
    %242 = tpu.concatenate %135, %162 in 1 : vector<4x32xf32>, vector<4x32xf32> -> vector<4x64xf32>
    %243 = tpu.concatenate %161, %136 in 1 : vector<4x32xf32>, vector<4x32xf32> -> vector<4x64xf32>
    %244 = tpu.concatenate %187, %110 in 1 : vector<4x32xf32>, vector<4x32xf32> -> vector<4x64xf32>
    %245 = tpu.concatenate %213, %84 in 1 : vector<4x32xf32>, vector<4x32xf32> -> vector<4x64xf32>
    %246 = tpu.concatenate %237, %58 in 1 : vector<4x32xf32>, vector<4x32xf32> -> vector<4x64xf32>
    %247 = tpu.concatenate %239, %240, %241, %242, %243, %244, %245, %246 in 0 : vector<4x64xf32>, vector<4x64xf32>, vector<4x64xf32>, vector<4x64xf32>, vector<4x64xf32>, vector<4x64xf32>, vector<4x64xf32>, vector<4x64xf32> -> vector<32x64xf32>
    %c0_35 = arith.constant 0 : index
    %c0_36 = arith.constant 0 : index
    %248 = vector.load %arg6[%c0_35, %c0_36] : memref<64x256xf32, #tpu.memory_space<vmem>>, vector<64x256xf32>
    %c0_37 = arith.constant 0 : index
    %c0_38 = arith.constant 0 : index
    %249 = vector.load %arg7[%c0_37, %c0_38] : memref<64x128xf32, #tpu.memory_space<vmem>>, vector<64x128xf32>
    %c0_39 = arith.constant 0 : index
    %c0_40 = arith.constant 0 : index
    %250 = vector.load %arg8[%c0_39, %c0_40] : memref<1x256xf32, #tpu.memory_space<vmem>>, vector<1x256xf32>
    %cst_41 = arith.constant dense<0.000000e+00> : vector<32x256xf32>
    %251 = tpu.matmul %247, %248, %cst_41 {dimension_numbers = #tpu.dot_dimension_numbers<[1], [0], [0], [1], [0, 0, 1, 1], [], []>} : vector<32x64xf32>, vector<64x256xf32>, vector<32x256xf32> -> vector<32x256xf32>
    %252 = vector.broadcast %250 : vector<1x256xf32> to vector<32x256xf32>
    %253 = arith.addf %251, %252 : vector<32x256xf32>
    %254 = vector.shape_cast %253 : vector<32x256xf32> to vector<8x4x256xf32>
    %cst_42 = arith.constant 0.000000e+00 : f32
    %255 = vector.broadcast %cst_42 : f32 to vector<8x64xf32>
    %cst_43 = arith.constant 0.000000e+00 : f32
    %256 = vector.broadcast %cst_43 : f32 to vector<8x32xf32>
    %257 = vector.extract_strided_slice %254 {offsets = [0, 0, 0], sizes = [1, 4, 128], strides = [1, 1, 1]} : vector<8x4x256xf32> to vector<1x4x128xf32>
    %258 = vector.shape_cast %257 : vector<1x4x128xf32> to vector<4x128xf32>
    %259 = vector.extract_strided_slice %254 {offsets = [7, 0, 128], sizes = [1, 4, 128], strides = [1, 1, 1]} : vector<8x4x256xf32> to vector<1x4x128xf32>
    %260 = vector.shape_cast %259 : vector<1x4x128xf32> to vector<4x128xf32>
    %261 = tpu.concatenate %258, %260 in 0 : vector<4x128xf32>, vector<4x128xf32> -> vector<8x128xf32>
    %cst_44 = arith.constant dense<0.000000e+00> : vector<8x128xf32>
    %262 = tpu.matmul %255, %249, %cst_44 {dimension_numbers = #tpu.dot_dimension_numbers<[1], [0], [0], [1], [0, 0, 1, 1], [], []>} : vector<8x64xf32>, vector<64x128xf32>, vector<8x128xf32> -> vector<8x128xf32>
    %263 = arith.addf %261, %262 : vector<8x128xf32>
    %264 = arith.negf %263 : vector<8x128xf32>
    %265 = math.exp %264 : vector<8x128xf32>
    %cst_45 = arith.constant 1.000000e+00 : f32
    %266 = vector.broadcast %cst_45 : f32 to vector<8x128xf32>
    %267 = arith.addf %266, %265 : vector<8x128xf32>
    %268 = arith.divf %266, %267 : vector<8x128xf32>
    %269 = math.tanh %263 : vector<8x128xf32>
    %270 = vector.extract_strided_slice %268 {offsets = [0, 32], sizes = [8, 32], strides = [1, 1]} : vector<8x128xf32> to vector<8x32xf32>
    %271 = arith.mulf %270, %256 : vector<8x32xf32>
    %272 = vector.extract_strided_slice %268 {offsets = [0, 0], sizes = [8, 32], strides = [1, 1]} : vector<8x128xf32> to vector<8x32xf32>
    %273 = vector.extract_strided_slice %269 {offsets = [0, 64], sizes = [8, 32], strides = [1, 1]} : vector<8x128xf32> to vector<8x32xf32>
    %274 = arith.mulf %272, %273 : vector<8x32xf32>
    %275 = arith.addf %271, %274 : vector<8x32xf32>
    %276 = vector.extract_strided_slice %268 {offsets = [0, 96], sizes = [8, 32], strides = [1, 1]} : vector<8x128xf32> to vector<8x32xf32>
    %277 = math.tanh %275 : vector<8x32xf32>
    %278 = arith.mulf %276, %277 : vector<8x32xf32>
    %279 = tpu.concatenate %278, %278 in 1 : vector<8x32xf32>, vector<8x32xf32> -> vector<8x64xf32>
    %280 = arith.mulf %279, %23 : vector<8x64xf32>
    %281 = vector.extract_strided_slice %278 {offsets = [0, 0], sizes = [4, 32], strides = [1, 1]} : vector<8x32xf32> to vector<4x32xf32>
    %282 = vector.extract_strided_slice %278 {offsets = [4, 0], sizes = [4, 32], strides = [1, 1]} : vector<8x32xf32> to vector<4x32xf32>
    %283 = vector.extract_strided_slice %254 {offsets = [1, 0, 0], sizes = [1, 4, 128], strides = [1, 1, 1]} : vector<8x4x256xf32> to vector<1x4x128xf32>
    %284 = vector.shape_cast %283 : vector<1x4x128xf32> to vector<4x128xf32>
    %285 = vector.extract_strided_slice %254 {offsets = [6, 0, 128], sizes = [1, 4, 128], strides = [1, 1, 1]} : vector<8x4x256xf32> to vector<1x4x128xf32>
    %286 = vector.shape_cast %285 : vector<1x4x128xf32> to vector<4x128xf32>
    %287 = tpu.concatenate %284, %286 in 0 : vector<4x128xf32>, vector<4x128xf32> -> vector<8x128xf32>
    %cst_46 = arith.constant dense<0.000000e+00> : vector<8x128xf32>
    %288 = tpu.matmul %280, %249, %cst_46 {dimension_numbers = #tpu.dot_dimension_numbers<[1], [0], [0], [1], [0, 0, 1, 1], [], []>} : vector<8x64xf32>, vector<64x128xf32>, vector<8x128xf32> -> vector<8x128xf32>
    %289 = arith.addf %287, %288 : vector<8x128xf32>
    %290 = arith.negf %289 : vector<8x128xf32>
    %291 = math.exp %290 : vector<8x128xf32>
    %cst_47 = arith.constant 1.000000e+00 : f32
    %292 = vector.broadcast %cst_47 : f32 to vector<8x128xf32>
    %293 = arith.addf %292, %291 : vector<8x128xf32>
    %294 = arith.divf %292, %293 : vector<8x128xf32>
    %295 = math.tanh %289 : vector<8x128xf32>
    %296 = vector.extract_strided_slice %294 {offsets = [0, 32], sizes = [8, 32], strides = [1, 1]} : vector<8x128xf32> to vector<8x32xf32>
    %297 = arith.mulf %296, %275 : vector<8x32xf32>
    %298 = vector.extract_strided_slice %294 {offsets = [0, 0], sizes = [8, 32], strides = [1, 1]} : vector<8x128xf32> to vector<8x32xf32>
    %299 = vector.extract_strided_slice %295 {offsets = [0, 64], sizes = [8, 32], strides = [1, 1]} : vector<8x128xf32> to vector<8x32xf32>
    %300 = arith.mulf %298, %299 : vector<8x32xf32>
    %301 = arith.addf %297, %300 : vector<8x32xf32>
    %302 = vector.extract_strided_slice %294 {offsets = [0, 96], sizes = [8, 32], strides = [1, 1]} : vector<8x128xf32> to vector<8x32xf32>
    %303 = math.tanh %301 : vector<8x32xf32>
    %304 = arith.mulf %302, %303 : vector<8x32xf32>
    %305 = tpu.concatenate %304, %304 in 1 : vector<8x32xf32>, vector<8x32xf32> -> vector<8x64xf32>
    %306 = arith.mulf %305, %23 : vector<8x64xf32>
    %307 = vector.extract_strided_slice %304 {offsets = [0, 0], sizes = [4, 32], strides = [1, 1]} : vector<8x32xf32> to vector<4x32xf32>
    %308 = vector.extract_strided_slice %304 {offsets = [4, 0], sizes = [4, 32], strides = [1, 1]} : vector<8x32xf32> to vector<4x32xf32>
    %309 = vector.extract_strided_slice %254 {offsets = [2, 0, 0], sizes = [1, 4, 128], strides = [1, 1, 1]} : vector<8x4x256xf32> to vector<1x4x128xf32>
    %310 = vector.shape_cast %309 : vector<1x4x128xf32> to vector<4x128xf32>
    %311 = vector.extract_strided_slice %254 {offsets = [5, 0, 128], sizes = [1, 4, 128], strides = [1, 1, 1]} : vector<8x4x256xf32> to vector<1x4x128xf32>
    %312 = vector.shape_cast %311 : vector<1x4x128xf32> to vector<4x128xf32>
    %313 = tpu.concatenate %310, %312 in 0 : vector<4x128xf32>, vector<4x128xf32> -> vector<8x128xf32>
    %cst_48 = arith.constant dense<0.000000e+00> : vector<8x128xf32>
    %314 = tpu.matmul %306, %249, %cst_48 {dimension_numbers = #tpu.dot_dimension_numbers<[1], [0], [0], [1], [0, 0, 1, 1], [], []>} : vector<8x64xf32>, vector<64x128xf32>, vector<8x128xf32> -> vector<8x128xf32>
    %315 = arith.addf %313, %314 : vector<8x128xf32>
    %316 = arith.negf %315 : vector<8x128xf32>
    %317 = math.exp %316 : vector<8x128xf32>
    %cst_49 = arith.constant 1.000000e+00 : f32
    %318 = vector.broadcast %cst_49 : f32 to vector<8x128xf32>
    %319 = arith.addf %318, %317 : vector<8x128xf32>
    %320 = arith.divf %318, %319 : vector<8x128xf32>
    %321 = math.tanh %315 : vector<8x128xf32>
    %322 = vector.extract_strided_slice %320 {offsets = [0, 32], sizes = [8, 32], strides = [1, 1]} : vector<8x128xf32> to vector<8x32xf32>
    %323 = arith.mulf %322, %301 : vector<8x32xf32>
    %324 = vector.extract_strided_slice %320 {offsets = [0, 0], sizes = [8, 32], strides = [1, 1]} : vector<8x128xf32> to vector<8x32xf32>
    %325 = vector.extract_strided_slice %321 {offsets = [0, 64], sizes = [8, 32], strides = [1, 1]} : vector<8x128xf32> to vector<8x32xf32>
    %326 = arith.mulf %324, %325 : vector<8x32xf32>
    %327 = arith.addf %323, %326 : vector<8x32xf32>
    %328 = vector.extract_strided_slice %320 {offsets = [0, 96], sizes = [8, 32], strides = [1, 1]} : vector<8x128xf32> to vector<8x32xf32>
    %329 = math.tanh %327 : vector<8x32xf32>
    %330 = arith.mulf %328, %329 : vector<8x32xf32>
    %331 = tpu.concatenate %330, %330 in 1 : vector<8x32xf32>, vector<8x32xf32> -> vector<8x64xf32>
    %332 = arith.mulf %331, %23 : vector<8x64xf32>
    %333 = vector.extract_strided_slice %330 {offsets = [0, 0], sizes = [4, 32], strides = [1, 1]} : vector<8x32xf32> to vector<4x32xf32>
    %334 = vector.extract_strided_slice %330 {offsets = [4, 0], sizes = [4, 32], strides = [1, 1]} : vector<8x32xf32> to vector<4x32xf32>
    %335 = vector.extract_strided_slice %254 {offsets = [3, 0, 0], sizes = [1, 4, 128], strides = [1, 1, 1]} : vector<8x4x256xf32> to vector<1x4x128xf32>
    %336 = vector.shape_cast %335 : vector<1x4x128xf32> to vector<4x128xf32>
    %337 = vector.extract_strided_slice %254 {offsets = [4, 0, 128], sizes = [1, 4, 128], strides = [1, 1, 1]} : vector<8x4x256xf32> to vector<1x4x128xf32>
    %338 = vector.shape_cast %337 : vector<1x4x128xf32> to vector<4x128xf32>
    %339 = tpu.concatenate %336, %338 in 0 : vector<4x128xf32>, vector<4x128xf32> -> vector<8x128xf32>
    %cst_50 = arith.constant dense<0.000000e+00> : vector<8x128xf32>
    %340 = tpu.matmul %332, %249, %cst_50 {dimension_numbers = #tpu.dot_dimension_numbers<[1], [0], [0], [1], [0, 0, 1, 1], [], []>} : vector<8x64xf32>, vector<64x128xf32>, vector<8x128xf32> -> vector<8x128xf32>
    %341 = arith.addf %339, %340 : vector<8x128xf32>
    %342 = arith.negf %341 : vector<8x128xf32>
    %343 = math.exp %342 : vector<8x128xf32>
    %cst_51 = arith.constant 1.000000e+00 : f32
    %344 = vector.broadcast %cst_51 : f32 to vector<8x128xf32>
    %345 = arith.addf %344, %343 : vector<8x128xf32>
    %346 = arith.divf %344, %345 : vector<8x128xf32>
    %347 = math.tanh %341 : vector<8x128xf32>
    %348 = vector.extract_strided_slice %346 {offsets = [0, 32], sizes = [8, 32], strides = [1, 1]} : vector<8x128xf32> to vector<8x32xf32>
    %349 = arith.mulf %348, %327 : vector<8x32xf32>
    %350 = vector.extract_strided_slice %346 {offsets = [0, 0], sizes = [8, 32], strides = [1, 1]} : vector<8x128xf32> to vector<8x32xf32>
    %351 = vector.extract_strided_slice %347 {offsets = [0, 64], sizes = [8, 32], strides = [1, 1]} : vector<8x128xf32> to vector<8x32xf32>
    %352 = arith.mulf %350, %351 : vector<8x32xf32>
    %353 = arith.addf %349, %352 : vector<8x32xf32>
    %354 = vector.extract_strided_slice %346 {offsets = [0, 96], sizes = [8, 32], strides = [1, 1]} : vector<8x128xf32> to vector<8x32xf32>
    %355 = math.tanh %353 : vector<8x32xf32>
    %356 = arith.mulf %354, %355 : vector<8x32xf32>
    %357 = tpu.concatenate %356, %356 in 1 : vector<8x32xf32>, vector<8x32xf32> -> vector<8x64xf32>
    %358 = arith.mulf %357, %23 : vector<8x64xf32>
    %359 = vector.extract_strided_slice %356 {offsets = [0, 0], sizes = [4, 32], strides = [1, 1]} : vector<8x32xf32> to vector<4x32xf32>
    %360 = vector.extract_strided_slice %356 {offsets = [4, 0], sizes = [4, 32], strides = [1, 1]} : vector<8x32xf32> to vector<4x32xf32>
    %361 = vector.extract_strided_slice %254 {offsets = [4, 0, 0], sizes = [1, 4, 128], strides = [1, 1, 1]} : vector<8x4x256xf32> to vector<1x4x128xf32>
    %362 = vector.shape_cast %361 : vector<1x4x128xf32> to vector<4x128xf32>
    %363 = vector.extract_strided_slice %254 {offsets = [3, 0, 128], sizes = [1, 4, 128], strides = [1, 1, 1]} : vector<8x4x256xf32> to vector<1x4x128xf32>
    %364 = vector.shape_cast %363 : vector<1x4x128xf32> to vector<4x128xf32>
    %365 = tpu.concatenate %362, %364 in 0 : vector<4x128xf32>, vector<4x128xf32> -> vector<8x128xf32>
    %cst_52 = arith.constant dense<0.000000e+00> : vector<8x128xf32>
    %366 = tpu.matmul %358, %249, %cst_52 {dimension_numbers = #tpu.dot_dimension_numbers<[1], [0], [0], [1], [0, 0, 1, 1], [], []>} : vector<8x64xf32>, vector<64x128xf32>, vector<8x128xf32> -> vector<8x128xf32>
    %367 = arith.addf %365, %366 : vector<8x128xf32>
    %368 = arith.negf %367 : vector<8x128xf32>
    %369 = math.exp %368 : vector<8x128xf32>
    %cst_53 = arith.constant 1.000000e+00 : f32
    %370 = vector.broadcast %cst_53 : f32 to vector<8x128xf32>
    %371 = arith.addf %370, %369 : vector<8x128xf32>
    %372 = arith.divf %370, %371 : vector<8x128xf32>
    %373 = math.tanh %367 : vector<8x128xf32>
    %374 = vector.extract_strided_slice %372 {offsets = [0, 32], sizes = [8, 32], strides = [1, 1]} : vector<8x128xf32> to vector<8x32xf32>
    %375 = arith.mulf %374, %353 : vector<8x32xf32>
    %376 = vector.extract_strided_slice %372 {offsets = [0, 0], sizes = [8, 32], strides = [1, 1]} : vector<8x128xf32> to vector<8x32xf32>
    %377 = vector.extract_strided_slice %373 {offsets = [0, 64], sizes = [8, 32], strides = [1, 1]} : vector<8x128xf32> to vector<8x32xf32>
    %378 = arith.mulf %376, %377 : vector<8x32xf32>
    %379 = arith.addf %375, %378 : vector<8x32xf32>
    %380 = vector.extract_strided_slice %372 {offsets = [0, 96], sizes = [8, 32], strides = [1, 1]} : vector<8x128xf32> to vector<8x32xf32>
    %381 = math.tanh %379 : vector<8x32xf32>
    %382 = arith.mulf %380, %381 : vector<8x32xf32>
    %383 = tpu.concatenate %382, %382 in 1 : vector<8x32xf32>, vector<8x32xf32> -> vector<8x64xf32>
    %384 = arith.mulf %383, %23 : vector<8x64xf32>
    %385 = vector.extract_strided_slice %382 {offsets = [0, 0], sizes = [4, 32], strides = [1, 1]} : vector<8x32xf32> to vector<4x32xf32>
    %386 = vector.extract_strided_slice %382 {offsets = [4, 0], sizes = [4, 32], strides = [1, 1]} : vector<8x32xf32> to vector<4x32xf32>
    %387 = vector.extract_strided_slice %254 {offsets = [5, 0, 0], sizes = [1, 4, 128], strides = [1, 1, 1]} : vector<8x4x256xf32> to vector<1x4x128xf32>
    %388 = vector.shape_cast %387 : vector<1x4x128xf32> to vector<4x128xf32>
    %389 = vector.extract_strided_slice %254 {offsets = [2, 0, 128], sizes = [1, 4, 128], strides = [1, 1, 1]} : vector<8x4x256xf32> to vector<1x4x128xf32>
    %390 = vector.shape_cast %389 : vector<1x4x128xf32> to vector<4x128xf32>
    %391 = tpu.concatenate %388, %390 in 0 : vector<4x128xf32>, vector<4x128xf32> -> vector<8x128xf32>
    %cst_54 = arith.constant dense<0.000000e+00> : vector<8x128xf32>
    %392 = tpu.matmul %384, %249, %cst_54 {dimension_numbers = #tpu.dot_dimension_numbers<[1], [0], [0], [1], [0, 0, 1, 1], [], []>} : vector<8x64xf32>, vector<64x128xf32>, vector<8x128xf32> -> vector<8x128xf32>
    %393 = arith.addf %391, %392 : vector<8x128xf32>
    %394 = arith.negf %393 : vector<8x128xf32>
    %395 = math.exp %394 : vector<8x128xf32>
    %cst_55 = arith.constant 1.000000e+00 : f32
    %396 = vector.broadcast %cst_55 : f32 to vector<8x128xf32>
    %397 = arith.addf %396, %395 : vector<8x128xf32>
    %398 = arith.divf %396, %397 : vector<8x128xf32>
    %399 = math.tanh %393 : vector<8x128xf32>
    %400 = vector.extract_strided_slice %398 {offsets = [0, 32], sizes = [8, 32], strides = [1, 1]} : vector<8x128xf32> to vector<8x32xf32>
    %401 = arith.mulf %400, %379 : vector<8x32xf32>
    %402 = vector.extract_strided_slice %398 {offsets = [0, 0], sizes = [8, 32], strides = [1, 1]} : vector<8x128xf32> to vector<8x32xf32>
    %403 = vector.extract_strided_slice %399 {offsets = [0, 64], sizes = [8, 32], strides = [1, 1]} : vector<8x128xf32> to vector<8x32xf32>
    %404 = arith.mulf %402, %403 : vector<8x32xf32>
    %405 = arith.addf %401, %404 : vector<8x32xf32>
    %406 = vector.extract_strided_slice %398 {offsets = [0, 96], sizes = [8, 32], strides = [1, 1]} : vector<8x128xf32> to vector<8x32xf32>
    %407 = math.tanh %405 : vector<8x32xf32>
    %408 = arith.mulf %406, %407 : vector<8x32xf32>
    %409 = tpu.concatenate %408, %408 in 1 : vector<8x32xf32>, vector<8x32xf32> -> vector<8x64xf32>
    %410 = arith.mulf %409, %23 : vector<8x64xf32>
    %411 = vector.extract_strided_slice %408 {offsets = [0, 0], sizes = [4, 32], strides = [1, 1]} : vector<8x32xf32> to vector<4x32xf32>
    %412 = vector.extract_strided_slice %408 {offsets = [4, 0], sizes = [4, 32], strides = [1, 1]} : vector<8x32xf32> to vector<4x32xf32>
    %413 = vector.extract_strided_slice %254 {offsets = [6, 0, 0], sizes = [1, 4, 128], strides = [1, 1, 1]} : vector<8x4x256xf32> to vector<1x4x128xf32>
    %414 = vector.shape_cast %413 : vector<1x4x128xf32> to vector<4x128xf32>
    %415 = vector.extract_strided_slice %254 {offsets = [1, 0, 128], sizes = [1, 4, 128], strides = [1, 1, 1]} : vector<8x4x256xf32> to vector<1x4x128xf32>
    %416 = vector.shape_cast %415 : vector<1x4x128xf32> to vector<4x128xf32>
    %417 = tpu.concatenate %414, %416 in 0 : vector<4x128xf32>, vector<4x128xf32> -> vector<8x128xf32>
    %cst_56 = arith.constant dense<0.000000e+00> : vector<8x128xf32>
    %418 = tpu.matmul %410, %249, %cst_56 {dimension_numbers = #tpu.dot_dimension_numbers<[1], [0], [0], [1], [0, 0, 1, 1], [], []>} : vector<8x64xf32>, vector<64x128xf32>, vector<8x128xf32> -> vector<8x128xf32>
    %419 = arith.addf %417, %418 : vector<8x128xf32>
    %420 = arith.negf %419 : vector<8x128xf32>
    %421 = math.exp %420 : vector<8x128xf32>
    %cst_57 = arith.constant 1.000000e+00 : f32
    %422 = vector.broadcast %cst_57 : f32 to vector<8x128xf32>
    %423 = arith.addf %422, %421 : vector<8x128xf32>
    %424 = arith.divf %422, %423 : vector<8x128xf32>
    %425 = math.tanh %419 : vector<8x128xf32>
    %426 = vector.extract_strided_slice %424 {offsets = [0, 32], sizes = [8, 32], strides = [1, 1]} : vector<8x128xf32> to vector<8x32xf32>
    %427 = arith.mulf %426, %405 : vector<8x32xf32>
    %428 = vector.extract_strided_slice %424 {offsets = [0, 0], sizes = [8, 32], strides = [1, 1]} : vector<8x128xf32> to vector<8x32xf32>
    %429 = vector.extract_strided_slice %425 {offsets = [0, 64], sizes = [8, 32], strides = [1, 1]} : vector<8x128xf32> to vector<8x32xf32>
    %430 = arith.mulf %428, %429 : vector<8x32xf32>
    %431 = arith.addf %427, %430 : vector<8x32xf32>
    %432 = vector.extract_strided_slice %424 {offsets = [0, 96], sizes = [8, 32], strides = [1, 1]} : vector<8x128xf32> to vector<8x32xf32>
    %433 = math.tanh %431 : vector<8x32xf32>
    %434 = arith.mulf %432, %433 : vector<8x32xf32>
    %435 = tpu.concatenate %434, %434 in 1 : vector<8x32xf32>, vector<8x32xf32> -> vector<8x64xf32>
    %436 = arith.mulf %435, %23 : vector<8x64xf32>
    %437 = vector.extract_strided_slice %434 {offsets = [0, 0], sizes = [4, 32], strides = [1, 1]} : vector<8x32xf32> to vector<4x32xf32>
    %438 = vector.extract_strided_slice %434 {offsets = [4, 0], sizes = [4, 32], strides = [1, 1]} : vector<8x32xf32> to vector<4x32xf32>
    %439 = vector.extract_strided_slice %254 {offsets = [7, 0, 0], sizes = [1, 4, 128], strides = [1, 1, 1]} : vector<8x4x256xf32> to vector<1x4x128xf32>
    %440 = vector.shape_cast %439 : vector<1x4x128xf32> to vector<4x128xf32>
    %441 = vector.extract_strided_slice %254 {offsets = [0, 0, 128], sizes = [1, 4, 128], strides = [1, 1, 1]} : vector<8x4x256xf32> to vector<1x4x128xf32>
    %442 = vector.shape_cast %441 : vector<1x4x128xf32> to vector<4x128xf32>
    %443 = tpu.concatenate %440, %442 in 0 : vector<4x128xf32>, vector<4x128xf32> -> vector<8x128xf32>
    %cst_58 = arith.constant dense<0.000000e+00> : vector<8x128xf32>
    %444 = tpu.matmul %436, %249, %cst_58 {dimension_numbers = #tpu.dot_dimension_numbers<[1], [0], [0], [1], [0, 0, 1, 1], [], []>} : vector<8x64xf32>, vector<64x128xf32>, vector<8x128xf32> -> vector<8x128xf32>
    %445 = arith.addf %443, %444 : vector<8x128xf32>
    %446 = arith.negf %445 : vector<8x128xf32>
    %447 = math.exp %446 : vector<8x128xf32>
    %cst_59 = arith.constant 1.000000e+00 : f32
    %448 = vector.broadcast %cst_59 : f32 to vector<8x128xf32>
    %449 = arith.addf %448, %447 : vector<8x128xf32>
    %450 = arith.divf %448, %449 : vector<8x128xf32>
    %451 = math.tanh %445 : vector<8x128xf32>
    %452 = vector.extract_strided_slice %450 {offsets = [0, 32], sizes = [8, 32], strides = [1, 1]} : vector<8x128xf32> to vector<8x32xf32>
    %453 = arith.mulf %452, %431 : vector<8x32xf32>
    %454 = vector.extract_strided_slice %450 {offsets = [0, 0], sizes = [8, 32], strides = [1, 1]} : vector<8x128xf32> to vector<8x32xf32>
    %455 = vector.extract_strided_slice %451 {offsets = [0, 64], sizes = [8, 32], strides = [1, 1]} : vector<8x128xf32> to vector<8x32xf32>
    %456 = arith.mulf %454, %455 : vector<8x32xf32>
    %457 = arith.addf %453, %456 : vector<8x32xf32>
    %458 = vector.extract_strided_slice %450 {offsets = [0, 96], sizes = [8, 32], strides = [1, 1]} : vector<8x128xf32> to vector<8x32xf32>
    %459 = math.tanh %457 : vector<8x32xf32>
    %460 = arith.mulf %458, %459 : vector<8x32xf32>
    %461 = vector.extract_strided_slice %460 {offsets = [0, 0], sizes = [4, 32], strides = [1, 1]} : vector<8x32xf32> to vector<4x32xf32>
    %462 = vector.extract_strided_slice %460 {offsets = [4, 0], sizes = [4, 32], strides = [1, 1]} : vector<8x32xf32> to vector<4x32xf32>
    %463 = tpu.concatenate %281, %462 in 1 : vector<4x32xf32>, vector<4x32xf32> -> vector<4x64xf32>
    %464 = tpu.concatenate %307, %438 in 1 : vector<4x32xf32>, vector<4x32xf32> -> vector<4x64xf32>
    %465 = tpu.concatenate %333, %412 in 1 : vector<4x32xf32>, vector<4x32xf32> -> vector<4x64xf32>
    %466 = tpu.concatenate %359, %386 in 1 : vector<4x32xf32>, vector<4x32xf32> -> vector<4x64xf32>
    %467 = tpu.concatenate %385, %360 in 1 : vector<4x32xf32>, vector<4x32xf32> -> vector<4x64xf32>
    %468 = tpu.concatenate %411, %334 in 1 : vector<4x32xf32>, vector<4x32xf32> -> vector<4x64xf32>
    %469 = tpu.concatenate %437, %308 in 1 : vector<4x32xf32>, vector<4x32xf32> -> vector<4x64xf32>
    %470 = tpu.concatenate %461, %282 in 1 : vector<4x32xf32>, vector<4x32xf32> -> vector<4x64xf32>
    %cst_60 = arith.constant 0.000000e+00 : f32
    %471 = vector.broadcast %cst_60 : f32 to vector<4x64xf32>
    %472 = arith.addf %471, %463 : vector<4x64xf32>
    %473 = arith.addf %472, %464 : vector<4x64xf32>
    %474 = arith.addf %473, %465 : vector<4x64xf32>
    %475 = arith.addf %474, %466 : vector<4x64xf32>
    %476 = arith.addf %475, %467 : vector<4x64xf32>
    %477 = arith.addf %476, %468 : vector<4x64xf32>
    %478 = arith.addf %477, %469 : vector<4x64xf32>
    %479 = arith.addf %478, %470 : vector<4x64xf32>
    %cst_61 = arith.constant 1.250000e-01 : f32
    %480 = vector.broadcast %cst_61 : f32 to vector<4x64xf32>
    %481 = arith.mulf %479, %480 : vector<4x64xf32>
    %482 = vector.extract_strided_slice %481 {offsets = [0, 0], sizes = [2, 64], strides = [1, 1]} : vector<4x64xf32> to vector<2x64xf32>
    %483 = vector.extract_strided_slice %481 {offsets = [2, 0], sizes = [2, 64], strides = [1, 1]} : vector<4x64xf32> to vector<2x64xf32>
    %484 = tpu.concatenate %482, %483 in 1 : vector<2x64xf32>, vector<2x64xf32> -> vector<2x128xf32>
    %c0_62 = arith.constant 0 : index
    %c0_63 = arith.constant 0 : index
    %485 = vector.load %arg9[%c0_62, %c0_63] : memref<128x2xf32, #tpu.memory_space<vmem>>, vector<128x2xf32>
    %cst_64 = arith.constant dense<0.000000e+00> : vector<2x2xf32>
    %486 = tpu.matmul %484, %485, %cst_64 {dimension_numbers = #tpu.dot_dimension_numbers<[1], [0], [0], [1], [0, 0, 1, 1], [], []>} : vector<2x128xf32>, vector<128x2xf32>, vector<2x2xf32> -> vector<2x2xf32>
    %c0_65 = arith.constant 0 : index
    %c0_66 = arith.constant 0 : index
    %487 = vector.load %arg10[%c0_65, %c0_66] : memref<1x2xf32, #tpu.memory_space<vmem>>, vector<1x2xf32>
    %488 = vector.broadcast %487 : vector<1x2xf32> to vector<2x2xf32>
    %489 = arith.addf %486, %488 : vector<2x2xf32>
    %c0_67 = arith.constant 0 : index
    %c0_68 = arith.constant 0 : index
    %490 = vector.load %arg11[%c0_67, %c0_68] : memref<2x2xf32, #tpu.memory_space<vmem>>, vector<2x2xf32>
    tpu.vector_store %arg11[%c0_67, %c0_68], %489 {strides = array<i32>} : memref<2x2xf32, #tpu.memory_space<vmem>>, vector<2x2xf32>,
    return
  }
}

</mosaic_0001>

<llo_original>
// kernel: bilstm_model_forward.1
$region0: #{bilstm_model_forward.1}
  #allocation0 [shape = 'u32[]', space=smem, size = 0x4, offset = 0x4, fixed_abs, tag = 'smem constant byte address 0x4 - core index']
  #allocation1 [shape = 'u32[144,128]{1,0:T(1,128)}', space=vmem, size = 0x12000, scoped, tag = 'internal scratch']
  %s0 = inlined_call_operand.vmem [shape: s32[8,2], index: 0, kind: input, shape index: {}]
  %s1 = inlined_call_operand.vmem [shape: s32[8,2], index: 1, kind: input, shape index: {}]
  %s2 = inlined_call_operand.vmem [shape: f32[20,50], index: 2, kind: input, shape index: {}]
  %s3 = inlined_call_operand.hbm [shape: f32[50,256], index: 3, kind: input, shape index: {}]
  %s4 = inlined_call_operand.hbm [shape: f32[64,128], index: 4, kind: input, shape index: {}]
  %s5 = inlined_call_operand.vmem [shape: f32[1,256], index: 5, kind: input, shape index: {}]
  %s6 = inlined_call_operand.vmem [shape: f32[64,256], index: 6, kind: input, shape index: {}]
  %s7 = inlined_call_operand.hbm [shape: f32[64,128], index: 7, kind: input, shape index: {}]
  %s8 = inlined_call_operand.vmem [shape: f32[1,256], index: 8, kind: input, shape index: {}]
  %s9 = inlined_call_operand.vmem [shape: f32[128,2], index: 9, kind: input, shape index: {}]
  %s10 = inlined_call_operand.vmem [shape: f32[1,2], index: 10, kind: input, shape index: {}]
  %s11 = inlined_call_operand.hbm [shape: f32[2,2], index: 11, kind: output, shape index: {}]
  %s12 = sld [smem:[#allocation0]]
  $region66: #{bilstm_model_forward.1} parent=0
    _
  %s14 = ssub.s32 1, %s12
  %s15 = scalar_select 0, %s14, %s12
  $region1: #{bilstm_model_forward.1} parent=0
    #allocation2 [shape = 'u8[57344]{0}', space=vmem, size = 0xe000, scoped, tag = 'input window, operand 3, single buffered']
    #allocation3 [shape = 's32[1]{0}', space=sflag, size = 0x4, scoped, tag = 'scoped memory for bilstm_model_forward.1']
    #allocation4 [shape = 's32[1]{0}', space=sflag, size = 0x4, scoped, tag = 'scoped memory for bilstm_model_forward.1']
    #allocation5 [shape = 'u8[32768]{0}', space=vmem, size = 0x8000, scoped, tag = 'input window, operand 4, single buffered']
    #allocation6 [shape = 's32[1]{0}', space=sflag, size = 0x4, scoped, tag = 'scoped memory for bilstm_model_forward.1']
    #allocation7 [shape = 'u8[32768]{0}', space=vmem, size = 0x8000, scoped, tag = 'input window, operand 7, single buffered']
    #allocation8 [shape = 'u8[1024]{0}', space=vmem, size = 0x400, scoped, tag = 'output window, operand 0, single buffered']
    %16 = vsyncpa [#allocation3], 0
    %17 = vsyncpa [#allocation6], 0
    %18 = vsyncpa [#allocation4], 0
    // Predicated region
    $region2: #{bilstm_model_forward.1} parent=1 // pred_check
      _
    $region3: #{bilstm_model_forward.1} parent=1 // pred_check_branch
      %20 = sbr.rel (0) target = $region5
    $region4: #{bilstm_model_forward.1} parent=1 // pred_region
      _
    $region5: #{bilstm_model_forward.1} parent=1 // pred_fallthru
      _
    // Predicated region
    $region6: #{bilstm_model_forward.1} parent=1 // pred_check
      _
    $region7: #{bilstm_model_forward.1} parent=1 // pred_check_branch
      %22 = sbr.rel (0) target = $region9
    $region8: #{bilstm_model_forward.1} parent=1 // pred_region
      _
    $region9: #{bilstm_model_forward.1} parent=1 // pred_fallthru
      _
    // Predicated region
    $region10: #{bilstm_model_forward.1} parent=1 // pred_check
      _
    $region11: #{bilstm_model_forward.1} parent=1 // pred_check_branch
      %24 = sbr.rel (0) target = $region13
    $region12: #{bilstm_model_forward.1} parent=1 // pred_region
      _
    $region13: #{bilstm_model_forward.1} parent=1 // pred_fallthru
      _
    // Predicated region
    $region14: #{bilstm_model_forward.1} parent=1 // pred_check
      _
    $region15: #{bilstm_model_forward.1} parent=1 // pred_check_branch
      %26 = sbr.rel (0) target = $region17
    $region16: #{bilstm_model_forward.1} parent=1 // pred_region
      %s28 = ssub.s32 1792, 1792
      %29 = vsyncadd [#allocation3], %s28
      %s30 = sshll.u32 [#allocation2], 4
      %s31 = int_to_ptr.vmem [resolvable:$true] %s30
      %36 = dma.hbm_to_vmem [thread:$0]  %s3, 1792, %s31, [#allocation3], 256, 256, 16
    $region17: #{bilstm_model_forward.1} parent=1 // pred_fallthru
      _
    // Predicated region
    $region18: #{bilstm_model_forward.1} parent=1 // pred_check
      _
    $region19: #{bilstm_model_forward.1} parent=1 // pred_check_branch
      %38 = sbr.rel (0) target = $region21
    $region20: #{bilstm_model_forward.1} parent=1 // pred_region
      %s40 = ssub.s32 1024, 1024
      %41 = vsyncadd [#allocation6], %s40
      %s42 = sshll.u32 [#allocation5], 4
      %s43 = int_to_ptr.vmem [resolvable:$true] %s42
      %48 = dma.hbm_to_vmem [thread:$0]  %s4, 1024, %s43, [#allocation6], 128, 128, 8
    $region21: #{bilstm_model_forward.1} parent=1 // pred_fallthru
      _
    // Predicated region
    $region22: #{bilstm_model_forward.1} parent=1 // pred_check
      _
    $region23: #{bilstm_model_forward.1} parent=1 // pred_check_branch
      %50 = sbr.rel (0) target = $region25
    $region24: #{bilstm_model_forward.1} parent=1 // pred_region
      _
    $region25: #{bilstm_model_forward.1} parent=1 // pred_fallthru
      _
    // Predicated region
    $region26: #{bilstm_model_forward.1} parent=1 // pred_check
      _
    $region27: #{bilstm_model_forward.1} parent=1 // pred_check_branch
      %52 = sbr.rel (0) target = $region29
    $region28: #{bilstm_model_forward.1} parent=1 // pred_region
      _
    $region29: #{bilstm_model_forward.1} parent=1 // pred_fallthru
      _
    // Predicated region
    $region30: #{bilstm_model_forward.1} parent=1 // pred_check
      _
    $region31: #{bilstm_model_forward.1} parent=1 // pred_check_branch
      %54 = sbr.rel (0) target = $region33
    $region32: #{bilstm_model_forward.1} parent=1 // pred_region
      %s56 = ssub.s32 1024, 1024
      %57 = vsyncadd [#allocation6], %s56
      %s58 = sshll.u32 [#allocation7], 4
      %s59 = int_to_ptr.vmem [resolvable:$true] %s58
      %64 = dma.hbm_to_vmem [thread:$0]  %s7, 1024, %s59, [#allocation6], 128, 128, 8
    $region33: #{bilstm_model_forward.1} parent=1 // pred_fallthru
      _
    // Predicated region
    $region34: #{bilstm_model_forward.1} parent=1 // pred_check
      _
    $region35: #{bilstm_model_forward.1} parent=1 // pred_check_branch
      %66 = sbr.rel (0) target = $region37
    $region36: #{bilstm_model_forward.1} parent=1 // pred_region
      _
    $region37: #{bilstm_model_forward.1} parent=1 // pred_fallthru
      _
    // Predicated region
    $region38: #{bilstm_model_forward.1} parent=1 // pred_check
      _
    $region39: #{bilstm_model_forward.1} parent=1 // pred_check_branch
      %68 = sbr.rel (0) target = $region41
    $region40: #{bilstm_model_forward.1} parent=1 // pred_region
      _
    $region41: #{bilstm_model_forward.1} parent=1 // pred_fallthru
      _
    // Predicated region
    $region42: #{bilstm_model_forward.1} parent=1 // pred_check
      _
    $region43: #{bilstm_model_forward.1} parent=1 // pred_check_branch
      %70 = sbr.rel (0) target = $region45
    $region44: #{bilstm_model_forward.1} parent=1 // pred_region
      _
    $region45: #{bilstm_model_forward.1} parent=1 // pred_fallthru
      _
    // Predicated region
    $region46: #{bilstm_model_forward.1} parent=1 // pred_check
      _
    $region47: #{bilstm_model_forward.1} parent=1 // pred_check_branch
      %72 = sbr.rel (0) target = $region49
    $region48: #{bilstm_model_forward.1} parent=1 // pred_region
      %73 = dma.done [#allocation3], 1792
    $region49: #{bilstm_model_forward.1} parent=1 // pred_fallthru
      _
    // Predicated region
    $region50: #{bilstm_model_forward.1} parent=1 // pred_check
      _
    $region51: #{bilstm_model_forward.1} parent=1 // pred_check_branch
      %75 = sbr.rel (0) target = $region53
    $region52: #{bilstm_model_forward.1} parent=1 // pred_region
      %76 = dma.done [#allocation6], 1024
    $region53: #{bilstm_model_forward.1} parent=1 // pred_fallthru
      _
    // Predicated region
    $region54: #{bilstm_model_forward.1} parent=1 // pred_check
      _
    $region55: #{bilstm_model_forward.1} parent=1 // pred_check_branch
      %78 = sbr.rel (0) target = $region57
    $region56: #{bilstm_model_forward.1} parent=1 // pred_region
      %79 = dma.done [#allocation6], 1024
    $region57: #{bilstm_model_forward.1} parent=1 // pred_fallthru
      _
    %v80 = vld [vmem:[%s0] sm:$0xff]
    %v81 = vld [vmem:[%s1] sm:$0xff]
    %82 = vrot.lane.b32.xlu0 %v81, 2
    %v83 = vpop.permute.xlu0 %82
    %vm84 = vcmask 15360
    %v85 = vsel %vm84, %v80, %v83
    %v86 = vlaneseq
    %v87 = vand.u32 %v86, 127
    %v88 = vlaneseq
    %v89 = vshrl.u32 %v88, 7
    %v90 = vsub.s32 0, %v89
    %v91 = vrot.slane %v85, %v90
    %93 = vbcast.lane.b32.xlu0 %v91, 256
    %v94 = vpop.permute.xlu0 %93
    %v95 = vlaneseq
    %v96 = vshrl.u32 %v95, 7
    %v97 = vsub.s32 1, %v96
    %v98 = vrot.slane %v85, %v97
    %100 = vbcast.lane.b32.xlu0 %v98, 256
    %v101 = vpop.permute.xlu0 %100
    %v102 = vlaneseq
    %v103 = vshrl.u32 %v102, 7
    %v104 = vsub.s32 2, %v103
    %v105 = vrot.slane %v85, %v104
    %107 = vbcast.lane.b32.xlu0 %v105, 256
    %v108 = vpop.permute.xlu0 %107
    %v109 = vlaneseq
    %v110 = vshrl.u32 %v109, 7
    %v111 = vsub.s32 3, %v110
    %v112 = vrot.slane %v85, %v111
    %114 = vbcast.lane.b32.xlu0 %v112, 256
    %v115 = vpop.permute.xlu0 %114
    %v116 = vlaneseq
    %v117 = vshrl.u32 %v116, 7
    %v118 = vsub.s32 4, %v117
    %v119 = vrot.slane %v85, %v118
    %121 = vbcast.lane.b32.xlu0 %v119, 256
    %v122 = vpop.permute.xlu0 %121
    %v123 = vlaneseq
    %v124 = vshrl.u32 %v123, 7
    %v125 = vsub.s32 5, %v124
    %v126 = vrot.slane %v85, %v125
    %128 = vbcast.lane.b32.xlu0 %v126, 256
    %v129 = vpop.permute.xlu0 %128
    %v130 = vlaneseq
    %v131 = vshrl.u32 %v130, 7
    %v132 = vsub.s32 6, %v131
    %v133 = vrot.slane %v85, %v132
    %135 = vbcast.lane.b32.xlu0 %v133, 256
    %v136 = vpop.permute.xlu0 %135
    %v137 = vlaneseq
    %v138 = vshrl.u32 %v137, 7
    %v139 = vsub.s32 7, %v138
    %v140 = vrot.slane %v85, %v139
    %142 = vbcast.lane.b32.xlu0 %v140, 256
    %v143 = vpop.permute.xlu0 %142
    %vm144 = vcmp.eq.s32.totalorder %v87, %v94
    %vm145 = vcmp.eq.s32.totalorder %v87, %v101
    %vm146 = vcmp.eq.s32.totalorder %v87, %v108
    %vm147 = vcmp.eq.s32.totalorder %v87, %v115
    %vm148 = vcmp.eq.s32.totalorder %v87, %v122
    %vm149 = vcmp.eq.s32.totalorder %v87, %v129
    %vm150 = vcmp.eq.s32.totalorder %v87, %v136
    %vm151 = vcmp.eq.s32.totalorder %v87, %v143
    %v152 = vsel %vm144, 1.0, 0.0
    %v153 = vsel %vm145, 1.0, 0.0
    %v154 = vsel %vm146, 1.0, 0.0
    %v155 = vsel %vm147, 1.0, 0.0
    %v156 = vsel %vm148, 1.0, 0.0
    %v157 = vsel %vm149, 1.0, 0.0
    %v158 = vsel %vm150, 1.0, 0.0
    %v159 = vsel %vm151, 1.0, 0.0
    %v160 = vld [vmem:[%s2] sm:$0xff]
    %v161 = vld [vmem:[%s2 + $0x8] sm:$0xff]
    %v162 = vld [vmem:[%s2 + $0x10] sm:$0xf]
    %v171 = vcombine.low %v152, %v153
    %v172 = vcombine.low %v154, %v155
    %v173 = vcombine.low %v156, %v157
    %v174 = vcombine.low %v158, %v159
    %vm175 = vcmask 162816
    %v176 = vsel %vm175, %v171, 0
    %v178 = vsel %vm175, %v172, 0
    %v180 = vsel %vm175, %v173, 0
    %v182 = vsel %vm175, %v174, 0
    %vm184 = vcmask 1043456
    %v186 = vsel %vm184, %v162, 0
    %188 = vmatprep.subr.mxu0 0.0
    %189 = vmatpush1.msra.mxu0 0.0
    %190 = vmatprep.subr.mxu0 0.0
    %191 = vmatpush1.msra.mxu0 0.0
    %192 = vmatprep.subr.mxu0 0.0
    %193 = vmatpush1.msra.mxu0 0.0
    %194 = vmatprep.subr.mxu0 0.0
    %195 = vmatpush1.msra.mxu0 0.0
    %196 = vmatprep.subr.mxu0 0.0
    %197 = vmatpush1.msra.mxu0 0.0
    %198 = vmatprep.subr.mxu0 0.0
    %199 = vmatpush1.msra.mxu0 0.0
    %200 = vmatprep.subr.mxu0 0.0
    %201 = vmatpush1.msra.mxu0 0.0
    %202 = vmatprep.subr.mxu0 0.0
    %203 = vmatpush1.msra.mxu0 0.0
    %204 = vmatprep.subr.mxu0 0.0
    %205 = vmatpush1.msra.mxu0 0.0
    %206 = vmatprep.subr.mxu0 0.0
    %207 = vmatpush1.msra.mxu0 0.0
    %208 = vmatprep.subr.mxu0 0.0
    %209 = vmatpush1.msra.mxu0 0.0
    %210 = vmatprep.subr.mxu0 0.0
    %211 = vmatpush1.msra.mxu0 0.0
    %212 = vmatprep.subr.mxu0 0.0
    %213 = vmatpush1.msra.mxu0 0.0
    %214 = vmatprep.subr.mxu0 0.0
    %215 = vmatpush1.msra.mxu0 %v186
    %216 = vmatprep.subr.mxu0 0.0
    %217 = vmatpush1.msra.mxu0 %v161
    %218 = vmatprep.subr.mxu0 0.0
    %219 = vmatpush1.msra.mxu0 %v160
    %220 = vmatprep.subr.mxu0 0.0
    %221 = vmatpush2.msra.mxu0 0.0
    %222 = vmatprep.subr.mxu0 0.0
    %223 = vmatpush2.msra.mxu0 0.0
    %224 = vmatprep.subr.mxu0 0.0
    %225 = vmatpush2.msra.mxu0 0.0
    %226 = vmatprep.subr.mxu0 0.0
    %227 = vmatpush2.msra.mxu0 0.0
    %228 = vmatprep.subr.mxu0 0.0
    %229 = vmatpush2.msra.mxu0 0.0
    %230 = vmatprep.subr.mxu0 0.0
    %231 = vmatpush2.msra.mxu0 0.0
    %232 = vmatprep.subr.mxu0 0.0
    %233 = vmatpush2.msra.mxu0 0.0
    %234 = vmatprep.subr.mxu0 0.0
    %235 = vmatpush2.msra.mxu0 0.0
    %236 = vmatprep.subr.mxu0 0.0
    %237 = vmatpush2.msra.mxu0 0.0
    %238 = vmatprep.subr.mxu0 0.0
    %239 = vmatpush2.msra.mxu0 0.0
    %240 = vmatprep.subr.mxu0 0.0
    %241 = vmatpush2.msra.mxu0 0.0
    %242 = vmatprep.subr.mxu0 0.0
    %243 = vmatpush2.msra.mxu0 0.0
    %244 = vmatprep.subr.mxu0 0.0
    %245 = vmatpush2.msra.mxu0 0.0
    %246 = vmatprep.subr.mxu0 0.0
    %247 = vmatpush2.msra.mxu0 0.0
    %248 = vmatprep.subr.mxu0 0.0
    %249 = vmatpush2.msra.mxu0 0.0
    %250 = vmatprep.subr.mxu0 0.0
    %251 = vmatpush2.msra.mxu0 0.0
    %252 = vmatprep.mubr.f32.mxu0 0.0
    %253 = vmatmul.mubr.f32.gmra.mxu0 %v176
    %v254 = vpop.f32.mrf.mxu0
    %v255 = vadd.f32 0.0, %v254
    %v256 = vpop.f32.mrf.mxu0
    %257 = vmatprep.mubr.f32.mxu0 0.0
    %258 = vmatmul.mubr.f32.gmra.mxu0 %v178
    %v259 = vpop.f32.mrf.mxu0
    %v260 = vadd.f32 0.0, %v259
    %v261 = vpop.f32.mrf.mxu0
    %262 = vmatprep.mubr.f32.mxu0 0.0
    %263 = vmatmul.mubr.f32.gmra.mxu0 %v180
    %v264 = vpop.f32.mrf.mxu0
    %v265 = vadd.f32 0.0, %v264
    %v266 = vpop.f32.mrf.mxu0
    %267 = vmatprep.mubr.f32.mxu0 0.0
    %268 = vmatmul.mubr.f32.gmra.mxu0 %v182
    %v269 = vpop.f32.mrf.mxu0
    %v270 = vadd.f32 0.0, %v269
    %v271 = vpop.f32.mrf.mxu0
    %272 = vdwg.mxu0
    %v273 = vlaneseq
    %v274 = vshrl.u32 %v273, 7
    %vm275 = vcmp.lt.s32.totalorder %v274, 4
    %vm276 = vcmp.lt.s32.totalorder %v87, 32
    %vm277 = vmxor %vm275, %vm276
    %vm278 = vmxor %vm277, 1
    %v279 = vsel %vm278, 1.0, 0.0
    %v280 = vld [vmem:[#allocation2] sm:$0xff]
    %v281 = vld [vmem:[#allocation2 + $0x8] sm:$0xff]
    %v282 = vld [vmem:[#allocation2 + $0x10] sm:$0xff]
    %v283 = vld [vmem:[#allocation2 + $0x18] sm:$0xff]
    %v284 = vld [vmem:[#allocation2 + $0x20] sm:$0xff]
    %v285 = vld [vmem:[#allocation2 + $0x28] sm:$0xff]
    %v286 = vld [vmem:[#allocation2 + $0x30] sm:$0xff]
    %v287 = vld [vmem:[#allocation2 + $0x38] sm:$0xff]
    %v288 = vld [vmem:[#allocation2 + $0x40] sm:$0xff]
    %v289 = vld [vmem:[#allocation2 + $0x48] sm:$0xff]
    %v290 = vld [vmem:[#allocation2 + $0x50] sm:$0xff]
    %v291 = vld [vmem:[#allocation2 + $0x58] sm:$0xff]
    %v292 = vld [vmem:[#allocation2 + $0x60] sm:$0x3]
    %v293 = vld [vmem:[#allocation2 + $0x68] sm:$0x3]
    %v294 = vld [vmem:[#allocation5] sm:$0xff]
    %v295 = vld [vmem:[#allocation5 + $0x8] sm:$0xff]
    %v296 = vld [vmem:[#allocation5 + $0x10] sm:$0xff]
    %v297 = vld [vmem:[#allocation5 + $0x18] sm:$0xff]
    %v298 = vld [vmem:[#allocation5 + $0x20] sm:$0xff]
    %v299 = vld [vmem:[#allocation5 + $0x28] sm:$0xff]
    %v300 = vld [vmem:[#allocation5 + $0x30] sm:$0xff]
    %v301 = vld [vmem:[#allocation5 + $0x38] sm:$0xff]
    %v302 = vld [vmem:[%s5] sm:$0x3]
    %v304 = vlaneseq
    %v305 = vshrl.u32 %v304, 7
    %v306 = vsub.s32 0, %v305
    %v307 = vrot.slane %v302, %v306
    %v308 = vlaneseq
    %v309 = vshrl.u32 %v308, 7
    %v310 = vsub.s32 1, %v309
    %v311 = vrot.slane %v302, %v310
    %vm314 = vcmask 408576
    %v316 = vsel %vm314, %v255, 0
    %v319 = vsel %vm314, %v260, 0
    %v322 = vsel %vm314, %v265, 0
    %v325 = vsel %vm314, %v270, 0
    %vm327 = vcmask 1041408
    %v329 = vsel %vm327, %v292, 0
    %v332 = vsel %vm327, %v293, 0
    %334 = vmatprep.subr.mxu0 0.0
    %335 = vmatpush1.msra.mxu0 0.0
    %336 = vmatprep.subr.mxu0 0.0
    %337 = vmatpush1.msra.mxu0 0.0
    %338 = vmatprep.subr.mxu0 0.0
    %339 = vmatpush1.msra.mxu0 0.0
    %340 = vmatprep.subr.mxu0 0.0
    %341 = vmatpush1.msra.mxu0 0.0
    %342 = vmatprep.subr.mxu0 0.0
    %343 = vmatpush1.msra.mxu0 0.0
    %344 = vmatprep.subr.mxu0 0.0
    %345 = vmatpush1.msra.mxu0 0.0
    %346 = vmatprep.subr.mxu0 0.0
    %347 = vmatpush1.msra.mxu0 0.0
    %348 = vmatprep.subr.mxu0 0.0
    %349 = vmatpush1.msra.mxu0 0.0
    %350 = vmatprep.subr.mxu0 0.0
    %351 = vmatpush1.msra.mxu0 0.0
    %352 = vmatprep.subr.mxu0 %v332
    %353 = vmatpush1.msra.mxu0 %v329
    %354 = vmatprep.subr.mxu0 %v291
    %355 = vmatpush1.msra.mxu0 %v290
    %356 = vmatprep.subr.mxu0 %v289
    %357 = vmatpush1.msra.mxu0 %v288
    %358 = vmatprep.subr.mxu0 %v287
    %359 = vmatpush1.msra.mxu0 %v286
    %360 = vmatprep.subr.mxu0 %v285
    %361 = vmatpush1.msra.mxu0 %v284
    %362 = vmatprep.subr.mxu0 %v283
    %363 = vmatpush1.msra.mxu0 %v282
    %364 = vmatprep.subr.mxu0 %v281
    %365 = vmatpush1.msra.mxu0 %v280
    %366 = vmatprep.subr.mxu0 0.0
    %367 = vmatpush2.msra.mxu0 0.0
    %368 = vmatprep.subr.mxu0 0.0
    %369 = vmatpush2.msra.mxu0 0.0
    %370 = vmatprep.subr.mxu0 0.0
    %371 = vmatpush2.msra.mxu0 0.0
    %372 = vmatprep.subr.mxu0 0.0
    %373 = vmatpush2.msra.mxu0 0.0
    %374 = vmatprep.subr.mxu0 0.0
    %375 = vmatpush2.msra.mxu0 0.0
    %376 = vmatprep.subr.mxu0 0.0
    %377 = vmatpush2.msra.mxu0 0.0
    %378 = vmatprep.subr.mxu0 0.0
    %379 = vmatpush2.msra.mxu0 0.0
    %380 = vmatprep.subr.mxu0 0.0
    %381 = vmatpush2.msra.mxu0 0.0
    %382 = vmatprep.subr.mxu0 0.0
    %383 = vmatpush2.msra.mxu0 0.0
    %384 = vmatprep.subr.mxu0 0.0
    %385 = vmatpush2.msra.mxu0 0.0
    %386 = vmatprep.subr.mxu0 0.0
    %387 = vmatpush2.msra.mxu0 0.0
    %388 = vmatprep.subr.mxu0 0.0
    %389 = vmatpush2.msra.mxu0 0.0
    %390 = vmatprep.subr.mxu0 0.0
    %391 = vmatpush2.msra.mxu0 0.0
    %392 = vmatprep.subr.mxu0 0.0
    %393 = vmatpush2.msra.mxu0 0.0
    %394 = vmatprep.subr.mxu0 0.0
    %395 = vmatpush2.msra.mxu0 0.0
    %396 = vmatprep.subr.mxu0 0.0
    %397 = vmatpush2.msra.mxu0 0.0
    %398 = vmatprep.mubr.f32.mxu0 0.0
    %399 = vmatmul.mubr.f32.gmra.mxu0 %v316
    %v400 = vpop.f32.mrf.mxu0
    %v401 = vadd.f32 %v307, %v400
    %v402 = vpop.f32.mrf.mxu0
    %v403 = vadd.f32 %v311, %v402
    %404 = vmatprep.mubr.f32.mxu0 0.0
    %405 = vmatmul.mubr.f32.gmra.mxu0 %v319
    %v406 = vpop.f32.mrf.mxu0
    %v407 = vadd.f32 %v307, %v406
    %v408 = vpop.f32.mrf.mxu0
    %v409 = vadd.f32 %v311, %v408
    %410 = vmatprep.mubr.f32.mxu0 0.0
    %411 = vmatmul.mubr.f32.gmra.mxu0 %v322
    %v412 = vpop.f32.mrf.mxu0
    %v413 = vadd.f32 %v307, %v412
    %v414 = vpop.f32.mrf.mxu0
    %v415 = vadd.f32 %v311, %v414
    %416 = vmatprep.mubr.f32.mxu0 0.0
    %417 = vmatmul.mubr.f32.gmra.mxu0 %v325
    %v418 = vpop.f32.mrf.mxu0
    %v419 = vadd.f32 %v307, %v418
    %v420 = vpop.f32.mrf.mxu0
    %v421 = vadd.f32 %v311, %v420
    %422 = vdwg.mxu0
    %v431 = vcombine.low %v401, %v403
    %v432 = vcombine.high %v401, %v403
    %v433 = vcombine.low %v407, %v409
    %v434 = vcombine.high %v407, %v409
    %v435 = vcombine.low %v413, %v415
    %v436 = vcombine.high %v413, %v415
    %v437 = vcombine.low %v419, %v421
    %v438 = vcombine.high %v419, %v421
    %v447 = vrot.slane %v438, 4
    %v448 = vcombine.low %v447, %v447
    %v450 = vsel %vm184, %v431, %v448
    %vm451 = vcmask 523264
    %v453 = vsel %vm451, 0.0, 0
    %455 = vmatprep.subr.mxu0 0.0
    %456 = vmatpush1.msra.mxu0 0.0
    %457 = vmatprep.subr.mxu0 0.0
    %458 = vmatpush1.msra.mxu0 0.0
    %459 = vmatprep.subr.mxu0 0.0
    %460 = vmatpush1.msra.mxu0 0.0
    %461 = vmatprep.subr.mxu0 0.0
    %462 = vmatpush1.msra.mxu0 0.0
    %463 = vmatprep.subr.mxu0 0.0
    %464 = vmatpush1.msra.mxu0 0.0
    %465 = vmatprep.subr.mxu0 0.0
    %466 = vmatpush1.msra.mxu0 0.0
    %467 = vmatprep.subr.mxu0 0.0
    %468 = vmatpush1.msra.mxu0 0.0
    %469 = vmatprep.subr.mxu0 0.0
    %470 = vmatpush1.msra.mxu0 0.0
    %471 = vmatprep.subr.mxu0 0.0
    %472 = vmatpush1.msra.mxu0 %v301
    %473 = vmatprep.subr.mxu0 0.0
    %474 = vmatpush1.msra.mxu0 %v300
    %475 = vmatprep.subr.mxu0 0.0
    %476 = vmatpush1.msra.mxu0 %v299
    %477 = vmatprep.subr.mxu0 0.0
    %478 = vmatpush1.msra.mxu0 %v298
    %479 = vmatprep.subr.mxu0 0.0
    %480 = vmatpush1.msra.mxu0 %v297
    %481 = vmatprep.subr.mxu0 0.0
    %482 = vmatpush1.msra.mxu0 %v296
    %483 = vmatprep.subr.mxu0 0.0
    %484 = vmatpush1.msra.mxu0 %v295
    %485 = vmatprep.subr.mxu0 0.0
    %486 = vmatpush1.msra.mxu0 %v294
    %487 = vmatprep.subr.mxu0 0.0
    %488 = vmatpush2.msra.mxu0 0.0
    %489 = vmatprep.subr.mxu0 0.0
    %490 = vmatpush2.msra.mxu0 0.0
    %491 = vmatprep.subr.mxu0 0.0
    %492 = vmatpush2.msra.mxu0 0.0
    %493 = vmatprep.subr.mxu0 0.0
    %494 = vmatpush2.msra.mxu0 0.0
    %495 = vmatprep.subr.mxu0 0.0
    %496 = vmatpush2.msra.mxu0 0.0
    %497 = vmatprep.subr.mxu0 0.0
    %498 = vmatpush2.msra.mxu0 0.0
    %499 = vmatprep.subr.mxu0 0.0
    %500 = vmatpush2.msra.mxu0 0.0
    %501 = vmatprep.subr.mxu0 0.0
    %502 = vmatpush2.msra.mxu0 0.0
    %503 = vmatprep.subr.mxu0 0.0
    %504 = vmatpush2.msra.mxu0 0.0
    %505 = vmatprep.subr.mxu0 0.0
    %506 = vmatpush2.msra.mxu0 0.0
    %507 = vmatprep.subr.mxu0 0.0
    %508 = vmatpush2.msra.mxu0 0.0
    %509 = vmatprep.subr.mxu0 0.0
    %510 = vmatpush2.msra.mxu0 0.0
    %511 = vmatprep.subr.mxu0 0.0
    %512 = vmatpush2.msra.mxu0 0.0
    %513 = vmatprep.subr.mxu0 0.0
    %514 = vmatpush2.msra.mxu0 0.0
    %515 = vmatprep.subr.mxu0 0.0
    %516 = vmatpush2.msra.mxu0 0.0
    %517 = vmatprep.subr.mxu0 0.0
    %518 = vmatpush2.msra.mxu0 0.0
    %519 = vmatprep.mubr.f32.mxu0 0.0
    %520 = vmatmul.mubr.f32.gmra.mxu0 %v453
    %v521 = vpop.f32.mrf.mxu0
    %v522 = vadd.f32 0.0, %v521
    %v523 = vpop.f32.mrf.mxu0
    %524 = vdwg.mxu0
    %v525 = vadd.f32 %v450, %v522
    %v526 = vxor.u32 %v525, 2147483648
    %v527 = vmul.f32 %v526, 1.442695
    %v528 = vpow.pop %v527
    %v529 = vadd.f32 %v528, 1.0
    %v530 = vrcp.pop %v529
    %v531 = vmul.f32 1.0, %v530
    %v532 = vtanh.pop %v525
    %v533 = vmul.f32 %v531, 0.0
    %535 = vrot.lane.b32.xlu0 %v532, 64
    %v536 = vpop.permute.xlu0 %535
    %v538 = vmul.f32 %v531, %v536
    %540 = vrot.lane.b32.xlu0 %v538, 32
    %v541 = vpop.permute.xlu0 %540
    %v543 = vadd.f32 %v533, %v541
    %v544 = vtanh.pop %v543
    %546 = vrot.lane.b32.xlu0 %v544, 64
    %v547 = vpop.permute.xlu0 %546
    %v549 = vmul.f32 %v531, %v547
    %551 = vrot.lane.b32.xlu0 %v549, 32
    %v552 = vpop.permute.xlu0 %551
    %554 = vrot.lane.b32.xlu0 %v549, 64
    %v555 = vpop.permute.xlu0 %554
    %vm557 = vcmask 261120
    %v558 = vsel %vm557, %v552, %v555
    %v559 = vmul.f32 %v558, %v279
    %v560 = vrot.slane %v437, 4
    %v561 = vcombine.low %v560, %v560
    %v563 = vsel %vm184, %v432, %v561
    %v565 = vsel %vm451, %v559, 0
    %567 = vmatprep.subr.mxu0 0.0
    %568 = vmatpush1.msra.mxu0 0.0
    %569 = vmatprep.subr.mxu0 0.0
    %570 = vmatpush1.msra.mxu0 0.0
    %571 = vmatprep.subr.mxu0 0.0
    %572 = vmatpush1.msra.mxu0 0.0
    %573 = vmatprep.subr.mxu0 0.0
    %574 = vmatpush1.msra.mxu0 0.0
    %575 = vmatprep.subr.mxu0 0.0
    %576 = vmatpush1.msra.mxu0 0.0
    %577 = vmatprep.subr.mxu0 0.0
    %578 = vmatpush1.msra.mxu0 0.0
    %579 = vmatprep.subr.mxu0 0.0
    %580 = vmatpush1.msra.mxu0 0.0
    %581 = vmatprep.subr.mxu0 0.0
    %582 = vmatpush1.msra.mxu0 0.0
    %583 = vmatprep.subr.mxu0 0.0
    %584 = vmatpush1.msra.mxu0 %v301
    %585 = vmatprep.subr.mxu0 0.0
    %586 = vmatpush1.msra.mxu0 %v300
    %587 = vmatprep.subr.mxu0 0.0
    %588 = vmatpush1.msra.mxu0 %v299
    %589 = vmatprep.subr.mxu0 0.0
    %590 = vmatpush1.msra.mxu0 %v298
    %591 = vmatprep.subr.mxu0 0.0
    %592 = vmatpush1.msra.mxu0 %v297
    %593 = vmatprep.subr.mxu0 0.0
    %594 = vmatpush1.msra.mxu0 %v296
    %595 = vmatprep.subr.mxu0 0.0
    %596 = vmatpush1.msra.mxu0 %v295
    %597 = vmatprep.subr.mxu0 0.0
    %598 = vmatpush1.msra.mxu0 %v294
    %599 = vmatprep.subr.mxu0 0.0
    %600 = vmatpush2.msra.mxu0 0.0
    %601 = vmatprep.subr.mxu0 0.0
    %602 = vmatpush2.msra.mxu0 0.0
    %603 = vmatprep.subr.mxu0 0.0
    %604 = vmatpush2.msra.mxu0 0.0
    %605 = vmatprep.subr.mxu0 0.0
    %606 = vmatpush2.msra.mxu0 0.0
    %607 = vmatprep.subr.mxu0 0.0
    %608 = vmatpush2.msra.mxu0 0.0
    %609 = vmatprep.subr.mxu0 0.0
    %610 = vmatpush2.msra.mxu0 0.0
    %611 = vmatprep.subr.mxu0 0.0
    %612 = vmatpush2.msra.mxu0 0.0
    %613 = vmatprep.subr.mxu0 0.0
    %614 = vmatpush2.msra.mxu0 0.0
    %615 = vmatprep.subr.mxu0 0.0
    %616 = vmatpush2.msra.mxu0 0.0
    %617 = vmatprep.subr.mxu0 0.0
    %618 = vmatpush2.msra.mxu0 0.0
    %619 = vmatprep.subr.mxu0 0.0
    %620 = vmatpush2.msra.mxu0 0.0
    %621 = vmatprep.subr.mxu0 0.0
    %622 = vmatpush2.msra.mxu0 0.0
    %623 = vmatprep.subr.mxu0 0.0
    %624 = vmatpush2.msra.mxu0 0.0
    %625 = vmatprep.subr.mxu0 0.0
    %626 = vmatpush2.msra.mxu0 0.0
    %627 = vmatprep.subr.mxu0 0.0
    %628 = vmatpush2.msra.mxu0 0.0
    %629 = vmatprep.subr.mxu0 0.0
    %630 = vmatpush2.msra.mxu0 0.0
    %631 = vmatprep.mubr.f32.mxu0 0.0
    %632 = vmatmul.mubr.f32.gmra.mxu0 %v565
    %v633 = vpop.f32.mrf.mxu0
    %v634 = vadd.f32 0.0, %v633
    %v635 = vpop.f32.mrf.mxu0
    %636 = vdwg.mxu0
    %v637 = vadd.f32 %v563, %v634
    %v638 = vxor.u32 %v637, 2147483648
    %v639 = vmul.f32 %v638, 1.442695
    %v640 = vpow.pop %v639
    %v641 = vadd.f32 %v640, 1.0
    %v642 = vrcp.pop %v641
    %v643 = vmul.f32 1.0, %v642
    %v644 = vtanh.pop %v637
    %v645 = vmul.f32 %v643, %v543
    %647 = vrot.lane.b32.xlu0 %v644, 64
    %v648 = vpop.permute.xlu0 %647
    %v650 = vmul.f32 %v643, %v648
    %652 = vrot.lane.b32.xlu0 %v650, 32
    %v653 = vpop.permute.xlu0 %652
    %v655 = vadd.f32 %v645, %v653
    %v656 = vtanh.pop %v655
    %658 = vrot.lane.b32.xlu0 %v656, 64
    %v659 = vpop.permute.xlu0 %658
    %v661 = vmul.f32 %v643, %v659
    %663 = vrot.lane.b32.xlu0 %v661, 32
    %v664 = vpop.permute.xlu0 %663
    %666 = vrot.lane.b32.xlu0 %v661, 64
    %v667 = vpop.permute.xlu0 %666
    %v669 = vsel %vm557, %v664, %v667
    %v670 = vmul.f32 %v669, %v279
    %v671 = vrot.slane %v436, 4
    %v672 = vcombine.low %v671, %v671
    %v674 = vsel %vm184, %v433, %v672
    %v676 = vsel %vm451, %v670, 0
    %678 = vmatprep.subr.mxu0 0.0
    %679 = vmatpush1.msra.mxu0 0.0
    %680 = vmatprep.subr.mxu0 0.0
    %681 = vmatpush1.msra.mxu0 0.0
    %682 = vmatprep.subr.mxu0 0.0
    %683 = vmatpush1.msra.mxu0 0.0
    %684 = vmatprep.subr.mxu0 0.0
    %685 = vmatpush1.msra.mxu0 0.0
    %686 = vmatprep.subr.mxu0 0.0
    %687 = vmatpush1.msra.mxu0 0.0
    %688 = vmatprep.subr.mxu0 0.0
    %689 = vmatpush1.msra.mxu0 0.0
    %690 = vmatprep.subr.mxu0 0.0
    %691 = vmatpush1.msra.mxu0 0.0
    %692 = vmatprep.subr.mxu0 0.0
    %693 = vmatpush1.msra.mxu0 0.0
    %694 = vmatprep.subr.mxu0 0.0
    %695 = vmatpush1.msra.mxu0 %v301
    %696 = vmatprep.subr.mxu0 0.0
    %697 = vmatpush1.msra.mxu0 %v300
    %698 = vmatprep.subr.mxu0 0.0
    %699 = vmatpush1.msra.mxu0 %v299
    %700 = vmatprep.subr.mxu0 0.0
    %701 = vmatpush1.msra.mxu0 %v298
    %702 = vmatprep.subr.mxu0 0.0
    %703 = vmatpush1.msra.mxu0 %v297
    %704 = vmatprep.subr.mxu0 0.0
    %705 = vmatpush1.msra.mxu0 %v296
    %706 = vmatprep.subr.mxu0 0.0
    %707 = vmatpush1.msra.mxu0 %v295
    %708 = vmatprep.subr.mxu0 0.0
    %709 = vmatpush1.msra.mxu0 %v294
    %710 = vmatprep.subr.mxu0 0.0
    %711 = vmatpush2.msra.mxu0 0.0
    %712 = vmatprep.subr.mxu0 0.0
    %713 = vmatpush2.msra.mxu0 0.0
    %714 = vmatprep.subr.mxu0 0.0
    %715 = vmatpush2.msra.mxu0 0.0
    %716 = vmatprep.subr.mxu0 0.0
    %717 = vmatpush2.msra.mxu0 0.0
    %718 = vmatprep.subr.mxu0 0.0
    %719 = vmatpush2.msra.mxu0 0.0
    %720 = vmatprep.subr.mxu0 0.0
    %721 = vmatpush2.msra.mxu0 0.0
    %722 = vmatprep.subr.mxu0 0.0
    %723 = vmatpush2.msra.mxu0 0.0
    %724 = vmatprep.subr.mxu0 0.0
    %725 = vmatpush2.msra.mxu0 0.0
    %726 = vmatprep.subr.mxu0 0.0
    %727 = vmatpush2.msra.mxu0 0.0
    %728 = vmatprep.subr.mxu0 0.0
    %729 = vmatpush2.msra.mxu0 0.0
    %730 = vmatprep.subr.mxu0 0.0
    %731 = vmatpush2.msra.mxu0 0.0
    %732 = vmatprep.subr.mxu0 0.0
    %733 = vmatpush2.msra.mxu0 0.0
    %734 = vmatprep.subr.mxu0 0.0
    %735 = vmatpush2.msra.mxu0 0.0
    %736 = vmatprep.subr.mxu0 0.0
    %737 = vmatpush2.msra.mxu0 0.0
    %738 = vmatprep.subr.mxu0 0.0
    %739 = vmatpush2.msra.mxu0 0.0
    %740 = vmatprep.subr.mxu0 0.0
    %741 = vmatpush2.msra.mxu0 0.0
    %742 = vmatprep.mubr.f32.mxu0 0.0
    %743 = vmatmul.mubr.f32.gmra.mxu0 %v676
    %v744 = vpop.f32.mrf.mxu0
    %v745 = vadd.f32 0.0, %v744
    %v746 = vpop.f32.mrf.mxu0
    %747 = vdwg.mxu0
    %v748 = vadd.f32 %v674, %v745
    %v749 = vxor.u32 %v748, 2147483648
    %v750 = vmul.f32 %v749, 1.442695
    %v751 = vpow.pop %v750
    %v752 = vadd.f32 %v751, 1.0
    %v753 = vrcp.pop %v752
    %v754 = vmul.f32 1.0, %v753
    %v755 = vtanh.pop %v748
    %v756 = vmul.f32 %v754, %v655
    %758 = vrot.lane.b32.xlu0 %v755, 64
    %v759 = vpop.permute.xlu0 %758
    %v761 = vmul.f32 %v754, %v759
    %763 = vrot.lane.b32.xlu0 %v761, 32
    %v764 = vpop.permute.xlu0 %763
    %v766 = vadd.f32 %v756, %v764
    %v767 = vtanh.pop %v766
    %769 = vrot.lane.b32.xlu0 %v767, 64
    %v770 = vpop.permute.xlu0 %769
    %v772 = vmul.f32 %v754, %v770
    %774 = vrot.lane.b32.xlu0 %v772, 32
    %v775 = vpop.permute.xlu0 %774
    %777 = vrot.lane.b32.xlu0 %v772, 64
    %v778 = vpop.permute.xlu0 %777
    %v780 = vsel %vm557, %v775, %v778
    %v781 = vmul.f32 %v780, %v279
    %v782 = vrot.slane %v435, 4
    %v783 = vcombine.low %v782, %v782
    %v785 = vsel %vm184, %v434, %v783
    %v787 = vsel %vm451, %v781, 0
    %789 = vmatprep.subr.mxu0 0.0
    %790 = vmatpush1.msra.mxu0 0.0
    %791 = vmatprep.subr.mxu0 0.0
    %792 = vmatpush1.msra.mxu0 0.0
    %793 = vmatprep.subr.mxu0 0.0
    %794 = vmatpush1.msra.mxu0 0.0
    %795 = vmatprep.subr.mxu0 0.0
    %796 = vmatpush1.msra.mxu0 0.0
    %797 = vmatprep.subr.mxu0 0.0
    %798 = vmatpush1.msra.mxu0 0.0
    %799 = vmatprep.subr.mxu0 0.0
    %800 = vmatpush1.msra.mxu0 0.0
    %801 = vmatprep.subr.mxu0 0.0
    %802 = vmatpush1.msra.mxu0 0.0
    %803 = vmatprep.subr.mxu0 0.0
    %804 = vmatpush1.msra.mxu0 0.0
    %805 = vmatprep.subr.mxu0 0.0
    %806 = vmatpush1.msra.mxu0 %v301
    %807 = vmatprep.subr.mxu0 0.0
    %808 = vmatpush1.msra.mxu0 %v300
    %809 = vmatprep.subr.mxu0 0.0
    %810 = vmatpush1.msra.mxu0 %v299
    %811 = vmatprep.subr.mxu0 0.0
    %812 = vmatpush1.msra.mxu0 %v298
    %813 = vmatprep.subr.mxu0 0.0
    %814 = vmatpush1.msra.mxu0 %v297
    %815 = vmatprep.subr.mxu0 0.0
    %816 = vmatpush1.msra.mxu0 %v296
    %817 = vmatprep.subr.mxu0 0.0
    %818 = vmatpush1.msra.mxu0 %v295
    %819 = vmatprep.subr.mxu0 0.0
    %820 = vmatpush1.msra.mxu0 %v294
    %821 = vmatprep.subr.mxu0 0.0
    %822 = vmatpush2.msra.mxu0 0.0
    %823 = vmatprep.subr.mxu0 0.0
    %824 = vmatpush2.msra.mxu0 0.0
    %825 = vmatprep.subr.mxu0 0.0
    %826 = vmatpush2.msra.mxu0 0.0
    %827 = vmatprep.subr.mxu0 0.0
    %828 = vmatpush2.msra.mxu0 0.0
    %829 = vmatprep.subr.mxu0 0.0
    %830 = vmatpush2.msra.mxu0 0.0
    %831 = vmatprep.subr.mxu0 0.0
    %832 = vmatpush2.msra.mxu0 0.0
    %833 = vmatprep.subr.mxu0 0.0
    %834 = vmatpush2.msra.mxu0 0.0
    %835 = vmatprep.subr.mxu0 0.0
    %836 = vmatpush2.msra.mxu0 0.0
    %837 = vmatprep.subr.mxu0 0.0
    %838 = vmatpush2.msra.mxu0 0.0
    %839 = vmatprep.subr.mxu0 0.0
    %840 = vmatpush2.msra.mxu0 0.0
    %841 = vmatprep.subr.mxu0 0.0
    %842 = vmatpush2.msra.mxu0 0.0
    %843 = vmatprep.subr.mxu0 0.0
    %844 = vmatpush2.msra.mxu0 0.0
    %845 = vmatprep.subr.mxu0 0.0
    %846 = vmatpush2.msra.mxu0 0.0
    %847 = vmatprep.subr.mxu0 0.0
    %848 = vmatpush2.msra.mxu0 0.0
    %849 = vmatprep.subr.mxu0 0.0
    %850 = vmatpush2.msra.mxu0 0.0
    %851 = vmatprep.subr.mxu0 0.0
    %852 = vmatpush2.msra.mxu0 0.0
    %853 = vmatprep.mubr.f32.mxu0 0.0
    %854 = vmatmul.mubr.f32.gmra.mxu0 %v787
    %v855 = vpop.f32.mrf.mxu0
    %v856 = vadd.f32 0.0, %v855
    %v857 = vpop.f32.mrf.mxu0
    %858 = vdwg.mxu0
    %v859 = vadd.f32 %v785, %v856
    %v860 = vxor.u32 %v859, 2147483648
    %v861 = vmul.f32 %v860, 1.442695
    %v862 = vpow.pop %v861
    %v863 = vadd.f32 %v862, 1.0
    %v864 = vrcp.pop %v863
    %v865 = vmul.f32 1.0, %v864
    %v866 = vtanh.pop %v859
    %v867 = vmul.f32 %v865, %v766
    %869 = vrot.lane.b32.xlu0 %v866, 64
    %v870 = vpop.permute.xlu0 %869
    %v872 = vmul.f32 %v865, %v870
    %874 = vrot.lane.b32.xlu0 %v872, 32
    %v875 = vpop.permute.xlu0 %874
    %v877 = vadd.f32 %v867, %v875
    %v878 = vtanh.pop %v877
    %880 = vrot.lane.b32.xlu0 %v878, 64
    %v881 = vpop.permute.xlu0 %880
    %v883 = vmul.f32 %v865, %v881
    %885 = vrot.lane.b32.xlu0 %v883, 32
    %v886 = vpop.permute.xlu0 %885
    %888 = vrot.lane.b32.xlu0 %v883, 64
    %v889 = vpop.permute.xlu0 %888
    %v891 = vsel %vm557, %v886, %v889
    %v892 = vmul.f32 %v891, %v279
    %v893 = vrot.slane %v434, 4
    %v894 = vcombine.low %v893, %v893
    %v896 = vsel %vm184, %v435, %v894
    %v898 = vsel %vm451, %v892, 0
    %900 = vmatprep.subr.mxu0 0.0
    %901 = vmatpush1.msra.mxu0 0.0
    %902 = vmatprep.subr.mxu0 0.0
    %903 = vmatpush1.msra.mxu0 0.0
    %904 = vmatprep.subr.mxu0 0.0
    %905 = vmatpush1.msra.mxu0 0.0
    %906 = vmatprep.subr.mxu0 0.0
    %907 = vmatpush1.msra.mxu0 0.0
    %908 = vmatprep.subr.mxu0 0.0
    %909 = vmatpush1.msra.mxu0 0.0
    %910 = vmatprep.subr.mxu0 0.0
    %911 = vmatpush1.msra.mxu0 0.0
    %912 = vmatprep.subr.mxu0 0.0
    %913 = vmatpush1.msra.mxu0 0.0
    %914 = vmatprep.subr.mxu0 0.0
    %915 = vmatpush1.msra.mxu0 0.0
    %916 = vmatprep.subr.mxu0 0.0
    %917 = vmatpush1.msra.mxu0 %v301
    %918 = vmatprep.subr.mxu0 0.0
    %919 = vmatpush1.msra.mxu0 %v300
    %920 = vmatprep.subr.mxu0 0.0
    %921 = vmatpush1.msra.mxu0 %v299
    %922 = vmatprep.subr.mxu0 0.0
    %923 = vmatpush1.msra.mxu0 %v298
    %924 = vmatprep.subr.mxu0 0.0
    %925 = vmatpush1.msra.mxu0 %v297
    %926 = vmatprep.subr.mxu0 0.0
    %927 = vmatpush1.msra.mxu0 %v296
    %928 = vmatprep.subr.mxu0 0.0
    %929 = vmatpush1.msra.mxu0 %v295
    %930 = vmatprep.subr.mxu0 0.0
    %931 = vmatpush1.msra.mxu0 %v294
    %932 = vmatprep.subr.mxu0 0.0
    %933 = vmatpush2.msra.mxu0 0.0
    %934 = vmatprep.subr.mxu0 0.0
    %935 = vmatpush2.msra.mxu0 0.0
    %936 = vmatprep.subr.mxu0 0.0
    %937 = vmatpush2.msra.mxu0 0.0
    %938 = vmatprep.subr.mxu0 0.0
    %939 = vmatpush2.msra.mxu0 0.0
    %940 = vmatprep.subr.mxu0 0.0
    %941 = vmatpush2.msra.mxu0 0.0
    %942 = vmatprep.subr.mxu0 0.0
    %943 = vmatpush2.msra.mxu0 0.0
    %944 = vmatprep.subr.mxu0 0.0
    %945 = vmatpush2.msra.mxu0 0.0
    %946 = vmatprep.subr.mxu0 0.0
    %947 = vmatpush2.msra.mxu0 0.0
    %948 = vmatprep.subr.mxu0 0.0
    %949 = vmatpush2.msra.mxu0 0.0
    %950 = vmatprep.subr.mxu0 0.0
    %951 = vmatpush2.msra.mxu0 0.0
    %952 = vmatprep.subr.mxu0 0.0
    %953 = vmatpush2.msra.mxu0 0.0
    %954 = vmatprep.subr.mxu0 0.0
    %955 = vmatpush2.msra.mxu0 0.0
    %956 = vmatprep.subr.mxu0 0.0
    %957 = vmatpush2.msra.mxu0 0.0
    %958 = vmatprep.subr.mxu0 0.0
    %959 = vmatpush2.msra.mxu0 0.0
    %960 = vmatprep.subr.mxu0 0.0
    %961 = vmatpush2.msra.mxu0 0.0
    %962 = vmatprep.subr.mxu0 0.0
    %963 = vmatpush2.msra.mxu0 0.0
    %964 = vmatprep.mubr.f32.mxu0 0.0
    %965 = vmatmul.mubr.f32.gmra.mxu0 %v898
    %v966 = vpop.f32.mrf.mxu0
    %v967 = vadd.f32 0.0, %v966
    %v968 = vpop.f32.mrf.mxu0
    %969 = vdwg.mxu0
    %v970 = vadd.f32 %v896, %v967
    %v971 = vxor.u32 %v970, 2147483648
    %v972 = vmul.f32 %v971, 1.442695
    %v973 = vpow.pop %v972
    %v974 = vadd.f32 %v973, 1.0
    %v975 = vrcp.pop %v974
    %v976 = vmul.f32 1.0, %v975
    %v977 = vtanh.pop %v970
    %v978 = vmul.f32 %v976, %v877
    %980 = vrot.lane.b32.xlu0 %v977, 64
    %v981 = vpop.permute.xlu0 %980
    %v983 = vmul.f32 %v976, %v981
    %985 = vrot.lane.b32.xlu0 %v983, 32
    %v986 = vpop.permute.xlu0 %985
    %v988 = vadd.f32 %v978, %v986
    %v989 = vtanh.pop %v988
    %991 = vrot.lane.b32.xlu0 %v989, 64
    %v992 = vpop.permute.xlu0 %991
    %v994 = vmul.f32 %v976, %v992
    %996 = vrot.lane.b32.xlu0 %v994, 32
    %v997 = vpop.permute.xlu0 %996
    %999 = vrot.lane.b32.xlu0 %v994, 64
    %v1000 = vpop.permute.xlu0 %999
    %v1002 = vsel %vm557, %v997, %v1000
    %v1003 = vmul.f32 %v1002, %v279
    %v1004 = vrot.slane %v433, 4
    %v1005 = vcombine.low %v1004, %v1004
    %v1007 = vsel %vm184, %v436, %v1005
    %v1009 = vsel %vm451, %v1003, 0
    %1011 = vmatprep.subr.mxu0 0.0
    %1012 = vmatpush1.msra.mxu0 0.0
    %1013 = vmatprep.subr.mxu0 0.0
    %1014 = vmatpush1.msra.mxu0 0.0
    %1015 = vmatprep.subr.mxu0 0.0
    %1016 = vmatpush1.msra.mxu0 0.0
    %1017 = vmatprep.subr.mxu0 0.0
    %1018 = vmatpush1.msra.mxu0 0.0
    %1019 = vmatprep.subr.mxu0 0.0
    %1020 = vmatpush1.msra.mxu0 0.0
    %1021 = vmatprep.subr.mxu0 0.0
    %1022 = vmatpush1.msra.mxu0 0.0
    %1023 = vmatprep.subr.mxu0 0.0
    %1024 = vmatpush1.msra.mxu0 0.0
    %1025 = vmatprep.subr.mxu0 0.0
    %1026 = vmatpush1.msra.mxu0 0.0
    %1027 = vmatprep.subr.mxu0 0.0
    %1028 = vmatpush1.msra.mxu0 %v301
    %1029 = vmatprep.subr.mxu0 0.0
    %1030 = vmatpush1.msra.mxu0 %v300
    %1031 = vmatprep.subr.mxu0 0.0
    %1032 = vmatpush1.msra.mxu0 %v299
    %1033 = vmatprep.subr.mxu0 0.0
    %1034 = vmatpush1.msra.mxu0 %v298
    %1035 = vmatprep.subr.mxu0 0.0
    %1036 = vmatpush1.msra.mxu0 %v297
    %1037 = vmatprep.subr.mxu0 0.0
    %1038 = vmatpush1.msra.mxu0 %v296
    %1039 = vmatprep.subr.mxu0 0.0
    %1040 = vmatpush1.msra.mxu0 %v295
    %1041 = vmatprep.subr.mxu0 0.0
    %1042 = vmatpush1.msra.mxu0 %v294
    %1043 = vmatprep.subr.mxu0 0.0
    %1044 = vmatpush2.msra.mxu0 0.0
    %1045 = vmatprep.subr.mxu0 0.0
    %1046 = vmatpush2.msra.mxu0 0.0
    %1047 = vmatprep.subr.mxu0 0.0
    %1048 = vmatpush2.msra.mxu0 0.0
    %1049 = vmatprep.subr.mxu0 0.0
    %1050 = vmatpush2.msra.mxu0 0.0
    %1051 = vmatprep.subr.mxu0 0.0
    %1052 = vmatpush2.msra.mxu0 0.0
    %1053 = vmatprep.subr.mxu0 0.0
    %1054 = vmatpush2.msra.mxu0 0.0
    %1055 = vmatprep.subr.mxu0 0.0
    %1056 = vmatpush2.msra.mxu0 0.0
    %1057 = vmatprep.subr.mxu0 0.0
    %1058 = vmatpush2.msra.mxu0 0.0
    %1059 = vmatprep.subr.mxu0 0.0
    %1060 = vmatpush2.msra.mxu0 0.0
    %1061 = vmatprep.subr.mxu0 0.0
    %1062 = vmatpush2.msra.mxu0 0.0
    %1063 = vmatprep.subr.mxu0 0.0
    %1064 = vmatpush2.msra.mxu0 0.0
    %1065 = vmatprep.subr.mxu0 0.0
    %1066 = vmatpush2.msra.mxu0 0.0
    %1067 = vmatprep.subr.mxu0 0.0
    %1068 = vmatpush2.msra.mxu0 0.0
    %1069 = vmatprep.subr.mxu0 0.0
    %1070 = vmatpush2.msra.mxu0 0.0
    %1071 = vmatprep.subr.mxu0 0.0
    %1072 = vmatpush2.msra.mxu0 0.0
    %1073 = vmatprep.subr.mxu0 0.0
    %1074 = vmatpush2.msra.mxu0 0.0
    %1075 = vmatprep.mubr.f32.mxu0 0.0
    %1076 = vmatmul.mubr.f32.gmra.mxu0 %v1009
    %v1077 = vpop.f32.mrf.mxu0
    %v1078 = vadd.f32 0.0, %v1077
    %v1079 = vpop.f32.mrf.mxu0
    %1080 = vdwg.mxu0
    %v1081 = vadd.f32 %v1007, %v1078
    %v1082 = vxor.u32 %v1081, 2147483648
    %v1083 = vmul.f32 %v1082, 1.442695
    %v1084 = vpow.pop %v1083
    %v1085 = vadd.f32 %v1084, 1.0
    %v1086 = vrcp.pop %v1085
    %v1087 = vmul.f32 1.0, %v1086
    %v1088 = vtanh.pop %v1081
    %v1089 = vmul.f32 %v1087, %v988
    %1091 = vrot.lane.b32.xlu0 %v1088, 64
    %v1092 = vpop.permute.xlu0 %1091
    %v1094 = vmul.f32 %v1087, %v1092
    %1096 = vrot.lane.b32.xlu0 %v1094, 32
    %v1097 = vpop.permute.xlu0 %1096
    %v1099 = vadd.f32 %v1089, %v1097
    %v1100 = vtanh.pop %v1099
    %1102 = vrot.lane.b32.xlu0 %v1100, 64
    %v1103 = vpop.permute.xlu0 %1102
    %v1105 = vmul.f32 %v1087, %v1103
    %1107 = vrot.lane.b32.xlu0 %v1105, 32
    %v1108 = vpop.permute.xlu0 %1107
    %1110 = vrot.lane.b32.xlu0 %v1105, 64
    %v1111 = vpop.permute.xlu0 %1110
    %v1113 = vsel %vm557, %v1108, %v1111
    %v1114 = vmul.f32 %v1113, %v279
    %v1115 = vrot.slane %v432, 4
    %v1116 = vcombine.low %v1115, %v1115
    %v1118 = vsel %vm184, %v437, %v1116
    %v1120 = vsel %vm451, %v1114, 0
    %1122 = vmatprep.subr.mxu0 0.0
    %1123 = vmatpush1.msra.mxu0 0.0
    %1124 = vmatprep.subr.mxu0 0.0
    %1125 = vmatpush1.msra.mxu0 0.0
    %1126 = vmatprep.subr.mxu0 0.0
    %1127 = vmatpush1.msra.mxu0 0.0
    %1128 = vmatprep.subr.mxu0 0.0
    %1129 = vmatpush1.msra.mxu0 0.0
    %1130 = vmatprep.subr.mxu0 0.0
    %1131 = vmatpush1.msra.mxu0 0.0
    %1132 = vmatprep.subr.mxu0 0.0
    %1133 = vmatpush1.msra.mxu0 0.0
    %1134 = vmatprep.subr.mxu0 0.0
    %1135 = vmatpush1.msra.mxu0 0.0
    %1136 = vmatprep.subr.mxu0 0.0
    %1137 = vmatpush1.msra.mxu0 0.0
    %1138 = vmatprep.subr.mxu0 0.0
    %1139 = vmatpush1.msra.mxu0 %v301
    %1140 = vmatprep.subr.mxu0 0.0
    %1141 = vmatpush1.msra.mxu0 %v300
    %1142 = vmatprep.subr.mxu0 0.0
    %1143 = vmatpush1.msra.mxu0 %v299
    %1144 = vmatprep.subr.mxu0 0.0
    %1145 = vmatpush1.msra.mxu0 %v298
    %1146 = vmatprep.subr.mxu0 0.0
    %1147 = vmatpush1.msra.mxu0 %v297
    %1148 = vmatprep.subr.mxu0 0.0
    %1149 = vmatpush1.msra.mxu0 %v296
    %1150 = vmatprep.subr.mxu0 0.0
    %1151 = vmatpush1.msra.mxu0 %v295
    %1152 = vmatprep.subr.mxu0 0.0
    %1153 = vmatpush1.msra.mxu0 %v294
    %1154 = vmatprep.subr.mxu0 0.0
    %1155 = vmatpush2.msra.mxu0 0.0
    %1156 = vmatprep.subr.mxu0 0.0
    %1157 = vmatpush2.msra.mxu0 0.0
    %1158 = vmatprep.subr.mxu0 0.0
    %1159 = vmatpush2.msra.mxu0 0.0
    %1160 = vmatprep.subr.mxu0 0.0
    %1161 = vmatpush2.msra.mxu0 0.0
    %1162 = vmatprep.subr.mxu0 0.0
    %1163 = vmatpush2.msra.mxu0 0.0
    %1164 = vmatprep.subr.mxu0 0.0
    %1165 = vmatpush2.msra.mxu0 0.0
    %1166 = vmatprep.subr.mxu0 0.0
    %1167 = vmatpush2.msra.mxu0 0.0
    %1168 = vmatprep.subr.mxu0 0.0
    %1169 = vmatpush2.msra.mxu0 0.0
    %1170 = vmatprep.subr.mxu0 0.0
    %1171 = vmatpush2.msra.mxu0 0.0
    %1172 = vmatprep.subr.mxu0 0.0
    %1173 = vmatpush2.msra.mxu0 0.0
    %1174 = vmatprep.subr.mxu0 0.0
    %1175 = vmatpush2.msra.mxu0 0.0
    %1176 = vmatprep.subr.mxu0 0.0
    %1177 = vmatpush2.msra.mxu0 0.0
    %1178 = vmatprep.subr.mxu0 0.0
    %1179 = vmatpush2.msra.mxu0 0.0
    %1180 = vmatprep.subr.mxu0 0.0
    %1181 = vmatpush2.msra.mxu0 0.0
    %1182 = vmatprep.subr.mxu0 0.0
    %1183 = vmatpush2.msra.mxu0 0.0
    %1184 = vmatprep.subr.mxu0 0.0
    %1185 = vmatpush2.msra.mxu0 0.0
    %1186 = vmatprep.mubr.f32.mxu0 0.0
    %1187 = vmatmul.mubr.f32.gmra.mxu0 %v1120
    %v1188 = vpop.f32.mrf.mxu0
    %v1189 = vadd.f32 0.0, %v1188
    %v1190 = vpop.f32.mrf.mxu0
    %1191 = vdwg.mxu0
    %v1192 = vadd.f32 %v1118, %v1189
    %v1193 = vxor.u32 %v1192, 2147483648
    %v1194 = vmul.f32 %v1193, 1.442695
    %v1195 = vpow.pop %v1194
    %v1196 = vadd.f32 %v1195, 1.0
    %v1197 = vrcp.pop %v1196
    %v1198 = vmul.f32 1.0, %v1197
    %v1199 = vtanh.pop %v1192
    %v1200 = vmul.f32 %v1198, %v1099
    %1202 = vrot.lane.b32.xlu0 %v1199, 64
    %v1203 = vpop.permute.xlu0 %1202
    %v1205 = vmul.f32 %v1198, %v1203
    %1207 = vrot.lane.b32.xlu0 %v1205, 32
    %v1208 = vpop.permute.xlu0 %1207
    %v1210 = vadd.f32 %v1200, %v1208
    %v1211 = vtanh.pop %v1210
    %1213 = vrot.lane.b32.xlu0 %v1211, 64
    %v1214 = vpop.permute.xlu0 %1213
    %v1216 = vmul.f32 %v1198, %v1214
    %1218 = vrot.lane.b32.xlu0 %v1216, 32
    %v1219 = vpop.permute.xlu0 %1218
    %1221 = vrot.lane.b32.xlu0 %v1216, 64
    %v1222 = vpop.permute.xlu0 %1221
    %v1224 = vsel %vm557, %v1219, %v1222
    %v1225 = vmul.f32 %v1224, %v279
    %v1226 = vrot.slane %v431, 4
    %v1227 = vcombine.low %v1226, %v1226
    %v1229 = vsel %vm184, %v438, %v1227
    %v1231 = vsel %vm451, %v1225, 0
    %1233 = vmatprep.subr.mxu0 0.0
    %1234 = vmatpush1.msra.mxu0 0.0
    %1235 = vmatprep.subr.mxu0 0.0
    %1236 = vmatpush1.msra.mxu0 0.0
    %1237 = vmatprep.subr.mxu0 0.0
    %1238 = vmatpush1.msra.mxu0 0.0
    %1239 = vmatprep.subr.mxu0 0.0
    %1240 = vmatpush1.msra.mxu0 0.0
    %1241 = vmatprep.subr.mxu0 0.0
    %1242 = vmatpush1.msra.mxu0 0.0
    %1243 = vmatprep.subr.mxu0 0.0
    %1244 = vmatpush1.msra.mxu0 0.0
    %1245 = vmatprep.subr.mxu0 0.0
    %1246 = vmatpush1.msra.mxu0 0.0
    %1247 = vmatprep.subr.mxu0 0.0
    %1248 = vmatpush1.msra.mxu0 0.0
    %1249 = vmatprep.subr.mxu0 0.0
    %1250 = vmatpush1.msra.mxu0 %v301
    %1251 = vmatprep.subr.mxu0 0.0
    %1252 = vmatpush1.msra.mxu0 %v300
    %1253 = vmatprep.subr.mxu0 0.0
    %1254 = vmatpush1.msra.mxu0 %v299
    %1255 = vmatprep.subr.mxu0 0.0
    %1256 = vmatpush1.msra.mxu0 %v298
    %1257 = vmatprep.subr.mxu0 0.0
    %1258 = vmatpush1.msra.mxu0 %v297
    %1259 = vmatprep.subr.mxu0 0.0
    %1260 = vmatpush1.msra.mxu0 %v296
    %1261 = vmatprep.subr.mxu0 0.0
    %1262 = vmatpush1.msra.mxu0 %v295
    %1263 = vmatprep.subr.mxu0 0.0
    %1264 = vmatpush1.msra.mxu0 %v294
    %1265 = vmatprep.subr.mxu0 0.0
    %1266 = vmatpush2.msra.mxu0 0.0
    %1267 = vmatprep.subr.mxu0 0.0
    %1268 = vmatpush2.msra.mxu0 0.0
    %1269 = vmatprep.subr.mxu0 0.0
    %1270 = vmatpush2.msra.mxu0 0.0
    %1271 = vmatprep.subr.mxu0 0.0
    %1272 = vmatpush2.msra.mxu0 0.0
    %1273 = vmatprep.subr.mxu0 0.0
    %1274 = vmatpush2.msra.mxu0 0.0
    %1275 = vmatprep.subr.mxu0 0.0
    %1276 = vmatpush2.msra.mxu0 0.0
    %1277 = vmatprep.subr.mxu0 0.0
    %1278 = vmatpush2.msra.mxu0 0.0
    %1279 = vmatprep.subr.mxu0 0.0
    %1280 = vmatpush2.msra.mxu0 0.0
    %1281 = vmatprep.subr.mxu0 0.0
    %1282 = vmatpush2.msra.mxu0 0.0
    %1283 = vmatprep.subr.mxu0 0.0
    %1284 = vmatpush2.msra.mxu0 0.0
    %1285 = vmatprep.subr.mxu0 0.0
    %1286 = vmatpush2.msra.mxu0 0.0
    %1287 = vmatprep.subr.mxu0 0.0
    %1288 = vmatpush2.msra.mxu0 0.0
    %1289 = vmatprep.subr.mxu0 0.0
    %1290 = vmatpush2.msra.mxu0 0.0
    %1291 = vmatprep.subr.mxu0 0.0
    %1292 = vmatpush2.msra.mxu0 0.0
    %1293 = vmatprep.subr.mxu0 0.0
    %1294 = vmatpush2.msra.mxu0 0.0
    %1295 = vmatprep.subr.mxu0 0.0
    %1296 = vmatpush2.msra.mxu0 0.0
    %1297 = vmatprep.mubr.f32.mxu0 0.0
    %1298 = vmatmul.mubr.f32.gmra.mxu0 %v1231
    %v1299 = vpop.f32.mrf.mxu0
    %v1300 = vadd.f32 0.0, %v1299
    %v1301 = vpop.f32.mrf.mxu0
    %1302 = vdwg.mxu0
    %v1303 = vadd.f32 %v1229, %v1300
    %v1304 = vxor.u32 %v1303, 2147483648
    %v1305 = vmul.f32 %v1304, 1.442695
    %v1306 = vpow.pop %v1305
    %v1307 = vadd.f32 %v1306, 1.0
    %v1308 = vrcp.pop %v1307
    %v1309 = vmul.f32 1.0, %v1308
    %v1310 = vtanh.pop %v1303
    %v1311 = vmul.f32 %v1309, %v1210
    %1313 = vrot.lane.b32.xlu0 %v1310, 64
    %v1314 = vpop.permute.xlu0 %1313
    %v1316 = vmul.f32 %v1309, %v1314
    %1318 = vrot.lane.b32.xlu0 %v1316, 32
    %v1319 = vpop.permute.xlu0 %1318
    %v1321 = vadd.f32 %v1311, %v1319
    %v1322 = vtanh.pop %v1321
    %1324 = vrot.lane.b32.xlu0 %v1322, 64
    %v1325 = vpop.permute.xlu0 %1324
    %v1327 = vmul.f32 %v1309, %v1325
    %v1329 = vrot.slane %v1327, 4
    %1330 = vrot.lane.b32.xlu0 %v1329, 64
    %v1331 = vpop.permute.xlu0 %1330
    %v1333 = vsel %vm557, %v552, %v1331
    %v1334 = vrot.slane %v1216, 4
    %1335 = vrot.lane.b32.xlu0 %v1334, 64
    %v1336 = vpop.permute.xlu0 %1335
    %v1338 = vsel %vm557, %v664, %v1336
    %v1339 = vrot.slane %v1105, 4
    %1340 = vrot.lane.b32.xlu0 %v1339, 64
    %v1341 = vpop.permute.xlu0 %1340
    %v1343 = vsel %vm557, %v775, %v1341
    %v1344 = vrot.slane %v994, 4
    %1345 = vrot.lane.b32.xlu0 %v1344, 64
    %v1346 = vpop.permute.xlu0 %1345
    %v1348 = vsel %vm557, %v886, %v1346
    %v1349 = vrot.slane %v883, 4
    %1350 = vrot.lane.b32.xlu0 %v1349, 64
    %v1351 = vpop.permute.xlu0 %1350
    %v1353 = vsel %vm557, %v997, %v1351
    %v1354 = vrot.slane %v772, 4
    %1355 = vrot.lane.b32.xlu0 %v1354, 64
    %v1356 = vpop.permute.xlu0 %1355
    %v1358 = vsel %vm557, %v1108, %v1356
    %v1359 = vrot.slane %v661, 4
    %1360 = vrot.lane.b32.xlu0 %v1359, 64
    %v1361 = vpop.permute.xlu0 %1360
    %v1363 = vsel %vm557, %v1219, %v1361
    %1364 = vrot.lane.b32.xlu0 %v1327, 32
    %v1365 = vpop.permute.xlu0 %1364
    %v1367 = vrot.slane %v549, 4
    %1368 = vrot.lane.b32.xlu0 %v1367, 64
    %v1369 = vpop.permute.xlu0 %1368
    %v1371 = vsel %vm557, %v1365, %v1369
    %v1373 = vrot.slane %v1338, 4
    %v1376 = vrot.slane %v1348, 4
    %v1379 = vrot.slane %v1358, 4
    %v1382 = vrot.slane %v1371, 4
    %v1384 = vsel %vm184, %v1333, %v1373
    %v1385 = vsel %vm184, %v1343, %v1376
    %v1386 = vsel %vm184, %v1353, %v1379
    %v1387 = vsel %vm184, %v1363, %v1382
    %v1388 = vld [vmem:[%s6] sm:$0xff]
    %v1389 = vld [vmem:[%s6 + $0x8] sm:$0xff]
    %v1390 = vld [vmem:[%s6 + $0x10] sm:$0xff]
    %v1391 = vld [vmem:[%s6 + $0x18] sm:$0xff]
    %v1392 = vld [vmem:[%s6 + $0x20] sm:$0xff]
    %v1393 = vld [vmem:[%s6 + $0x28] sm:$0xff]
    %v1394 = vld [vmem:[%s6 + $0x30] sm:$0xff]
    %v1395 = vld [vmem:[%s6 + $0x38] sm:$0xff]
    %v1396 = vld [vmem:[%s6 + $0x40] sm:$0xff]
    %v1397 = vld [vmem:[%s6 + $0x48] sm:$0xff]
    %v1398 = vld [vmem:[%s6 + $0x50] sm:$0xff]
    %v1399 = vld [vmem:[%s6 + $0x58] sm:$0xff]
    %v1400 = vld [vmem:[%s6 + $0x60] sm:$0xff]
    %v1401 = vld [vmem:[%s6 + $0x68] sm:$0xff]
    %v1402 = vld [vmem:[%s6 + $0x70] sm:$0xff]
    %v1403 = vld [vmem:[%s6 + $0x78] sm:$0xff]
    %v1404 = vld [vmem:[#allocation7] sm:$0xff]
    %v1405 = vld [vmem:[#allocation7 + $0x8] sm:$0xff]
    %v1406 = vld [vmem:[#allocation7 + $0x10] sm:$0xff]
    %v1407 = vld [vmem:[#allocation7 + $0x18] sm:$0xff]
    %v1408 = vld [vmem:[#allocation7 + $0x20] sm:$0xff]
    %v1409 = vld [vmem:[#allocation7 + $0x28] sm:$0xff]
    %v1410 = vld [vmem:[#allocation7 + $0x30] sm:$0xff]
    %v1411 = vld [vmem:[#allocation7 + $0x38] sm:$0xff]
    %v1412 = vld [vmem:[%s8] sm:$0x3]
    %v1414 = vlaneseq
    %v1415 = vshrl.u32 %v1414, 7
    %v1416 = vsub.s32 0, %v1415
    %v1417 = vrot.slane %v1412, %v1416
    %v1418 = vlaneseq
    %v1419 = vshrl.u32 %v1418, 7
    %v1420 = vsub.s32 1, %v1419
    %v1421 = vrot.slane %v1412, %v1420
    %v1425 = vsel %vm451, %v1384, 0
    %v1428 = vsel %vm451, %v1385, 0
    %v1431 = vsel %vm451, %v1386, 0
    %v1434 = vsel %vm451, %v1387, 0
    %1436 = vmatprep.subr.mxu0 0.0
    %1437 = vmatpush1.msra.mxu0 0.0
    %1438 = vmatprep.subr.mxu0 0.0
    %1439 = vmatpush1.msra.mxu0 0.0
    %1440 = vmatprep.subr.mxu0 0.0
    %1441 = vmatpush1.msra.mxu0 0.0
    %1442 = vmatprep.subr.mxu0 0.0
    %1443 = vmatpush1.msra.mxu0 0.0
    %1444 = vmatprep.subr.mxu0 0.0
    %1445 = vmatpush1.msra.mxu0 0.0
    %1446 = vmatprep.subr.mxu0 0.0
    %1447 = vmatpush1.msra.mxu0 0.0
    %1448 = vmatprep.subr.mxu0 0.0
    %1449 = vmatpush1.msra.mxu0 0.0
    %1450 = vmatprep.subr.mxu0 0.0
    %1451 = vmatpush1.msra.mxu0 0.0
    %1452 = vmatprep.subr.mxu0 %v1403
    %1453 = vmatpush1.msra.mxu0 %v1402
    %1454 = vmatprep.subr.mxu0 %v1401
    %1455 = vmatpush1.msra.mxu0 %v1400
    %1456 = vmatprep.subr.mxu0 %v1399
    %1457 = vmatpush1.msra.mxu0 %v1398
    %1458 = vmatprep.subr.mxu0 %v1397
    %1459 = vmatpush1.msra.mxu0 %v1396
    %1460 = vmatprep.subr.mxu0 %v1395
    %1461 = vmatpush1.msra.mxu0 %v1394
    %1462 = vmatprep.subr.mxu0 %v1393
    %1463 = vmatpush1.msra.mxu0 %v1392
    %1464 = vmatprep.subr.mxu0 %v1391
    %1465 = vmatpush1.msra.mxu0 %v1390
    %1466 = vmatprep.subr.mxu0 %v1389
    %1467 = vmatpush1.msra.mxu0 %v1388
    %1468 = vmatprep.subr.mxu0 0.0
    %1469 = vmatpush2.msra.mxu0 0.0
    %1470 = vmatprep.subr.mxu0 0.0
    %1471 = vmatpush2.msra.mxu0 0.0
    %1472 = vmatprep.subr.mxu0 0.0
    %1473 = vmatpush2.msra.mxu0 0.0
    %1474 = vmatprep.subr.mxu0 0.0
    %1475 = vmatpush2.msra.mxu0 0.0
    %1476 = vmatprep.subr.mxu0 0.0
    %1477 = vmatpush2.msra.mxu0 0.0
    %1478 = vmatprep.subr.mxu0 0.0
    %1479 = vmatpush2.msra.mxu0 0.0
    %1480 = vmatprep.subr.mxu0 0.0
    %1481 = vmatpush2.msra.mxu0 0.0
    %1482 = vmatprep.subr.mxu0 0.0
    %1483 = vmatpush2.msra.mxu0 0.0
    %1484 = vmatprep.subr.mxu0 0.0
    %1485 = vmatpush2.msra.mxu0 0.0
    %1486 = vmatprep.subr.mxu0 0.0
    %1487 = vmatpush2.msra.mxu0 0.0
    %1488 = vmatprep.subr.mxu0 0.0
    %1489 = vmatpush2.msra.mxu0 0.0
    %1490 = vmatprep.subr.mxu0 0.0
    %1491 = vmatpush2.msra.mxu0 0.0
    %1492 = vmatprep.subr.mxu0 0.0
    %1493 = vmatpush2.msra.mxu0 0.0
    %1494 = vmatprep.subr.mxu0 0.0
    %1495 = vmatpush2.msra.mxu0 0.0
    %1496 = vmatprep.subr.mxu0 0.0
    %1497 = vmatpush2.msra.mxu0 0.0
    %1498 = vmatprep.subr.mxu0 0.0
    %1499 = vmatpush2.msra.mxu0 0.0
    %1500 = vmatprep.mubr.f32.mxu0 0.0
    %1501 = vmatmul.mubr.f32.gmra.mxu0 %v1425
    %v1502 = vpop.f32.mrf.mxu0
    %v1503 = vadd.f32 %v1417, %v1502
    %v1504 = vpop.f32.mrf.mxu0
    %v1505 = vadd.f32 %v1421, %v1504
    %1506 = vmatprep.mubr.f32.mxu0 0.0
    %1507 = vmatmul.mubr.f32.gmra.mxu0 %v1428
    %v1508 = vpop.f32.mrf.mxu0
    %v1509 = vadd.f32 %v1417, %v1508
    %v1510 = vpop.f32.mrf.mxu0
    %v1511 = vadd.f32 %v1421, %v1510
    %1512 = vmatprep.mubr.f32.mxu0 0.0
    %1513 = vmatmul.mubr.f32.gmra.mxu0 %v1431
    %v1514 = vpop.f32.mrf.mxu0
    %v1515 = vadd.f32 %v1417, %v1514
    %v1516 = vpop.f32.mrf.mxu0
    %v1517 = vadd.f32 %v1421, %v1516
    %1518 = vmatprep.mubr.f32.mxu0 0.0
    %1519 = vmatmul.mubr.f32.gmra.mxu0 %v1434
    %v1520 = vpop.f32.mrf.mxu0
    %v1521 = vadd.f32 %v1417, %v1520
    %v1522 = vpop.f32.mrf.mxu0
    %v1523 = vadd.f32 %v1421, %v1522
    %1524 = vdwg.mxu0
    %v1533 = vcombine.low %v1503, %v1505
    %v1534 = vcombine.high %v1503, %v1505
    %v1535 = vcombine.low %v1509, %v1511
    %v1536 = vcombine.high %v1509, %v1511
    %v1537 = vcombine.low %v1515, %v1517
    %v1538 = vcombine.high %v1515, %v1517
    %v1539 = vcombine.low %v1521, %v1523
    %v1540 = vcombine.high %v1521, %v1523
    %v1549 = vrot.slane %v1540, 4
    %v1550 = vcombine.low %v1549, %v1549
    %v1552 = vsel %vm184, %v1533, %v1550
    %1553 = vmatprep.subr.mxu0 0.0
    %1554 = vmatpush1.msra.mxu0 0.0
    %1555 = vmatprep.subr.mxu0 0.0
    %1556 = vmatpush1.msra.mxu0 0.0
    %1557 = vmatprep.subr.mxu0 0.0
    %1558 = vmatpush1.msra.mxu0 0.0
    %1559 = vmatprep.subr.mxu0 0.0
    %1560 = vmatpush1.msra.mxu0 0.0
    %1561 = vmatprep.subr.mxu0 0.0
    %1562 = vmatpush1.msra.mxu0 0.0
    %1563 = vmatprep.subr.mxu0 0.0
    %1564 = vmatpush1.msra.mxu0 0.0
    %1565 = vmatprep.subr.mxu0 0.0
    %1566 = vmatpush1.msra.mxu0 0.0
    %1567 = vmatprep.subr.mxu0 0.0
    %1568 = vmatpush1.msra.mxu0 0.0
    %1569 = vmatprep.subr.mxu0 0.0
    %1570 = vmatpush1.msra.mxu0 %v1411
    %1571 = vmatprep.subr.mxu0 0.0
    %1572 = vmatpush1.msra.mxu0 %v1410
    %1573 = vmatprep.subr.mxu0 0.0
    %1574 = vmatpush1.msra.mxu0 %v1409
    %1575 = vmatprep.subr.mxu0 0.0
    %1576 = vmatpush1.msra.mxu0 %v1408
    %1577 = vmatprep.subr.mxu0 0.0
    %1578 = vmatpush1.msra.mxu0 %v1407
    %1579 = vmatprep.subr.mxu0 0.0
    %1580 = vmatpush1.msra.mxu0 %v1406
    %1581 = vmatprep.subr.mxu0 0.0
    %1582 = vmatpush1.msra.mxu0 %v1405
    %1583 = vmatprep.subr.mxu0 0.0
    %1584 = vmatpush1.msra.mxu0 %v1404
    %1585 = vmatprep.subr.mxu0 0.0
    %1586 = vmatpush2.msra.mxu0 0.0
    %1587 = vmatprep.subr.mxu0 0.0
    %1588 = vmatpush2.msra.mxu0 0.0
    %1589 = vmatprep.subr.mxu0 0.0
    %1590 = vmatpush2.msra.mxu0 0.0
    %1591 = vmatprep.subr.mxu0 0.0
    %1592 = vmatpush2.msra.mxu0 0.0
    %1593 = vmatprep.subr.mxu0 0.0
    %1594 = vmatpush2.msra.mxu0 0.0
    %1595 = vmatprep.subr.mxu0 0.0
    %1596 = vmatpush2.msra.mxu0 0.0
    %1597 = vmatprep.subr.mxu0 0.0
    %1598 = vmatpush2.msra.mxu0 0.0
    %1599 = vmatprep.subr.mxu0 0.0
    %1600 = vmatpush2.msra.mxu0 0.0
    %1601 = vmatprep.subr.mxu0 0.0
    %1602 = vmatpush2.msra.mxu0 0.0
    %1603 = vmatprep.subr.mxu0 0.0
    %1604 = vmatpush2.msra.mxu0 0.0
    %1605 = vmatprep.subr.mxu0 0.0
    %1606 = vmatpush2.msra.mxu0 0.0
    %1607 = vmatprep.subr.mxu0 0.0
    %1608 = vmatpush2.msra.mxu0 0.0
    %1609 = vmatprep.subr.mxu0 0.0
    %1610 = vmatpush2.msra.mxu0 0.0
    %1611 = vmatprep.subr.mxu0 0.0
    %1612 = vmatpush2.msra.mxu0 0.0
    %1613 = vmatprep.subr.mxu0 0.0
    %1614 = vmatpush2.msra.mxu0 0.0
    %1615 = vmatprep.subr.mxu0 0.0
    %1616 = vmatpush2.msra.mxu0 0.0
    %1617 = vmatprep.mubr.f32.mxu0 0.0
    %1618 = vmatmul.mubr.f32.gmra.mxu0 %v453
    %v1619 = vpop.f32.mrf.mxu0
    %v1620 = vadd.f32 0.0, %v1619
    %v1621 = vpop.f32.mrf.mxu0
    %1622 = vdwg.mxu0
    %v1623 = vadd.f32 %v1552, %v1620
    %v1624 = vxor.u32 %v1623, 2147483648
    %v1625 = vmul.f32 %v1624, 1.442695
    %v1626 = vpow.pop %v1625
    %v1627 = vadd.f32 %v1626, 1.0
    %v1628 = vrcp.pop %v1627
    %v1629 = vmul.f32 1.0, %v1628
    %v1630 = vtanh.pop %v1623
    %v1631 = vmul.f32 %v1629, 0.0
    %1633 = vrot.lane.b32.xlu0 %v1630, 64
    %v1634 = vpop.permute.xlu0 %1633
    %v1636 = vmul.f32 %v1629, %v1634
    %1638 = vrot.lane.b32.xlu0 %v1636, 32
    %v1639 = vpop.permute.xlu0 %1638
    %v1641 = vadd.f32 %v1631, %v1639
    %v1642 = vtanh.pop %v1641
    %1644 = vrot.lane.b32.xlu0 %v1642, 64
    %v1645 = vpop.permute.xlu0 %1644
    %v1647 = vmul.f32 %v1629, %v1645
    %1649 = vrot.lane.b32.xlu0 %v1647, 32
    %v1650 = vpop.permute.xlu0 %1649
    %1652 = vrot.lane.b32.xlu0 %v1647, 64
    %v1653 = vpop.permute.xlu0 %1652
    %v1655 = vsel %vm557, %v1650, %v1653
    %v1656 = vmul.f32 %v1655, %v279
    %v1657 = vrot.slane %v1539, 4
    %v1658 = vcombine.low %v1657, %v1657
    %v1660 = vsel %vm184, %v1534, %v1658
    %v1662 = vsel %vm451, %v1656, 0
    %1664 = vmatprep.subr.mxu0 0.0
    %1665 = vmatpush1.msra.mxu0 0.0
    %1666 = vmatprep.subr.mxu0 0.0
    %1667 = vmatpush1.msra.mxu0 0.0
    %1668 = vmatprep.subr.mxu0 0.0
    %1669 = vmatpush1.msra.mxu0 0.0
    %1670 = vmatprep.subr.mxu0 0.0
    %1671 = vmatpush1.msra.mxu0 0.0
    %1672 = vmatprep.subr.mxu0 0.0
    %1673 = vmatpush1.msra.mxu0 0.0
    %1674 = vmatprep.subr.mxu0 0.0
    %1675 = vmatpush1.msra.mxu0 0.0
    %1676 = vmatprep.subr.mxu0 0.0
    %1677 = vmatpush1.msra.mxu0 0.0
    %1678 = vmatprep.subr.mxu0 0.0
    %1679 = vmatpush1.msra.mxu0 0.0
    %1680 = vmatprep.subr.mxu0 0.0
    %1681 = vmatpush1.msra.mxu0 %v1411
    %1682 = vmatprep.subr.mxu0 0.0
    %1683 = vmatpush1.msra.mxu0 %v1410
    %1684 = vmatprep.subr.mxu0 0.0
    %1685 = vmatpush1.msra.mxu0 %v1409
    %1686 = vmatprep.subr.mxu0 0.0
    %1687 = vmatpush1.msra.mxu0 %v1408
    %1688 = vmatprep.subr.mxu0 0.0
    %1689 = vmatpush1.msra.mxu0 %v1407
    %1690 = vmatprep.subr.mxu0 0.0
    %1691 = vmatpush1.msra.mxu0 %v1406
    %1692 = vmatprep.subr.mxu0 0.0
    %1693 = vmatpush1.msra.mxu0 %v1405
    %1694 = vmatprep.subr.mxu0 0.0
    %1695 = vmatpush1.msra.mxu0 %v1404
    %1696 = vmatprep.subr.mxu0 0.0
    %1697 = vmatpush2.msra.mxu0 0.0
    %1698 = vmatprep.subr.mxu0 0.0
    %1699 = vmatpush2.msra.mxu0 0.0
    %1700 = vmatprep.subr.mxu0 0.0
    %1701 = vmatpush2.msra.mxu0 0.0
    %1702 = vmatprep.subr.mxu0 0.0
    %1703 = vmatpush2.msra.mxu0 0.0
    %1704 = vmatprep.subr.mxu0 0.0
    %1705 = vmatpush2.msra.mxu0 0.0
    %1706 = vmatprep.subr.mxu0 0.0
    %1707 = vmatpush2.msra.mxu0 0.0
    %1708 = vmatprep.subr.mxu0 0.0
    %1709 = vmatpush2.msra.mxu0 0.0
    %1710 = vmatprep.subr.mxu0 0.0
    %1711 = vmatpush2.msra.mxu0 0.0
    %1712 = vmatprep.subr.mxu0 0.0
    %1713 = vmatpush2.msra.mxu0 0.0
    %1714 = vmatprep.subr.mxu0 0.0
    %1715 = vmatpush2.msra.mxu0 0.0
    %1716 = vmatprep.subr.mxu0 0.0
    %1717 = vmatpush2.msra.mxu0 0.0
    %1718 = vmatprep.subr.mxu0 0.0
    %1719 = vmatpush2.msra.mxu0 0.0
    %1720 = vmatprep.subr.mxu0 0.0
    %1721 = vmatpush2.msra.mxu0 0.0
    %1722 = vmatprep.subr.mxu0 0.0
    %1723 = vmatpush2.msra.mxu0 0.0
    %1724 = vmatprep.subr.mxu0 0.0
    %1725 = vmatpush2.msra.mxu0 0.0
    %1726 = vmatprep.subr.mxu0 0.0
    %1727 = vmatpush2.msra.mxu0 0.0
    %1728 = vmatprep.mubr.f32.mxu0 0.0
    %1729 = vmatmul.mubr.f32.gmra.mxu0 %v1662
    %v1730 = vpop.f32.mrf.mxu0
    %v1731 = vadd.f32 0.0, %v1730
    %v1732 = vpop.f32.mrf.mxu0
    %1733 = vdwg.mxu0
    %v1734 = vadd.f32 %v1660, %v1731
    %v1735 = vxor.u32 %v1734, 2147483648
    %v1736 = vmul.f32 %v1735, 1.442695
    %v1737 = vpow.pop %v1736
    %v1738 = vadd.f32 %v1737, 1.0
    %v1739 = vrcp.pop %v1738
    %v1740 = vmul.f32 1.0, %v1739
    %v1741 = vtanh.pop %v1734
    %v1742 = vmul.f32 %v1740, %v1641
    %1744 = vrot.lane.b32.xlu0 %v1741, 64
    %v1745 = vpop.permute.xlu0 %1744
    %v1747 = vmul.f32 %v1740, %v1745
    %1749 = vrot.lane.b32.xlu0 %v1747, 32
    %v1750 = vpop.permute.xlu0 %1749
    %v1752 = vadd.f32 %v1742, %v1750
    %v1753 = vtanh.pop %v1752
    %1755 = vrot.lane.b32.xlu0 %v1753, 64
    %v1756 = vpop.permute.xlu0 %1755
    %v1758 = vmul.f32 %v1740, %v1756
    %1760 = vrot.lane.b32.xlu0 %v1758, 32
    %v1761 = vpop.permute.xlu0 %1760
    %1763 = vrot.lane.b32.xlu0 %v1758, 64
    %v1764 = vpop.permute.xlu0 %1763
    %v1766 = vsel %vm557, %v1761, %v1764
    %v1767 = vmul.f32 %v1766, %v279
    %v1768 = vrot.slane %v1538, 4
    %v1769 = vcombine.low %v1768, %v1768
    %v1771 = vsel %vm184, %v1535, %v1769
    %v1773 = vsel %vm451, %v1767, 0
    %1775 = vmatprep.subr.mxu0 0.0
    %1776 = vmatpush1.msra.mxu0 0.0
    %1777 = vmatprep.subr.mxu0 0.0
    %1778 = vmatpush1.msra.mxu0 0.0
    %1779 = vmatprep.subr.mxu0 0.0
    %1780 = vmatpush1.msra.mxu0 0.0
    %1781 = vmatprep.subr.mxu0 0.0
    %1782 = vmatpush1.msra.mxu0 0.0
    %1783 = vmatprep.subr.mxu0 0.0
    %1784 = vmatpush1.msra.mxu0 0.0
    %1785 = vmatprep.subr.mxu0 0.0
    %1786 = vmatpush1.msra.mxu0 0.0
    %1787 = vmatprep.subr.mxu0 0.0
    %1788 = vmatpush1.msra.mxu0 0.0
    %1789 = vmatprep.subr.mxu0 0.0
    %1790 = vmatpush1.msra.mxu0 0.0
    %1791 = vmatprep.subr.mxu0 0.0
    %1792 = vmatpush1.msra.mxu0 %v1411
    %1793 = vmatprep.subr.mxu0 0.0
    %1794 = vmatpush1.msra.mxu0 %v1410
    %1795 = vmatprep.subr.mxu0 0.0
    %1796 = vmatpush1.msra.mxu0 %v1409
    %1797 = vmatprep.subr.mxu0 0.0
    %1798 = vmatpush1.msra.mxu0 %v1408
    %1799 = vmatprep.subr.mxu0 0.0
    %1800 = vmatpush1.msra.mxu0 %v1407
    %1801 = vmatprep.subr.mxu0 0.0
    %1802 = vmatpush1.msra.mxu0 %v1406
    %1803 = vmatprep.subr.mxu0 0.0
    %1804 = vmatpush1.msra.mxu0 %v1405
    %1805 = vmatprep.subr.mxu0 0.0
    %1806 = vmatpush1.msra.mxu0 %v1404
    %1807 = vmatprep.subr.mxu0 0.0
    %1808 = vmatpush2.msra.mxu0 0.0
    %1809 = vmatprep.subr.mxu0 0.0
    %1810 = vmatpush2.msra.mxu0 0.0
    %1811 = vmatprep.subr.mxu0 0.0
    %1812 = vmatpush2.msra.mxu0 0.0
    %1813 = vmatprep.subr.mxu0 0.0
    %1814 = vmatpush2.msra.mxu0 0.0
    %1815 = vmatprep.subr.mxu0 0.0
    %1816 = vmatpush2.msra.mxu0 0.0
    %1817 = vmatprep.subr.mxu0 0.0
    %1818 = vmatpush2.msra.mxu0 0.0
    %1819 = vmatprep.subr.mxu0 0.0
    %1820 = vmatpush2.msra.mxu0 0.0
    %1821 = vmatprep.subr.mxu0 0.0
    %1822 = vmatpush2.msra.mxu0 0.0
    %1823 = vmatprep.subr.mxu0 0.0
    %1824 = vmatpush2.msra.mxu0 0.0
    %1825 = vmatprep.subr.mxu0 0.0
    %1826 = vmatpush2.msra.mxu0 0.0
    %1827 = vmatprep.subr.mxu0 0.0
    %1828 = vmatpush2.msra.mxu0 0.0
    %1829 = vmatprep.subr.mxu0 0.0
    %1830 = vmatpush2.msra.mxu0 0.0
    %1831 = vmatprep.subr.mxu0 0.0
    %1832 = vmatpush2.msra.mxu0 0.0
    %1833 = vmatprep.subr.mxu0 0.0
    %1834 = vmatpush2.msra.mxu0 0.0
    %1835 = vmatprep.subr.mxu0 0.0
    %1836 = vmatpush2.msra.mxu0 0.0
    %1837 = vmatprep.subr.mxu0 0.0
    %1838 = vmatpush2.msra.mxu0 0.0
    %1839 = vmatprep.mubr.f32.mxu0 0.0
    %1840 = vmatmul.mubr.f32.gmra.mxu0 %v1773
    %v1841 = vpop.f32.mrf.mxu0
    %v1842 = vadd.f32 0.0, %v1841
    %v1843 = vpop.f32.mrf.mxu0
    %1844 = vdwg.mxu0
    %v1845 = vadd.f32 %v1771, %v1842
    %v1846 = vxor.u32 %v1845, 2147483648
    %v1847 = vmul.f32 %v1846, 1.442695
    %v1848 = vpow.pop %v1847
    %v1849 = vadd.f32 %v1848, 1.0
    %v1850 = vrcp.pop %v1849
    %v1851 = vmul.f32 1.0, %v1850
    %v1852 = vtanh.pop %v1845
    %v1853 = vmul.f32 %v1851, %v1752
    %1855 = vrot.lane.b32.xlu0 %v1852, 64
    %v1856 = vpop.permute.xlu0 %1855
    %v1858 = vmul.f32 %v1851, %v1856
    %1860 = vrot.lane.b32.xlu0 %v1858, 32
    %v1861 = vpop.permute.xlu0 %1860
    %v1863 = vadd.f32 %v1853, %v1861
    %v1864 = vtanh.pop %v1863
    %1866 = vrot.lane.b32.xlu0 %v1864, 64
    %v1867 = vpop.permute.xlu0 %1866
    %v1869 = vmul.f32 %v1851, %v1867
    %1871 = vrot.lane.b32.xlu0 %v1869, 32
    %v1872 = vpop.permute.xlu0 %1871
    %1874 = vrot.lane.b32.xlu0 %v1869, 64
    %v1875 = vpop.permute.xlu0 %1874
    %v1877 = vsel %vm557, %v1872, %v1875
    %v1878 = vmul.f32 %v1877, %v279
    %v1879 = vrot.slane %v1537, 4
    %v1880 = vcombine.low %v1879, %v1879
    %v1882 = vsel %vm184, %v1536, %v1880
    %v1884 = vsel %vm451, %v1878, 0
    %1886 = vmatprep.subr.mxu0 0.0
    %1887 = vmatpush1.msra.mxu0 0.0
    %1888 = vmatprep.subr.mxu0 0.0
    %1889 = vmatpush1.msra.mxu0 0.0
    %1890 = vmatprep.subr.mxu0 0.0
    %1891 = vmatpush1.msra.mxu0 0.0
    %1892 = vmatprep.subr.mxu0 0.0
    %1893 = vmatpush1.msra.mxu0 0.0
    %1894 = vmatprep.subr.mxu0 0.0
    %1895 = vmatpush1.msra.mxu0 0.0
    %1896 = vmatprep.subr.mxu0 0.0
    %1897 = vmatpush1.msra.mxu0 0.0
    %1898 = vmatprep.subr.mxu0 0.0
    %1899 = vmatpush1.msra.mxu0 0.0
    %1900 = vmatprep.subr.mxu0 0.0
    %1901 = vmatpush1.msra.mxu0 0.0
    %1902 = vmatprep.subr.mxu0 0.0
    %1903 = vmatpush1.msra.mxu0 %v1411
    %1904 = vmatprep.subr.mxu0 0.0
    %1905 = vmatpush1.msra.mxu0 %v1410
    %1906 = vmatprep.subr.mxu0 0.0
    %1907 = vmatpush1.msra.mxu0 %v1409
    %1908 = vmatprep.subr.mxu0 0.0
    %1909 = vmatpush1.msra.mxu0 %v1408
    %1910 = vmatprep.subr.mxu0 0.0
    %1911 = vmatpush1.msra.mxu0 %v1407
    %1912 = vmatprep.subr.mxu0 0.0
    %1913 = vmatpush1.msra.mxu0 %v1406
    %1914 = vmatprep.subr.mxu0 0.0
    %1915 = vmatpush1.msra.mxu0 %v1405
    %1916 = vmatprep.subr.mxu0 0.0
    %1917 = vmatpush1.msra.mxu0 %v1404
    %1918 = vmatprep.subr.mxu0 0.0
    %1919 = vmatpush2.msra.mxu0 0.0
    %1920 = vmatprep.subr.mxu0 0.0
    %1921 = vmatpush2.msra.mxu0 0.0
    %1922 = vmatprep.subr.mxu0 0.0
    %1923 = vmatpush2.msra.mxu0 0.0
    %1924 = vmatprep.subr.mxu0 0.0
    %1925 = vmatpush2.msra.mxu0 0.0
    %1926 = vmatprep.subr.mxu0 0.0
    %1927 = vmatpush2.msra.mxu0 0.0
    %1928 = vmatprep.subr.mxu0 0.0
    %1929 = vmatpush2.msra.mxu0 0.0
    %1930 = vmatprep.subr.mxu0 0.0
    %1931 = vmatpush2.msra.mxu0 0.0
    %1932 = vmatprep.subr.mxu0 0.0
    %1933 = vmatpush2.msra.mxu0 0.0
    %1934 = vmatprep.subr.mxu0 0.0
    %1935 = vmatpush2.msra.mxu0 0.0
    %1936 = vmatprep.subr.mxu0 0.0
    %1937 = vmatpush2.msra.mxu0 0.0
    %1938 = vmatprep.subr.mxu0 0.0
    %1939 = vmatpush2.msra.mxu0 0.0
    %1940 = vmatprep.subr.mxu0 0.0
    %1941 = vmatpush2.msra.mxu0 0.0
    %1942 = vmatprep.subr.mxu0 0.0
    %1943 = vmatpush2.msra.mxu0 0.0
    %1944 = vmatprep.subr.mxu0 0.0
    %1945 = vmatpush2.msra.mxu0 0.0
    %1946 = vmatprep.subr.mxu0 0.0
    %1947 = vmatpush2.msra.mxu0 0.0
    %1948 = vmatprep.subr.mxu0 0.0
    %1949 = vmatpush2.msra.mxu0 0.0
    %1950 = vmatprep.mubr.f32.mxu0 0.0
    %1951 = vmatmul.mubr.f32.gmra.mxu0 %v1884
    %v1952 = vpop.f32.mrf.mxu0
    %v1953 = vadd.f32 0.0, %v1952
    %v1954 = vpop.f32.mrf.mxu0
    %1955 = vdwg.mxu0
    %v1956 = vadd.f32 %v1882, %v1953
    %v1957 = vxor.u32 %v1956, 2147483648
    %v1958 = vmul.f32 %v1957, 1.442695
    %v1959 = vpow.pop %v1958
    %v1960 = vadd.f32 %v1959, 1.0
    %v1961 = vrcp.pop %v1960
    %v1962 = vmul.f32 1.0, %v1961
    %v1963 = vtanh.pop %v1956
    %v1964 = vmul.f32 %v1962, %v1863
    %1966 = vrot.lane.b32.xlu0 %v1963, 64
    %v1967 = vpop.permute.xlu0 %1966
    %v1969 = vmul.f32 %v1962, %v1967
    %1971 = vrot.lane.b32.xlu0 %v1969, 32
    %v1972 = vpop.permute.xlu0 %1971
    %v1974 = vadd.f32 %v1964, %v1972
    %v1975 = vtanh.pop %v1974
    %1977 = vrot.lane.b32.xlu0 %v1975, 64
    %v1978 = vpop.permute.xlu0 %1977
    %v1980 = vmul.f32 %v1962, %v1978
    %1982 = vrot.lane.b32.xlu0 %v1980, 32
    %v1983 = vpop.permute.xlu0 %1982
    %1985 = vrot.lane.b32.xlu0 %v1980, 64
    %v1986 = vpop.permute.xlu0 %1985
    %v1988 = vsel %vm557, %v1983, %v1986
    %v1989 = vmul.f32 %v1988, %v279
    %v1990 = vrot.slane %v1536, 4
    %v1991 = vcombine.low %v1990, %v1990
    %v1993 = vsel %vm184, %v1537, %v1991
    %v1995 = vsel %vm451, %v1989, 0
    %1997 = vmatprep.subr.mxu0 0.0
    %1998 = vmatpush1.msra.mxu0 0.0
    %1999 = vmatprep.subr.mxu0 0.0
    %2000 = vmatpush1.msra.mxu0 0.0
    %2001 = vmatprep.subr.mxu0 0.0
    %2002 = vmatpush1.msra.mxu0 0.0
    %2003 = vmatprep.subr.mxu0 0.0
    %2004 = vmatpush1.msra.mxu0 0.0
    %2005 = vmatprep.subr.mxu0 0.0
    %2006 = vmatpush1.msra.mxu0 0.0
    %2007 = vmatprep.subr.mxu0 0.0
    %2008 = vmatpush1.msra.mxu0 0.0
    %2009 = vmatprep.subr.mxu0 0.0
    %2010 = vmatpush1.msra.mxu0 0.0
    %2011 = vmatprep.subr.mxu0 0.0
    %2012 = vmatpush1.msra.mxu0 0.0
    %2013 = vmatprep.subr.mxu0 0.0
    %2014 = vmatpush1.msra.mxu0 %v1411
    %2015 = vmatprep.subr.mxu0 0.0
    %2016 = vmatpush1.msra.mxu0 %v1410
    %2017 = vmatprep.subr.mxu0 0.0
    %2018 = vmatpush1.msra.mxu0 %v1409
    %2019 = vmatprep.subr.mxu0 0.0
    %2020 = vmatpush1.msra.mxu0 %v1408
    %2021 = vmatprep.subr.mxu0 0.0
    %2022 = vmatpush1.msra.mxu0 %v1407
    %2023 = vmatprep.subr.mxu0 0.0
    %2024 = vmatpush1.msra.mxu0 %v1406
    %2025 = vmatprep.subr.mxu0 0.0
    %2026 = vmatpush1.msra.mxu0 %v1405
    %2027 = vmatprep.subr.mxu0 0.0
    %2028 = vmatpush1.msra.mxu0 %v1404
    %2029 = vmatprep.subr.mxu0 0.0
    %2030 = vmatpush2.msra.mxu0 0.0
    %2031 = vmatprep.subr.mxu0 0.0
    %2032 = vmatpush2.msra.mxu0 0.0
    %2033 = vmatprep.subr.mxu0 0.0
    %2034 = vmatpush2.msra.mxu0 0.0
    %2035 = vmatprep.subr.mxu0 0.0
    %2036 = vmatpush2.msra.mxu0 0.0
    %2037 = vmatprep.subr.mxu0 0.0
    %2038 = vmatpush2.msra.mxu0 0.0
    %2039 = vmatprep.subr.mxu0 0.0
    %2040 = vmatpush2.msra.mxu0 0.0
    %2041 = vmatprep.subr.mxu0 0.0
    %2042 = vmatpush2.msra.mxu0 0.0
    %2043 = vmatprep.subr.mxu0 0.0
    %2044 = vmatpush2.msra.mxu0 0.0
    %2045 = vmatprep.subr.mxu0 0.0
    %2046 = vmatpush2.msra.mxu0 0.0
    %2047 = vmatprep.subr.mxu0 0.0
    %2048 = vmatpush2.msra.mxu0 0.0
    %2049 = vmatprep.subr.mxu0 0.0
    %2050 = vmatpush2.msra.mxu0 0.0
    %2051 = vmatprep.subr.mxu0 0.0
    %2052 = vmatpush2.msra.mxu0 0.0
    %2053 = vmatprep.subr.mxu0 0.0
    %2054 = vmatpush2.msra.mxu0 0.0
    %2055 = vmatprep.subr.mxu0 0.0
    %2056 = vmatpush2.msra.mxu0 0.0
    %2057 = vmatprep.subr.mxu0 0.0
    %2058 = vmatpush2.msra.mxu0 0.0
    %2059 = vmatprep.subr.mxu0 0.0
    %2060 = vmatpush2.msra.mxu0 0.0
    %2061 = vmatprep.mubr.f32.mxu0 0.0
    %2062 = vmatmul.mubr.f32.gmra.mxu0 %v1995
    %v2063 = vpop.f32.mrf.mxu0
    %v2064 = vadd.f32 0.0, %v2063
    %v2065 = vpop.f32.mrf.mxu0
    %2066 = vdwg.mxu0
    %v2067 = vadd.f32 %v1993, %v2064
    %v2068 = vxor.u32 %v2067, 2147483648
    %v2069 = vmul.f32 %v2068, 1.442695
    %v2070 = vpow.pop %v2069
    %v2071 = vadd.f32 %v2070, 1.0
    %v2072 = vrcp.pop %v2071
    %v2073 = vmul.f32 1.0, %v2072
    %v2074 = vtanh.pop %v2067
    %v2075 = vmul.f32 %v2073, %v1974
    %2077 = vrot.lane.b32.xlu0 %v2074, 64
    %v2078 = vpop.permute.xlu0 %2077
    %v2080 = vmul.f32 %v2073, %v2078
    %2082 = vrot.lane.b32.xlu0 %v2080, 32
    %v2083 = vpop.permute.xlu0 %2082
    %v2085 = vadd.f32 %v2075, %v2083
    %v2086 = vtanh.pop %v2085
    %2088 = vrot.lane.b32.xlu0 %v2086, 64
    %v2089 = vpop.permute.xlu0 %2088
    %v2091 = vmul.f32 %v2073, %v2089
    %2093 = vrot.lane.b32.xlu0 %v2091, 32
    %v2094 = vpop.permute.xlu0 %2093
    %2096 = vrot.lane.b32.xlu0 %v2091, 64
    %v2097 = vpop.permute.xlu0 %2096
    %v2099 = vsel %vm557, %v2094, %v2097
    %v2100 = vmul.f32 %v2099, %v279
    %v2101 = vrot.slane %v1535, 4
    %v2102 = vcombine.low %v2101, %v2101
    %v2104 = vsel %vm184, %v1538, %v2102
    %v2106 = vsel %vm451, %v2100, 0
    %2108 = vmatprep.subr.mxu0 0.0
    %2109 = vmatpush1.msra.mxu0 0.0
    %2110 = vmatprep.subr.mxu0 0.0
    %2111 = vmatpush1.msra.mxu0 0.0
    %2112 = vmatprep.subr.mxu0 0.0
    %2113 = vmatpush1.msra.mxu0 0.0
    %2114 = vmatprep.subr.mxu0 0.0
    %2115 = vmatpush1.msra.mxu0 0.0
    %2116 = vmatprep.subr.mxu0 0.0
    %2117 = vmatpush1.msra.mxu0 0.0
    %2118 = vmatprep.subr.mxu0 0.0
    %2119 = vmatpush1.msra.mxu0 0.0
    %2120 = vmatprep.subr.mxu0 0.0
    %2121 = vmatpush1.msra.mxu0 0.0
    %2122 = vmatprep.subr.mxu0 0.0
    %2123 = vmatpush1.msra.mxu0 0.0
    %2124 = vmatprep.subr.mxu0 0.0
    %2125 = vmatpush1.msra.mxu0 %v1411
    %2126 = vmatprep.subr.mxu0 0.0
    %2127 = vmatpush1.msra.mxu0 %v1410
    %2128 = vmatprep.subr.mxu0 0.0
    %2129 = vmatpush1.msra.mxu0 %v1409
    %2130 = vmatprep.subr.mxu0 0.0
    %2131 = vmatpush1.msra.mxu0 %v1408
    %2132 = vmatprep.subr.mxu0 0.0
    %2133 = vmatpush1.msra.mxu0 %v1407
    %2134 = vmatprep.subr.mxu0 0.0
    %2135 = vmatpush1.msra.mxu0 %v1406
    %2136 = vmatprep.subr.mxu0 0.0
    %2137 = vmatpush1.msra.mxu0 %v1405
    %2138 = vmatprep.subr.mxu0 0.0
    %2139 = vmatpush1.msra.mxu0 %v1404
    %2140 = vmatprep.subr.mxu0 0.0
    %2141 = vmatpush2.msra.mxu0 0.0
    %2142 = vmatprep.subr.mxu0 0.0
    %2143 = vmatpush2.msra.mxu0 0.0
    %2144 = vmatprep.subr.mxu0 0.0
    %2145 = vmatpush2.msra.mxu0 0.0
    %2146 = vmatprep.subr.mxu0 0.0
    %2147 = vmatpush2.msra.mxu0 0.0
    %2148 = vmatprep.subr.mxu0 0.0
    %2149 = vmatpush2.msra.mxu0 0.0
    %2150 = vmatprep.subr.mxu0 0.0
    %2151 = vmatpush2.msra.mxu0 0.0
    %2152 = vmatprep.subr.mxu0 0.0
    %2153 = vmatpush2.msra.mxu0 0.0
    %2154 = vmatprep.subr.mxu0 0.0
    %2155 = vmatpush2.msra.mxu0 0.0
    %2156 = vmatprep.subr.mxu0 0.0
    %2157 = vmatpush2.msra.mxu0 0.0
    %2158 = vmatprep.subr.mxu0 0.0
    %2159 = vmatpush2.msra.mxu0 0.0
    %2160 = vmatprep.subr.mxu0 0.0
    %2161 = vmatpush2.msra.mxu0 0.0
    %2162 = vmatprep.subr.mxu0 0.0
    %2163 = vmatpush2.msra.mxu0 0.0
    %2164 = vmatprep.subr.mxu0 0.0
    %2165 = vmatpush2.msra.mxu0 0.0
    %2166 = vmatprep.subr.mxu0 0.0
    %2167 = vmatpush2.msra.mxu0 0.0
    %2168 = vmatprep.subr.mxu0 0.0
    %2169 = vmatpush2.msra.mxu0 0.0
    %2170 = vmatprep.subr.mxu0 0.0
    %2171 = vmatpush2.msra.mxu0 0.0
    %2172 = vmatprep.mubr.f32.mxu0 0.0
    %2173 = vmatmul.mubr.f32.gmra.mxu0 %v2106
    %v2174 = vpop.f32.mrf.mxu0
    %v2175 = vadd.f32 0.0, %v2174
    %v2176 = vpop.f32.mrf.mxu0
    %2177 = vdwg.mxu0
    %v2178 = vadd.f32 %v2104, %v2175
    %v2179 = vxor.u32 %v2178, 2147483648
    %v2180 = vmul.f32 %v2179, 1.442695
    %v2181 = vpow.pop %v2180
    %v2182 = vadd.f32 %v2181, 1.0
    %v2183 = vrcp.pop %v2182
    %v2184 = vmul.f32 1.0, %v2183
    %v2185 = vtanh.pop %v2178
    %v2186 = vmul.f32 %v2184, %v2085
    %2188 = vrot.lane.b32.xlu0 %v2185, 64
    %v2189 = vpop.permute.xlu0 %2188
    %v2191 = vmul.f32 %v2184, %v2189
    %2193 = vrot.lane.b32.xlu0 %v2191, 32
    %v2194 = vpop.permute.xlu0 %2193
    %v2196 = vadd.f32 %v2186, %v2194
    %v2197 = vtanh.pop %v2196
    %2199 = vrot.lane.b32.xlu0 %v2197, 64
    %v2200 = vpop.permute.xlu0 %2199
    %v2202 = vmul.f32 %v2184, %v2200
    %2204 = vrot.lane.b32.xlu0 %v2202, 32
    %v2205 = vpop.permute.xlu0 %2204
    %2207 = vrot.lane.b32.xlu0 %v2202, 64
    %v2208 = vpop.permute.xlu0 %2207
    %v2210 = vsel %vm557, %v2205, %v2208
    %v2211 = vmul.f32 %v2210, %v279
    %v2212 = vrot.slane %v1534, 4
    %v2213 = vcombine.low %v2212, %v2212
    %v2215 = vsel %vm184, %v1539, %v2213
    %v2217 = vsel %vm451, %v2211, 0
    %2219 = vmatprep.subr.mxu0 0.0
    %2220 = vmatpush1.msra.mxu0 0.0
    %2221 = vmatprep.subr.mxu0 0.0
    %2222 = vmatpush1.msra.mxu0 0.0
    %2223 = vmatprep.subr.mxu0 0.0
    %2224 = vmatpush1.msra.mxu0 0.0
    %2225 = vmatprep.subr.mxu0 0.0
    %2226 = vmatpush1.msra.mxu0 0.0
    %2227 = vmatprep.subr.mxu0 0.0
    %2228 = vmatpush1.msra.mxu0 0.0
    %2229 = vmatprep.subr.mxu0 0.0
    %2230 = vmatpush1.msra.mxu0 0.0
    %2231 = vmatprep.subr.mxu0 0.0
    %2232 = vmatpush1.msra.mxu0 0.0
    %2233 = vmatprep.subr.mxu0 0.0
    %2234 = vmatpush1.msra.mxu0 0.0
    %2235 = vmatprep.subr.mxu0 0.0
    %2236 = vmatpush1.msra.mxu0 %v1411
    %2237 = vmatprep.subr.mxu0 0.0
    %2238 = vmatpush1.msra.mxu0 %v1410
    %2239 = vmatprep.subr.mxu0 0.0
    %2240 = vmatpush1.msra.mxu0 %v1409
    %2241 = vmatprep.subr.mxu0 0.0
    %2242 = vmatpush1.msra.mxu0 %v1408
    %2243 = vmatprep.subr.mxu0 0.0
    %2244 = vmatpush1.msra.mxu0 %v1407
    %2245 = vmatprep.subr.mxu0 0.0
    %2246 = vmatpush1.msra.mxu0 %v1406
    %2247 = vmatprep.subr.mxu0 0.0
    %2248 = vmatpush1.msra.mxu0 %v1405
    %2249 = vmatprep.subr.mxu0 0.0
    %2250 = vmatpush1.msra.mxu0 %v1404
    %2251 = vmatprep.subr.mxu0 0.0
    %2252 = vmatpush2.msra.mxu0 0.0
    %2253 = vmatprep.subr.mxu0 0.0
    %2254 = vmatpush2.msra.mxu0 0.0
    %2255 = vmatprep.subr.mxu0 0.0
    %2256 = vmatpush2.msra.mxu0 0.0
    %2257 = vmatprep.subr.mxu0 0.0
    %2258 = vmatpush2.msra.mxu0 0.0
    %2259 = vmatprep.subr.mxu0 0.0
    %2260 = vmatpush2.msra.mxu0 0.0
    %2261 = vmatprep.subr.mxu0 0.0
    %2262 = vmatpush2.msra.mxu0 0.0
    %2263 = vmatprep.subr.mxu0 0.0
    %2264 = vmatpush2.msra.mxu0 0.0
    %2265 = vmatprep.subr.mxu0 0.0
    %2266 = vmatpush2.msra.mxu0 0.0
    %2267 = vmatprep.subr.mxu0 0.0
    %2268 = vmatpush2.msra.mxu0 0.0
    %2269 = vmatprep.subr.mxu0 0.0
    %2270 = vmatpush2.msra.mxu0 0.0
    %2271 = vmatprep.subr.mxu0 0.0
    %2272 = vmatpush2.msra.mxu0 0.0
    %2273 = vmatprep.subr.mxu0 0.0
    %2274 = vmatpush2.msra.mxu0 0.0
    %2275 = vmatprep.subr.mxu0 0.0
    %2276 = vmatpush2.msra.mxu0 0.0
    %2277 = vmatprep.subr.mxu0 0.0
    %2278 = vmatpush2.msra.mxu0 0.0
    %2279 = vmatprep.subr.mxu0 0.0
    %2280 = vmatpush2.msra.mxu0 0.0
    %2281 = vmatprep.subr.mxu0 0.0
    %2282 = vmatpush2.msra.mxu0 0.0
    %2283 = vmatprep.mubr.f32.mxu0 0.0
    %2284 = vmatmul.mubr.f32.gmra.mxu0 %v2217
    %v2285 = vpop.f32.mrf.mxu0
    %v2286 = vadd.f32 0.0, %v2285
    %v2287 = vpop.f32.mrf.mxu0
    %2288 = vdwg.mxu0
    %v2289 = vadd.f32 %v2215, %v2286
    %v2290 = vxor.u32 %v2289, 2147483648
    %v2291 = vmul.f32 %v2290, 1.442695
    %v2292 = vpow.pop %v2291
    %v2293 = vadd.f32 %v2292, 1.0
    %v2294 = vrcp.pop %v2293
    %v2295 = vmul.f32 1.0, %v2294
    %v2296 = vtanh.pop %v2289
    %v2297 = vmul.f32 %v2295, %v2196
    %2299 = vrot.lane.b32.xlu0 %v2296, 64
    %v2300 = vpop.permute.xlu0 %2299
    %v2302 = vmul.f32 %v2295, %v2300
    %2304 = vrot.lane.b32.xlu0 %v2302, 32
    %v2305 = vpop.permute.xlu0 %2304
    %v2307 = vadd.f32 %v2297, %v2305
    %v2308 = vtanh.pop %v2307
    %2310 = vrot.lane.b32.xlu0 %v2308, 64
    %v2311 = vpop.permute.xlu0 %2310
    %v2313 = vmul.f32 %v2295, %v2311
    %2315 = vrot.lane.b32.xlu0 %v2313, 32
    %v2316 = vpop.permute.xlu0 %2315
    %2318 = vrot.lane.b32.xlu0 %v2313, 64
    %v2319 = vpop.permute.xlu0 %2318
    %v2321 = vsel %vm557, %v2316, %v2319
    %v2322 = vmul.f32 %v2321, %v279
    %v2323 = vrot.slane %v1533, 4
    %v2324 = vcombine.low %v2323, %v2323
    %v2326 = vsel %vm184, %v1540, %v2324
    %v2328 = vsel %vm451, %v2322, 0
    %2330 = vmatprep.subr.mxu0 0.0
    %2331 = vmatpush1.msra.mxu0 0.0
    %2332 = vmatprep.subr.mxu0 0.0
    %2333 = vmatpush1.msra.mxu0 0.0
    %2334 = vmatprep.subr.mxu0 0.0
    %2335 = vmatpush1.msra.mxu0 0.0
    %2336 = vmatprep.subr.mxu0 0.0
    %2337 = vmatpush1.msra.mxu0 0.0
    %2338 = vmatprep.subr.mxu0 0.0
    %2339 = vmatpush1.msra.mxu0 0.0
    %2340 = vmatprep.subr.mxu0 0.0
    %2341 = vmatpush1.msra.mxu0 0.0
    %2342 = vmatprep.subr.mxu0 0.0
    %2343 = vmatpush1.msra.mxu0 0.0
    %2344 = vmatprep.subr.mxu0 0.0
    %2345 = vmatpush1.msra.mxu0 0.0
    %2346 = vmatprep.subr.mxu0 0.0
    %2347 = vmatpush1.msra.mxu0 %v1411
    %2348 = vmatprep.subr.mxu0 0.0
    %2349 = vmatpush1.msra.mxu0 %v1410
    %2350 = vmatprep.subr.mxu0 0.0
    %2351 = vmatpush1.msra.mxu0 %v1409
    %2352 = vmatprep.subr.mxu0 0.0
    %2353 = vmatpush1.msra.mxu0 %v1408
    %2354 = vmatprep.subr.mxu0 0.0
    %2355 = vmatpush1.msra.mxu0 %v1407
    %2356 = vmatprep.subr.mxu0 0.0
    %2357 = vmatpush1.msra.mxu0 %v1406
    %2358 = vmatprep.subr.mxu0 0.0
    %2359 = vmatpush1.msra.mxu0 %v1405
    %2360 = vmatprep.subr.mxu0 0.0
    %2361 = vmatpush1.msra.mxu0 %v1404
    %2362 = vmatprep.subr.mxu0 0.0
    %2363 = vmatpush2.msra.mxu0 0.0
    %2364 = vmatprep.subr.mxu0 0.0
    %2365 = vmatpush2.msra.mxu0 0.0
    %2366 = vmatprep.subr.mxu0 0.0
    %2367 = vmatpush2.msra.mxu0 0.0
    %2368 = vmatprep.subr.mxu0 0.0
    %2369 = vmatpush2.msra.mxu0 0.0
    %2370 = vmatprep.subr.mxu0 0.0
    %2371 = vmatpush2.msra.mxu0 0.0
    %2372 = vmatprep.subr.mxu0 0.0
    %2373 = vmatpush2.msra.mxu0 0.0
    %2374 = vmatprep.subr.mxu0 0.0
    %2375 = vmatpush2.msra.mxu0 0.0
    %2376 = vmatprep.subr.mxu0 0.0
    %2377 = vmatpush2.msra.mxu0 0.0
    %2378 = vmatprep.subr.mxu0 0.0
    %2379 = vmatpush2.msra.mxu0 0.0
    %2380 = vmatprep.subr.mxu0 0.0
    %2381 = vmatpush2.msra.mxu0 0.0
    %2382 = vmatprep.subr.mxu0 0.0
    %2383 = vmatpush2.msra.mxu0 0.0
    %2384 = vmatprep.subr.mxu0 0.0
    %2385 = vmatpush2.msra.mxu0 0.0
    %2386 = vmatprep.subr.mxu0 0.0
    %2387 = vmatpush2.msra.mxu0 0.0
    %2388 = vmatprep.subr.mxu0 0.0
    %2389 = vmatpush2.msra.mxu0 0.0
    %2390 = vmatprep.subr.mxu0 0.0
    %2391 = vmatpush2.msra.mxu0 0.0
    %2392 = vmatprep.subr.mxu0 0.0
    %2393 = vmatpush2.msra.mxu0 0.0
    %2394 = vmatprep.mubr.f32.mxu0 0.0
    %2395 = vmatmul.mubr.f32.gmra.mxu0 %v2328
    %v2396 = vpop.f32.mrf.mxu0
    %v2397 = vadd.f32 0.0, %v2396
    %v2398 = vpop.f32.mrf.mxu0
    %2399 = vdwg.mxu0
    %v2400 = vadd.f32 %v2326, %v2397
    %v2401 = vxor.u32 %v2400, 2147483648
    %v2402 = vmul.f32 %v2401, 1.442695
    %v2403 = vpow.pop %v2402
    %v2404 = vadd.f32 %v2403, 1.0
    %v2405 = vrcp.pop %v2404
    %v2406 = vmul.f32 1.0, %v2405
    %v2407 = vtanh.pop %v2400
    %v2408 = vmul.f32 %v2406, %v2307
    %2410 = vrot.lane.b32.xlu0 %v2407, 64
    %v2411 = vpop.permute.xlu0 %2410
    %v2413 = vmul.f32 %v2406, %v2411
    %2415 = vrot.lane.b32.xlu0 %v2413, 32
    %v2416 = vpop.permute.xlu0 %2415
    %v2418 = vadd.f32 %v2408, %v2416
    %v2419 = vtanh.pop %v2418
    %2421 = vrot.lane.b32.xlu0 %v2419, 64
    %v2422 = vpop.permute.xlu0 %2421
    %v2424 = vmul.f32 %v2406, %v2422
    %v2426 = vrot.slane %v2424, 4
    %2427 = vrot.lane.b32.xlu0 %v2426, 64
    %v2428 = vpop.permute.xlu0 %2427
    %v2430 = vsel %vm557, %v1650, %v2428
    %v2431 = vrot.slane %v2313, 4
    %2432 = vrot.lane.b32.xlu0 %v2431, 64
    %v2433 = vpop.permute.xlu0 %2432
    %v2435 = vsel %vm557, %v1761, %v2433
    %v2436 = vrot.slane %v2202, 4
    %2437 = vrot.lane.b32.xlu0 %v2436, 64
    %v2438 = vpop.permute.xlu0 %2437
    %v2440 = vsel %vm557, %v1872, %v2438
    %v2441 = vrot.slane %v2091, 4
    %2442 = vrot.lane.b32.xlu0 %v2441, 64
    %v2443 = vpop.permute.xlu0 %2442
    %v2445 = vsel %vm557, %v1983, %v2443
    %v2446 = vrot.slane %v1980, 4
    %2447 = vrot.lane.b32.xlu0 %v2446, 64
    %v2448 = vpop.permute.xlu0 %2447
    %v2450 = vsel %vm557, %v2094, %v2448
    %v2451 = vrot.slane %v1869, 4
    %2452 = vrot.lane.b32.xlu0 %v2451, 64
    %v2453 = vpop.permute.xlu0 %2452
    %v2455 = vsel %vm557, %v2205, %v2453
    %v2456 = vrot.slane %v1758, 4
    %2457 = vrot.lane.b32.xlu0 %v2456, 64
    %v2458 = vpop.permute.xlu0 %2457
    %v2460 = vsel %vm557, %v2316, %v2458
    %2461 = vrot.lane.b32.xlu0 %v2424, 32
    %v2462 = vpop.permute.xlu0 %2461
    %v2464 = vrot.slane %v1647, 4
    %2465 = vrot.lane.b32.xlu0 %v2464, 64
    %v2466 = vpop.permute.xlu0 %2465
    %v2468 = vsel %vm557, %v2462, %v2466
    %v2469 = vadd.f32 %v2430, 0.0
    %v2470 = vadd.f32 %v2469, %v2435
    %v2471 = vadd.f32 %v2470, %v2440
    %v2472 = vadd.f32 %v2471, %v2445
    %v2473 = vadd.f32 %v2472, %v2450
    %v2474 = vadd.f32 %v2473, %v2455
    %v2475 = vadd.f32 %v2474, %v2460
    %v2476 = vadd.f32 %v2475, %v2468
    %v2477 = vmul.f32 %v2476, 0.125
    %v2479 = vrot.slane %v2477, 2
    %2480 = vrot.lane.b32.xlu0 %v2479, 64
    %v2481 = vpop.permute.xlu0 %2480
    %v2483 = vsel %vm451, %v2477, %v2481
    %v2484 = vld [vmem:[%s9] sm:$0xff]
    %v2485 = vld [vmem:[%s9 + $0x8] sm:$0xff]
    %v2486 = vld [vmem:[%s9 + $0x10] sm:$0xff]
    %v2487 = vld [vmem:[%s9 + $0x18] sm:$0xff]
    %v2488 = vld [vmem:[%s9 + $0x20] sm:$0xff]
    %v2489 = vld [vmem:[%s9 + $0x28] sm:$0xff]
    %v2490 = vld [vmem:[%s9 + $0x30] sm:$0xff]
    %v2491 = vld [vmem:[%s9 + $0x38] sm:$0xff]
    %v2492 = vld [vmem:[%s9 + $0x40] sm:$0xff]
    %v2493 = vld [vmem:[%s9 + $0x48] sm:$0xff]
    %v2494 = vld [vmem:[%s9 + $0x50] sm:$0xff]
    %v2495 = vld [vmem:[%s9 + $0x58] sm:$0xff]
    %v2496 = vld [vmem:[%s9 + $0x60] sm:$0xff]
    %v2497 = vld [vmem:[%s9 + $0x68] sm:$0xff]
    %v2498 = vld [vmem:[%s9 + $0x70] sm:$0xff]
    %v2499 = vld [vmem:[%s9 + $0x78] sm:$0xff]
    %v2500 = vld [vmem:[%s10] sm:$0x1]
    %v2502 = vlaneseq
    %v2503 = vshrl.u32 %v2502, 7
    %v2504 = vsub.s32 0, %v2503
    %v2505 = vrot.slane %v2500, %v2504
    %2507 = vmatprep.subr.mxu0 0.0
    %2508 = vmatpush1.msra.mxu0 %v2499
    %2509 = vmatprep.subr.mxu0 0.0
    %2510 = vmatpush1.msra.mxu0 %v2498
    %2511 = vmatprep.subr.mxu0 0.0
    %2512 = vmatpush1.msra.mxu0 %v2497
    %2513 = vmatprep.subr.mxu0 0.0
    %2514 = vmatpush1.msra.mxu0 %v2496
    %2515 = vmatprep.subr.mxu0 0.0
    %2516 = vmatpush1.msra.mxu0 %v2495
    %2517 = vmatprep.subr.mxu0 0.0
    %2518 = vmatpush1.msra.mxu0 %v2494
    %2519 = vmatprep.subr.mxu0 0.0
    %2520 = vmatpush1.msra.mxu0 %v2493
    %2521 = vmatprep.subr.mxu0 0.0
    %2522 = vmatpush1.msra.mxu0 %v2492
    %2523 = vmatprep.subr.mxu0 0.0
    %2524 = vmatpush1.msra.mxu0 %v2491
    %2525 = vmatprep.subr.mxu0 0.0
    %2526 = vmatpush1.msra.mxu0 %v2490
    %2527 = vmatprep.subr.mxu0 0.0
    %2528 = vmatpush1.msra.mxu0 %v2489
    %2529 = vmatprep.subr.mxu0 0.0
    %2530 = vmatpush1.msra.mxu0 %v2488
    %2531 = vmatprep.subr.mxu0 0.0
    %2532 = vmatpush1.msra.mxu0 %v2487
    %2533 = vmatprep.subr.mxu0 0.0
    %2534 = vmatpush1.msra.mxu0 %v2486
    %2535 = vmatprep.subr.mxu0 0.0
    %2536 = vmatpush1.msra.mxu0 %v2485
    %2537 = vmatprep.subr.mxu0 0.0
    %2538 = vmatpush1.msra.mxu0 %v2484
    %2539 = vmatprep.subr.mxu0 0.0
    %2540 = vmatpush2.msra.mxu0 0.0
    %2541 = vmatprep.subr.mxu0 0.0
    %2542 = vmatpush2.msra.mxu0 0.0
    %2543 = vmatprep.subr.mxu0 0.0
    %2544 = vmatpush2.msra.mxu0 0.0
    %2545 = vmatprep.subr.mxu0 0.0
    %2546 = vmatpush2.msra.mxu0 0.0
    %2547 = vmatprep.subr.mxu0 0.0
    %2548 = vmatpush2.msra.mxu0 0.0
    %2549 = vmatprep.subr.mxu0 0.0
    %2550 = vmatpush2.msra.mxu0 0.0
    %2551 = vmatprep.subr.mxu0 0.0
    %2552 = vmatpush2.msra.mxu0 0.0
    %2553 = vmatprep.subr.mxu0 0.0
    %2554 = vmatpush2.msra.mxu0 0.0
    %2555 = vmatprep.subr.mxu0 0.0
    %2556 = vmatpush2.msra.mxu0 0.0
    %2557 = vmatprep.subr.mxu0 0.0
    %2558 = vmatpush2.msra.mxu0 0.0
    %2559 = vmatprep.subr.mxu0 0.0
    %2560 = vmatpush2.msra.mxu0 0.0
    %2561 = vmatprep.subr.mxu0 0.0
    %2562 = vmatpush2.msra.mxu0 0.0
    %2563 = vmatprep.subr.mxu0 0.0
    %2564 = vmatpush2.msra.mxu0 0.0
    %2565 = vmatprep.subr.mxu0 0.0
    %2566 = vmatpush2.msra.mxu0 0.0
    %2567 = vmatprep.subr.mxu0 0.0
    %2568 = vmatpush2.msra.mxu0 0.0
    %2569 = vmatprep.subr.mxu0 0.0
    %2570 = vmatpush2.msra.mxu0 0.0
    %2571 = vmatprep.mubr.f32.mxu0 0.0
    %2572 = vmatmul.mubr.f32.gmra.mxu0 %v2483
    %v2573 = vpop.f32.mrf.mxu0
    %v2574 = vadd.f32 %v2505, %v2573
    %v2575 = vpop.f32.mrf.mxu0
    %2576 = vdwg.mxu0
    %vm2577 = vcmask 9216
    %2578 = vst.msk [vmem:[#allocation8] sm:$0x3] %vm2577, %v2574
    // Predicated region
    $region58: #{bilstm_model_forward.1} parent=1 // pred_check
      _
    $region59: #{bilstm_model_forward.1} parent=1 // pred_check_branch
      %2580 = sbr.rel (0) target = $region61
    $region60: #{bilstm_model_forward.1} parent=1 // pred_region
      %s2582 = ssub.s32 32, 32
      %2583 = vsyncadd [#allocation4], %s2582
      %s2585 = sshll.u32 [#allocation8], 4
      %s2586 = int_to_ptr.vmem [resolvable:$true] %s2585
      %2588 = dma.vmem_to_hbm [thread:$0]  %s2586, 32, %s11, [#allocation4]
    $region61: #{bilstm_model_forward.1} parent=1 // pred_fallthru
      _
    // Predicated region
    $region62: #{bilstm_model_forward.1} parent=1 // pred_check
      _
    $region63: #{bilstm_model_forward.1} parent=1 // pred_check_branch
      %2590 = sbr.rel (0) target = $region65
    $region64: #{bilstm_model_forward.1} parent=1 // pred_region
      %2591 = dma.done [#allocation4], 32
    $region65: #{bilstm_model_forward.1} parent=1 // pred_fallthru
      _
    %2592 = vsyncpa [#allocation3], 1
    %2593 = vsyncpa [#allocation6], 1
    %2594 = vsyncpa [#allocation4], 1

</llo_original>
